<compile_context>
chip_gen: v6e
topology: v6e:2x2x1
jax: 0.10.0
libtpu: 0.0.40
codegen_flags: <defaults>
</compile_context>

<pallas_src>
import math

import numpy as np
import jax
import jax.numpy as jnp
from jax import lax
from jax.experimental import pallas as pl
from jax.experimental.pallas import tpu as pltpu

# Model hyper-parameters (small synthetic sizes consistent with the module).
D_MODEL = 32
D_FF = 64
HEADS = 4
NUM_LAYERS = 2   # num_inter_layers
BATCH = 2
N_SENTS = 8


def _layer_norm(x, g, b, eps=1e-6):
    # Two-pass reference form (used only by the pure-JAX reference).
    mu = jnp.mean(x, axis=-1, keepdims=True)
    var = jnp.mean((x - mu) ** 2, axis=-1, keepdims=True)
    return (x - mu) * lax.rsqrt(var + eps) * g + b


def _layer_norm_fused(x, g, b, eps=1e-6):
    # Kernel form: sum(x) and sum(x*x) are independent reductions (no serial dependency
    # through the mean); var = E[x^2] - mu^2.
    mu = jnp.mean(x, axis=-1, keepdims=True)
    ex2 = jnp.mean(x * x, axis=-1, keepdims=True)
    var = ex2 - mu * mu
    return (x - mu) * lax.rsqrt(var + eps) * g + b


def _gelu(x):
    # PreSumm uses the tanh-approximation gelu.
    return 0.5 * x * (1.0 + jnp.tanh(
        math.sqrt(2.0 / math.pi) * (x + 0.044715 * x * x * x)))


def encoder_kernel(x_ref, bias_ref,
                   wqkv_ref, bqkv_ref, wo_ref, bo_ref,
                   ln1_g_ref, ln1_b_ref,
                   w1_ref, b1_ref, w2_ref, b2_ref,
                   ln2_g_ref, ln2_b_ref,
                   lnf_g_ref, lnf_b_ref, out_ref):
    BS, D = x_ref.shape                 # (B*S, D) flattened residual stream
    BH, S, _ = bias_ref.shape           # (B*HEADS, S, S) additive key-pad bias
    B = BH // HEADS
    dh = D // HEADS
    L = wqkv_ref.shape[0]

    x = x_ref[...]                      # f32 residual stream, whole batch
    bias = bias_ref[...]                # f32, -1e18 on padded keys, 0 elsewhere

    for i in range(L):
        # TransformerEncoderLayer: layer_norm on the input only when iter != 0.
        if i != 0:
            inp = _layer_norm_fused(x, ln1_g_ref[i:i + 1, :], ln1_b_ref[i:i + 1, :])
        else:
            inp = x

        # Fused QKV projection for the WHOLE batch: one (B*S, D) @ (D, 3D) bf16 matmul.
        # (Query scale 1/sqrt(dh) is folded into Wq/bq by the wrapper.)
        qkv = (jnp.dot(inp.astype(jnp.bfloat16), wqkv_ref[i],
                       preferred_element_type=jnp.float32)
               + bqkv_ref[i:i + 1, :])                                  # (B*S, 3D) f32

        # Head-batched attention: build (B*H, S, dh) tensors once (static sublane/lane
        # slices stacked on a new leading dim), then TWO batched einsums + ONE softmax.
        q_parts, k_parts, v_parts = [], [], []
        for b in range(B):
            rows = qkv[b * S:(b + 1) * S, :]                            # (S, 3D)
            for h in range(HEADS):
                q_parts.append(rows[:, h * dh:(h + 1) * dh])
                k_parts.append(rows[:, D + h * dh:D + (h + 1) * dh])
                v_parts.append(rows[:, 2 * D + h * dh:2 * D + (h + 1) * dh])
        q3 = jnp.stack(q_parts, axis=0).astype(jnp.bfloat16)            # (B*H, S, dh)
        k3 = jnp.stack(k_parts, axis=0).astype(jnp.bfloat16)
        v3 = jnp.stack(v_parts, axis=0).astype(jnp.bfloat16)

        scores = jnp.einsum('hqd,hkd->hqk', q3, k3,
                            preferred_element_type=jnp.float32)         # (B*H, S, S) f32
        scores = scores + bias
        m = jnp.max(scores, axis=-1, keepdims=True)
        e = jnp.exp(scores - m)
        denom = jnp.sum(e, axis=-1, keepdims=True)
        attn = e * pl.reciprocal(denom, approx=True)                    # EUP, not VALU divide
        ctx3 = jnp.einsum('hqk,hkd->hqd', attn.astype(jnp.bfloat16), v3,
                          preferred_element_type=jnp.float32)           # (B*H, S, dh) f32

        # Re-pack head contexts to (B*S, D) and run ONE output projection for the batch.
        ctx = jnp.concatenate(
            [jnp.concatenate([ctx3[b * HEADS + h] for h in range(HEADS)], axis=-1)
             for b in range(B)], axis=0)                                # (B*S, D)
        attn_out = (jnp.dot(ctx.astype(jnp.bfloat16), wo_ref[i],
                            preferred_element_type=jnp.float32)
                    + bo_ref[i:i + 1, :])
        out = attn_out + x              # dropout(context) + inputs, dropout = identity (eval)

        # PositionwiseFeedForward: w2(gelu(w1(LN(out)))) + out, whole batch at once.
        ffn_in = _layer_norm_fused(out, ln2_g_ref[i:i + 1, :], ln2_b_ref[i:i + 1, :])
        inter = _gelu(jnp.dot(ffn_in.astype(jnp.bfloat16), w1_ref[i],
                              preferred_element_type=jnp.float32) + b1_ref[i:i + 1, :])
        ffn_out = (jnp.dot(inter.astype(jnp.bfloat16), w2_ref[i],
                           preferred_element_type=jnp.float32) + b2_ref[i:i + 1, :])
        x = ffn_out + out

    # Final layer norm of SentTransformerEncoder.
    out_ref[...] = _layer_norm_fused(x, lnf_g_ref[...], lnf_b_ref[...]).astype(out_ref.dtype)


def sent_transformer_encoder(top_vecs, mask_bool, params, pe):
    B, S, D = top_vecs.shape
    dh = D // HEADS

    # Wrapper-side precomputation (tiny one-off XLA ops, per the review):
    #   x0 = (top_vecs * mask + pos_emb) flattened to (B*S, D); no 1-lane mask block in-kernel.
    x0 = (top_vecs * mask_bool.astype(jnp.float32)[:, :, None] + pe[None]).reshape(B * S, D)

    # Additive key-padding bias pre-expanded to the head-batched layout (B*HEADS, S, S).
    pad = jnp.logical_not(mask_bool).astype(jnp.float32) * -1e18            # (B, S)
    bias = jnp.broadcast_to(pad[:, None, None, :], (B, HEADS, S, S)).reshape(B * HEADS, S, S)

    # Fuse Q/K/V weights (scale folded into Wq/bq); weights in bf16, biases stay f32.
    scale = 1.0 / math.sqrt(dh)
    wqkv = jnp.concatenate([params["wq"] * scale, params["wk"], params["wv"]],
                           axis=-1).astype(jnp.bfloat16)                    # (L, D, 3D)
    bqkv = jnp.concatenate([params["bq"] * scale, params["bk"], params["bv"]], axis=-1)
    wo = params["wo"].astype(jnp.bfloat16)
    w1 = params["w1"].astype(jnp.bfloat16)
    w2 = params["w2"].astype(jnp.bfloat16)

    ordered = [wqkv, bqkv, wo, params["bo"],
               params["ln1_g"], params["ln1_b"],
               w1, params["b1"], w2, params["b2"],
               params["ln2_g"], params["ln2_b"],
               params["lnf_g"], params["lnf_b"]]

    def full_spec(a):
        n = a.ndim
        return pl.BlockSpec(a.shape, lambda i, _n=n: (0,) * _n)

    in_specs = [full_spec(x0), full_spec(bias)] + [full_spec(a) for a in ordered]
    out_spec = pl.BlockSpec((B * S, D), lambda i: (0, 0))

    # Single grid step: whole batch in one invocation (no per-step pipeline overhead at this
    # toy size; weights touched exactly once). See scaling TODOs at the top of the file.
    out = pl.pallas_call(
        encoder_kernel,
        out_shape=jax.ShapeDtypeStruct((B * S, D), jnp.float32),
        grid=(1,),
        in_specs=in_specs,
        out_specs=out_spec,
        compiler_params=pltpu.CompilerParams(dimension_semantics=("arbitrary",)),
    )(x0, bias, *ordered)
    return out.reshape(B, S, D)


def make_pe(S, D):
    position = np.arange(S, dtype=np.float32)[:, None]
    div_term = np.exp(np.arange(0, D, 2, dtype=np.float32) * -(math.log(10000.0) / D))
    pe = np.zeros((S, D), np.float32)
    pe[:, 0::2] = np.sin(position * div_term)
    pe[:, 1::2] = np.cos(position * div_term)
    return jnp.asarray(pe)


def init_params(key):
    ks = jax.random.split(key, 12)

    def w(k, shape):
        return (0.02 * jax.random.normal(k, shape)).astype(jnp.float32)

    L, D, F = NUM_LAYERS, D_MODEL, D_FF
    return {
        "wq": w(ks[0], (L, D, D)), "bq": w(ks[1], (L, D)),
        "wk": w(ks[2], (L, D, D)), "bk": w(ks[3], (L, D)),
        "wv": w(ks[4], (L, D, D)), "bv": w(ks[5], (L, D)),
        "wo": w(ks[6], (L, D, D)), "bo": w(ks[7], (L, D)),
        "ln1_g": jnp.ones((L, D), jnp.float32), "ln1_b": jnp.zeros((L, D), jnp.float32),
        "w1": w(ks[8], (L, D, F)), "b1": w(ks[9], (L, F)),
        "w2": w(ks[10], (L, F, D)), "b2": w(ks[11], (L, D)),
        "ln2_g": jnp.ones((L, D), jnp.float32), "ln2_b": jnp.zeros((L, D), jnp.float32),
        "lnf_g": jnp.ones((1, D), jnp.float32), "lnf_b": jnp.zeros((1, D), jnp.float32),
    }


def ref_forward(top_vecs, mask_bool, p, pe):
    # Pure-JAX reference mirroring the PyTorch forward (eval mode), using the unfused
    # f32 parameters and the explicit where()-masked softmax.
    x = top_vecs * mask_bool.astype(jnp.float32)[:, :, None]
    x = x + pe[None]
    B, S, D = x.shape
    L = p["wq"].shape[0]
    dh = D // HEADS
    pad = jnp.logical_not(mask_bool)[:, None, None, :]    # (B, 1, 1, S)

    def split(t):
        return t.reshape(B, S, HEADS, dh).transpose(0, 2, 1, 3)

    for i in range(L):
        inp = x if i == 0 else _layer_norm(x, p["ln1_g"][i], p["ln1_b"][i])
        q = inp @ p["wq"][i] + p["bq"][i]
        k = inp @ p["wk"][i] + p["bk"][i]
        v = inp @ p["wv"][i] + p["bv"][i]
        qh, kh, vh = split(q) / math.sqrt(dh), split(k), split(v)
        scores = jnp.einsum("bhqd,bhkd->bhqk", qh, kh)
        scores = jnp.where(pad, -1e18, scores)
        attn = jax.nn.softmax(scores, axis=-1)
        ctx = jnp.einsum("bhqk,bhkd->bhqd", attn, vh)
        ctx = ctx.transpose(0, 2, 1, 3).reshape(B, S, D)
        out = ctx @ p["wo"][i] + p["bo"][i] + x
        ffn_in = _layer_norm(out, p["ln2_g"][i], p["ln2_b"][i])
        inter = _gelu(ffn_in @ p["w1"][i] + p["b1"][i])
        x = inter @ p["w2"][i] + p["b2"][i] + out
    return _layer_norm(x, p["lnf_g"], p["lnf_b"])


if __name__ == "__main__":
    key = jax.random.PRNGKey(0)
    k_x, k_p = jax.random.split(key)

    top_vecs = jax.random.normal(k_x, (BATCH, N_SENTS, D_MODEL), jnp.float32)
    lengths = jnp.array([N_SENTS, 5])
    mask = jnp.arange(N_SENTS)[None, :] < lengths[:, None]    # (B, S) bool
    params = init_params(k_p)
    pe = make_pe(N_SENTS, D_MODEL)

    out = sent_transformer_encoder(top_vecs, mask, params, pe)
    out = jax.block_until_ready(out)

    ref = ref_forward(top_vecs, mask, params, pe)
    # Tolerance covers single-pass bf16 MXU operands (explicit casts), the approx EUP
    # reciprocal in the softmax, and the fused-moment LayerNorm; the attention/FFN
    # branches carry 0.02-scale weights so propagated error stays well below this.
    np.testing.assert_allclose(np.asarray(out), np.asarray(ref), rtol=3e-3, atol=3e-3)
    print("KERNEL_OK")
</pallas_src>

<mosaic_0001>
module attributes {stable_mosaic.version = 11 : i64} {
  func.func @encoder_kernel(%arg0: i32, %arg1: memref<16x32xf32, #tpu.memory_space<vmem>>, %arg2: memref<8x8x8xf32, #tpu.memory_space<vmem>>, %arg3: memref<2x32x96xbf16, #tpu.memory_space<vmem>>, %arg4: memref<2x96xf32, #tpu.memory_space<vmem>>, %arg5: memref<2x32x32xbf16, #tpu.memory_space<vmem>>, %arg6: memref<2x32xf32, #tpu.memory_space<vmem>>, %arg7: memref<2x32xf32, #tpu.memory_space<vmem>>, %arg8: memref<2x32xf32, #tpu.memory_space<vmem>>, %arg9: memref<2x32x64xbf16, #tpu.memory_space<vmem>>, %arg10: memref<2x64xf32, #tpu.memory_space<vmem>>, %arg11: memref<2x64x32xbf16, #tpu.memory_space<vmem>>, %arg12: memref<2x32xf32, #tpu.memory_space<vmem>>, %arg13: memref<2x32xf32, #tpu.memory_space<vmem>>, %arg14: memref<2x32xf32, #tpu.memory_space<vmem>>, %arg15: memref<1x32xf32, #tpu.memory_space<vmem>>, %arg16: memref<1x32xf32, #tpu.memory_space<vmem>>, %arg17: memref<16x32xf32, #tpu.memory_space<vmem>>) attributes {dimension_semantics = [#tpu.dimension_semantics<arbitrary>], iteration_bounds = array<i64: 1>, scalar_prefetch = 0 : i64, scratch_operands = 0 : i64, tpu.core_type = #tpu.core_type<tc>, window_params = [{pipeline_mode = #tpu.pipeline_mode<synchronous>, transform_indices = @transform_0, window_bounds = array<i64: 16, 32>}, {pipeline_mode = #tpu.pipeline_mode<synchronous>, transform_indices = @transform_1, window_bounds = array<i64: 8, 8, 8>}, {pipeline_mode = #tpu.pipeline_mode<synchronous>, transform_indices = @transform_2, window_bounds = array<i64: 2, 32, 96>}, {pipeline_mode = #tpu.pipeline_mode<synchronous>, transform_indices = @transform_3, window_bounds = array<i64: 2, 96>}, {pipeline_mode = #tpu.pipeline_mode<synchronous>, transform_indices = @transform_4, window_bounds = array<i64: 2, 32, 32>}, {pipeline_mode = #tpu.pipeline_mode<synchronous>, transform_indices = @transform_5, window_bounds = array<i64: 2, 32>}, {pipeline_mode = #tpu.pipeline_mode<synchronous>, transform_indices = @transform_6, window_bounds = array<i64: 2, 32>}, {pipeline_mode = #tpu.pipeline_mode<synchronous>, transform_indices = @transform_7, window_bounds = array<i64: 2, 32>}, {pipeline_mode = #tpu.pipeline_mode<synchronous>, transform_indices = @transform_8, window_bounds = array<i64: 2, 32, 64>}, {pipeline_mode = #tpu.pipeline_mode<synchronous>, transform_indices = @transform_9, window_bounds = array<i64: 2, 64>}, {pipeline_mode = #tpu.pipeline_mode<synchronous>, transform_indices = @transform_10, window_bounds = array<i64: 2, 64, 32>}, {pipeline_mode = #tpu.pipeline_mode<synchronous>, transform_indices = @transform_11, window_bounds = array<i64: 2, 32>}, {pipeline_mode = #tpu.pipeline_mode<synchronous>, transform_indices = @transform_12, window_bounds = array<i64: 2, 32>}, {pipeline_mode = #tpu.pipeline_mode<synchronous>, transform_indices = @transform_13, window_bounds = array<i64: 2, 32>}, {pipeline_mode = #tpu.pipeline_mode<synchronous>, transform_indices = @transform_14, window_bounds = array<i64: 1, 32>}, {pipeline_mode = #tpu.pipeline_mode<synchronous>, transform_indices = @transform_15, window_bounds = array<i64: 1, 32>}, {pipeline_mode = #tpu.pipeline_mode<synchronous>, transform_indices = @transform_16, window_bounds = array<i64: 16, 32>}]} {
    %c0 = arith.constant 0 : index
    %c0_0 = arith.constant 0 : index
    %0 = vector.load %arg1[%c0, %c0_0] : memref<16x32xf32, #tpu.memory_space<vmem>>, vector<16x32xf32>
    %c0_1 = arith.constant 0 : index
    %c0_2 = arith.constant 0 : index
    %c0_3 = arith.constant 0 : index
    %1 = vector.load %arg2[%c0_1, %c0_2, %c0_3] : memref<8x8x8xf32, #tpu.memory_space<vmem>>, vector<8x8x8xf32>
    %2 = arith.truncf %0 : vector<16x32xf32> to vector<16x32xbf16>
    %c0_4 = arith.constant 0 : index
    %c0_5 = arith.constant 0 : index
    %c0_6 = arith.constant 0 : index
    %3 = vector.load %arg3[%c0_4, %c0_5, %c0_6] : memref<2x32x96xbf16, #tpu.memory_space<vmem>>, vector<1x32x96xbf16>
    %4 = vector.shape_cast %3 : vector<1x32x96xbf16> to vector<32x96xbf16>
    %cst = arith.constant dense<0.000000e+00> : vector<16x96xf32>
    %5 = tpu.matmul %2, %4, %cst {dimension_numbers = #tpu.dot_dimension_numbers<[1], [0], [0], [1], [0, 0, 1, 1], [], []>} : vector<16x32xbf16>, vector<32x96xbf16>, vector<16x96xf32> -> vector<16x96xf32>
    %c0_7 = arith.constant 0 : index
    %c0_8 = arith.constant 0 : index
    %6 = vector.load %arg4[%c0_7, %c0_8] : memref<2x96xf32, #tpu.memory_space<vmem>>, vector<1x96xf32>
    %7 = vector.broadcast %6 : vector<1x96xf32> to vector<16x96xf32>
    %8 = arith.addf %5, %7 : vector<16x96xf32>
    %9 = vector.extract_strided_slice %8 {offsets = [0, 0], sizes = [8, 96], strides = [1, 1]} : vector<16x96xf32> to vector<8x96xf32>
    %10 = vector.extract_strided_slice %9 {offsets = [0, 0], sizes = [8, 8], strides = [1, 1]} : vector<8x96xf32> to vector<8x8xf32>
    %11 = vector.extract_strided_slice %9 {offsets = [0, 32], sizes = [8, 8], strides = [1, 1]} : vector<8x96xf32> to vector<8x8xf32>
    %12 = vector.extract_strided_slice %9 {offsets = [0, 64], sizes = [8, 8], strides = [1, 1]} : vector<8x96xf32> to vector<8x8xf32>
    %13 = vector.extract_strided_slice %9 {offsets = [0, 8], sizes = [8, 8], strides = [1, 1]} : vector<8x96xf32> to vector<8x8xf32>
    %14 = vector.extract_strided_slice %9 {offsets = [0, 40], sizes = [8, 8], strides = [1, 1]} : vector<8x96xf32> to vector<8x8xf32>
    %15 = vector.extract_strided_slice %9 {offsets = [0, 72], sizes = [8, 8], strides = [1, 1]} : vector<8x96xf32> to vector<8x8xf32>
    %16 = vector.extract_strided_slice %9 {offsets = [0, 16], sizes = [8, 8], strides = [1, 1]} : vector<8x96xf32> to vector<8x8xf32>
    %17 = vector.extract_strided_slice %9 {offsets = [0, 48], sizes = [8, 8], strides = [1, 1]} : vector<8x96xf32> to vector<8x8xf32>
    %18 = vector.extract_strided_slice %9 {offsets = [0, 80], sizes = [8, 8], strides = [1, 1]} : vector<8x96xf32> to vector<8x8xf32>
    %19 = vector.extract_strided_slice %9 {offsets = [0, 24], sizes = [8, 8], strides = [1, 1]} : vector<8x96xf32> to vector<8x8xf32>
    %20 = vector.extract_strided_slice %9 {offsets = [0, 56], sizes = [8, 8], strides = [1, 1]} : vector<8x96xf32> to vector<8x8xf32>
    %21 = vector.extract_strided_slice %9 {offsets = [0, 88], sizes = [8, 8], strides = [1, 1]} : vector<8x96xf32> to vector<8x8xf32>
    %22 = vector.extract_strided_slice %8 {offsets = [8, 0], sizes = [8, 96], strides = [1, 1]} : vector<16x96xf32> to vector<8x96xf32>
    %23 = vector.extract_strided_slice %22 {offsets = [0, 0], sizes = [8, 8], strides = [1, 1]} : vector<8x96xf32> to vector<8x8xf32>
    %24 = vector.extract_strided_slice %22 {offsets = [0, 32], sizes = [8, 8], strides = [1, 1]} : vector<8x96xf32> to vector<8x8xf32>
    %25 = vector.extract_strided_slice %22 {offsets = [0, 64], sizes = [8, 8], strides = [1, 1]} : vector<8x96xf32> to vector<8x8xf32>
    %26 = vector.extract_strided_slice %22 {offsets = [0, 8], sizes = [8, 8], strides = [1, 1]} : vector<8x96xf32> to vector<8x8xf32>
    %27 = vector.extract_strided_slice %22 {offsets = [0, 40], sizes = [8, 8], strides = [1, 1]} : vector<8x96xf32> to vector<8x8xf32>
    %28 = vector.extract_strided_slice %22 {offsets = [0, 72], sizes = [8, 8], strides = [1, 1]} : vector<8x96xf32> to vector<8x8xf32>
    %29 = vector.extract_strided_slice %22 {offsets = [0, 16], sizes = [8, 8], strides = [1, 1]} : vector<8x96xf32> to vector<8x8xf32>
    %30 = vector.extract_strided_slice %22 {offsets = [0, 48], sizes = [8, 8], strides = [1, 1]} : vector<8x96xf32> to vector<8x8xf32>
    %31 = vector.extract_strided_slice %22 {offsets = [0, 80], sizes = [8, 8], strides = [1, 1]} : vector<8x96xf32> to vector<8x8xf32>
    %32 = vector.extract_strided_slice %22 {offsets = [0, 24], sizes = [8, 8], strides = [1, 1]} : vector<8x96xf32> to vector<8x8xf32>
    %33 = vector.extract_strided_slice %22 {offsets = [0, 56], sizes = [8, 8], strides = [1, 1]} : vector<8x96xf32> to vector<8x8xf32>
    %34 = vector.extract_strided_slice %22 {offsets = [0, 88], sizes = [8, 8], strides = [1, 1]} : vector<8x96xf32> to vector<8x8xf32>
    %35 = vector.shape_cast %10 : vector<8x8xf32> to vector<1x8x8xf32>
    %36 = vector.shape_cast %13 : vector<8x8xf32> to vector<1x8x8xf32>
    %37 = vector.shape_cast %16 : vector<8x8xf32> to vector<1x8x8xf32>
    %38 = vector.shape_cast %19 : vector<8x8xf32> to vector<1x8x8xf32>
    %39 = vector.shape_cast %23 : vector<8x8xf32> to vector<1x8x8xf32>
    %40 = vector.shape_cast %26 : vector<8x8xf32> to vector<1x8x8xf32>
    %41 = vector.shape_cast %29 : vector<8x8xf32> to vector<1x8x8xf32>
    %42 = vector.shape_cast %32 : vector<8x8xf32> to vector<1x8x8xf32>
    %43 = tpu.concatenate %35, %36, %37, %38, %39, %40, %41, %42 in 0 : vector<1x8x8xf32>, vector<1x8x8xf32>, vector<1x8x8xf32>, vector<1x8x8xf32>, vector<1x8x8xf32>, vector<1x8x8xf32>, vector<1x8x8xf32>, vector<1x8x8xf32> -> vector<8x8x8xf32>
    %44 = arith.truncf %43 : vector<8x8x8xf32> to vector<8x8x8xbf16>
    %45 = vector.shape_cast %11 : vector<8x8xf32> to vector<1x8x8xf32>
    %46 = vector.shape_cast %14 : vector<8x8xf32> to vector<1x8x8xf32>
    %47 = vector.shape_cast %17 : vector<8x8xf32> to vector<1x8x8xf32>
    %48 = vector.shape_cast %20 : vector<8x8xf32> to vector<1x8x8xf32>
    %49 = vector.shape_cast %24 : vector<8x8xf32> to vector<1x8x8xf32>
    %50 = vector.shape_cast %27 : vector<8x8xf32> to vector<1x8x8xf32>
    %51 = vector.shape_cast %30 : vector<8x8xf32> to vector<1x8x8xf32>
    %52 = vector.shape_cast %33 : vector<8x8xf32> to vector<1x8x8xf32>
    %53 = tpu.concatenate %45, %46, %47, %48, %49, %50, %51, %52 in 0 : vector<1x8x8xf32>, vector<1x8x8xf32>, vector<1x8x8xf32>, vector<1x8x8xf32>, vector<1x8x8xf32>, vector<1x8x8xf32>, vector<1x8x8xf32>, vector<1x8x8xf32> -> vector<8x8x8xf32>
    %54 = arith.truncf %53 : vector<8x8x8xf32> to vector<8x8x8xbf16>
    %55 = vector.shape_cast %12 : vector<8x8xf32> to vector<1x8x8xf32>
    %56 = vector.shape_cast %15 : vector<8x8xf32> to vector<1x8x8xf32>
    %57 = vector.shape_cast %18 : vector<8x8xf32> to vector<1x8x8xf32>
    %58 = vector.shape_cast %21 : vector<8x8xf32> to vector<1x8x8xf32>
    %59 = vector.shape_cast %25 : vector<8x8xf32> to vector<1x8x8xf32>
    %60 = vector.shape_cast %28 : vector<8x8xf32> to vector<1x8x8xf32>
    %61 = vector.shape_cast %31 : vector<8x8xf32> to vector<1x8x8xf32>
    %62 = vector.shape_cast %34 : vector<8x8xf32> to vector<1x8x8xf32>
    %63 = tpu.concatenate %55, %56, %57, %58, %59, %60, %61, %62 in 0 : vector<1x8x8xf32>, vector<1x8x8xf32>, vector<1x8x8xf32>, vector<1x8x8xf32>, vector<1x8x8xf32>, vector<1x8x8xf32>, vector<1x8x8xf32>, vector<1x8x8xf32> -> vector<8x8x8xf32>
    %64 = arith.truncf %63 : vector<8x8x8xf32> to vector<8x8x8xbf16>
    "tpu.trace_start"() <{level = 10 : i32, message = "hqd,hkd->hqk"}> : () -> ()
    %cst_9 = arith.constant dense<0.000000e+00> : vector<8x8x8xf32>
    %65 = tpu.matmul %44, %54, %cst_9 {dimension_numbers = #tpu.dot_dimension_numbers<[2], [2], [1], [1], [0, 0, 0, 1, 1, 1], [0], [0]>} : vector<8x8x8xbf16>, vector<8x8x8xbf16>, vector<8x8x8xf32> -> vector<8x8x8xf32>
    "tpu.trace_stop"() : () -> ()
    %66 = arith.addf %65, %1 : vector<8x8x8xf32>
    %cst_10 = arith.constant dense<0xFF800000> : vector<8x8xf32>
    %67 = vector.multi_reduction <maximumf>, %66, %cst_10 [2] : vector<8x8x8xf32> to vector<8x8xf32>
    %68 = vector.shape_cast %67 : vector<8x8xf32> to vector<8x8x1xf32>
    %69 = vector.broadcast %68 : vector<8x8x1xf32> to vector<8x8x8xf32>
    %70 = arith.subf %66, %69 : vector<8x8x8xf32>
    %71 = math.exp %70 : vector<8x8x8xf32>
    %cst_11 = arith.constant dense<0.000000e+00> : vector<8x8xf32>
    %72 = vector.multi_reduction <add>, %71, %cst_11 [2] : vector<8x8x8xf32> to vector<8x8xf32>
    %73 = vector.shape_cast %72 : vector<8x8xf32> to vector<8x8x1xf32>
    %74 = tpu.reciprocal %73 {approx = true} : vector<8x8x1xf32> -> vector<8x8x1xf32>
    %75 = vector.broadcast %74 : vector<8x8x1xf32> to vector<8x8x8xf32>
    %76 = arith.mulf %71, %75 : vector<8x8x8xf32>
    %77 = arith.truncf %76 : vector<8x8x8xf32> to vector<8x8x8xbf16>
    "tpu.trace_start"() <{level = 10 : i32, message = "hqk,hkd->hqd"}> : () -> ()
    %cst_12 = arith.constant dense<0.000000e+00> : vector<8x8x8xf32>
    %78 = tpu.matmul %77, %64, %cst_12 {dimension_numbers = #tpu.dot_dimension_numbers<[2], [1], [1], [2], [0, 0, 0, 1, 1, 2], [0], [0]>} : vector<8x8x8xbf16>, vector<8x8x8xbf16>, vector<8x8x8xf32> -> vector<8x8x8xf32>
    "tpu.trace_stop"() : () -> ()
    %79 = vector.extract_strided_slice %78 {offsets = [0, 0, 0], sizes = [1, 8, 8], strides = [1, 1, 1]} : vector<8x8x8xf32> to vector<1x8x8xf32>
    %80 = vector.shape_cast %79 : vector<1x8x8xf32> to vector<8x8xf32>
    %81 = vector.extract_strided_slice %78 {offsets = [1, 0, 0], sizes = [1, 8, 8], strides = [1, 1, 1]} : vector<8x8x8xf32> to vector<1x8x8xf32>
    %82 = vector.shape_cast %81 : vector<1x8x8xf32> to vector<8x8xf32>
    %83 = vector.extract_strided_slice %78 {offsets = [2, 0, 0], sizes = [1, 8, 8], strides = [1, 1, 1]} : vector<8x8x8xf32> to vector<1x8x8xf32>
    %84 = vector.shape_cast %83 : vector<1x8x8xf32> to vector<8x8xf32>
    %85 = vector.extract_strided_slice %78 {offsets = [3, 0, 0], sizes = [1, 8, 8], strides = [1, 1, 1]} : vector<8x8x8xf32> to vector<1x8x8xf32>
    %86 = vector.shape_cast %85 : vector<1x8x8xf32> to vector<8x8xf32>
    %87 = tpu.concatenate %80, %82, %84, %86 in 1 : vector<8x8xf32>, vector<8x8xf32>, vector<8x8xf32>, vector<8x8xf32> -> vector<8x32xf32>
    %88 = vector.extract_strided_slice %78 {offsets = [4, 0, 0], sizes = [1, 8, 8], strides = [1, 1, 1]} : vector<8x8x8xf32> to vector<1x8x8xf32>
    %89 = vector.shape_cast %88 : vector<1x8x8xf32> to vector<8x8xf32>
    %90 = vector.extract_strided_slice %78 {offsets = [5, 0, 0], sizes = [1, 8, 8], strides = [1, 1, 1]} : vector<8x8x8xf32> to vector<1x8x8xf32>
    %91 = vector.shape_cast %90 : vector<1x8x8xf32> to vector<8x8xf32>
    %92 = vector.extract_strided_slice %78 {offsets = [6, 0, 0], sizes = [1, 8, 8], strides = [1, 1, 1]} : vector<8x8x8xf32> to vector<1x8x8xf32>
    %93 = vector.shape_cast %92 : vector<1x8x8xf32> to vector<8x8xf32>
    %94 = vector.extract_strided_slice %78 {offsets = [7, 0, 0], sizes = [1, 8, 8], strides = [1, 1, 1]} : vector<8x8x8xf32> to vector<1x8x8xf32>
    %95 = vector.shape_cast %94 : vector<1x8x8xf32> to vector<8x8xf32>
    %96 = tpu.concatenate %89, %91, %93, %95 in 1 : vector<8x8xf32>, vector<8x8xf32>, vector<8x8xf32>, vector<8x8xf32> -> vector<8x32xf32>
    %97 = tpu.concatenate %87, %96 in 0 : vector<8x32xf32>, vector<8x32xf32> -> vector<16x32xf32>
    %98 = arith.truncf %97 : vector<16x32xf32> to vector<16x32xbf16>
    %c0_13 = arith.constant 0 : index
    %c0_14 = arith.constant 0 : index
    %c0_15 = arith.constant 0 : index
    %99 = vector.load %arg5[%c0_13, %c0_14, %c0_15] : memref<2x32x32xbf16, #tpu.memory_space<vmem>>, vector<1x32x32xbf16>
    %100 = vector.shape_cast %99 : vector<1x32x32xbf16> to vector<32x32xbf16>
    %cst_16 = arith.constant dense<0.000000e+00> : vector<16x32xf32>
    %101 = tpu.matmul %98, %100, %cst_16 {dimension_numbers = #tpu.dot_dimension_numbers<[1], [0], [0], [1], [0, 0, 1, 1], [], []>} : vector<16x32xbf16>, vector<32x32xbf16>, vector<16x32xf32> -> vector<16x32xf32>
    %c0_17 = arith.constant 0 : index
    %c0_18 = arith.constant 0 : index
    %102 = vector.load %arg6[%c0_17, %c0_18] : memref<2x32xf32, #tpu.memory_space<vmem>>, vector<1x32xf32>
    %103 = vector.broadcast %102 : vector<1x32xf32> to vector<16x32xf32>
    %104 = arith.addf %101, %103 : vector<16x32xf32>
    %105 = arith.addf %104, %0 : vector<16x32xf32>
    %c0_19 = arith.constant 0 : index
    %c0_20 = arith.constant 0 : index
    %106 = vector.load %arg13[%c0_19, %c0_20] : memref<2x32xf32, #tpu.memory_space<vmem>>, vector<1x32xf32>
    %c0_21 = arith.constant 0 : index
    %c0_22 = arith.constant 0 : index
    %107 = vector.load %arg14[%c0_21, %c0_22] : memref<2x32xf32, #tpu.memory_space<vmem>>, vector<1x32xf32>
    %cst_23 = arith.constant dense<0.000000e+00> : vector<16xf32>
    %108 = vector.multi_reduction <add>, %105, %cst_23 [1] : vector<16x32xf32> to vector<16xf32>
    %109 = vector.shape_cast %108 : vector<16xf32> to vector<16x1xf32>
    %cst_24 = arith.constant 3.200000e+01 : f32
    %110 = vector.broadcast %cst_24 : f32 to vector<16x1xf32>
    %111 = arith.divf %109, %110 : vector<16x1xf32>
    %112 = arith.mulf %105, %105 : vector<16x32xf32>
    %cst_25 = arith.constant dense<0.000000e+00> : vector<16xf32>
    %113 = vector.multi_reduction <add>, %112, %cst_25 [1] : vector<16x32xf32> to vector<16xf32>
    %114 = vector.shape_cast %113 : vector<16xf32> to vector<16x1xf32>
    %cst_26 = arith.constant 3.200000e+01 : f32
    %115 = vector.broadcast %cst_26 : f32 to vector<16x1xf32>
    %116 = arith.divf %114, %115 : vector<16x1xf32>
    %117 = arith.mulf %111, %111 : vector<16x1xf32>
    %118 = arith.subf %116, %117 : vector<16x1xf32>
    %119 = vector.broadcast %111 : vector<16x1xf32> to vector<16x32xf32>
    %120 = arith.subf %105, %119 : vector<16x32xf32>
    %cst_27 = arith.constant 9.99999997E-7 : f32
    %121 = vector.broadcast %cst_27 : f32 to vector<16x1xf32>
    %122 = arith.addf %118, %121 : vector<16x1xf32>
    %123 = math.rsqrt %122 : vector<16x1xf32>
    %124 = vector.broadcast %123 : vector<16x1xf32> to vector<16x32xf32>
    %125 = arith.mulf %120, %124 : vector<16x32xf32>
    %126 = vector.broadcast %106 : vector<1x32xf32> to vector<16x32xf32>
    %127 = arith.mulf %125, %126 : vector<16x32xf32>
    %128 = vector.broadcast %107 : vector<1x32xf32> to vector<16x32xf32>
    %129 = arith.addf %127, %128 : vector<16x32xf32>
    %130 = arith.truncf %129 : vector<16x32xf32> to vector<16x32xbf16>
    %c0_28 = arith.constant 0 : index
    %c0_29 = arith.constant 0 : index
    %c0_30 = arith.constant 0 : index
    %131 = vector.load %arg9[%c0_28, %c0_29, %c0_30] : memref<2x32x64xbf16, #tpu.memory_space<vmem>>, vector<1x32x64xbf16>
    %132 = vector.shape_cast %131 : vector<1x32x64xbf16> to vector<32x64xbf16>
    %cst_31 = arith.constant dense<0.000000e+00> : vector<16x64xf32>
    %133 = tpu.matmul %130, %132, %cst_31 {dimension_numbers = #tpu.dot_dimension_numbers<[1], [0], [0], [1], [0, 0, 1, 1], [], []>} : vector<16x32xbf16>, vector<32x64xbf16>, vector<16x64xf32> -> vector<16x64xf32>
    %c0_32 = arith.constant 0 : index
    %c0_33 = arith.constant 0 : index
    %134 = vector.load %arg10[%c0_32, %c0_33] : memref<2x64xf32, #tpu.memory_space<vmem>>, vector<1x64xf32>
    %135 = vector.broadcast %134 : vector<1x64xf32> to vector<16x64xf32>
    %136 = arith.addf %133, %135 : vector<16x64xf32>
    %cst_34 = arith.constant 5.000000e-01 : f32
    %137 = vector.broadcast %cst_34 : f32 to vector<16x64xf32>
    %138 = arith.mulf %137, %136 : vector<16x64xf32>
    %cst_35 = arith.constant 4.471500e-02 : f32
    %139 = vector.broadcast %cst_35 : f32 to vector<16x64xf32>
    %140 = arith.mulf %139, %136 : vector<16x64xf32>
    %141 = arith.mulf %140, %136 : vector<16x64xf32>
    %142 = arith.mulf %141, %136 : vector<16x64xf32>
    %143 = arith.addf %136, %142 : vector<16x64xf32>
    %cst_36 = arith.constant 0.797884583 : f32
    %144 = vector.broadcast %cst_36 : f32 to vector<16x64xf32>
    %145 = arith.mulf %144, %143 : vector<16x64xf32>
    %146 = math.tanh %145 : vector<16x64xf32>
    %cst_37 = arith.constant 1.000000e+00 : f32
    %147 = vector.broadcast %cst_37 : f32 to vector<16x64xf32>
    %148 = arith.addf %147, %146 : vector<16x64xf32>
    %149 = arith.mulf %138, %148 : vector<16x64xf32>
    %150 = arith.truncf %149 : vector<16x64xf32> to vector<16x64xbf16>
    %c0_38 = arith.constant 0 : index
    %c0_39 = arith.constant 0 : index
    %c0_40 = arith.constant 0 : index
    %151 = vector.load %arg11[%c0_38, %c0_39, %c0_40] : memref<2x64x32xbf16, #tpu.memory_space<vmem>>, vector<1x64x32xbf16>
    %152 = vector.shape_cast %151 : vector<1x64x32xbf16> to vector<64x32xbf16>
    %cst_41 = arith.constant dense<0.000000e+00> : vector<16x32xf32>
    %153 = tpu.matmul %150, %152, %cst_41 {dimension_numbers = #tpu.dot_dimension_numbers<[1], [0], [0], [1], [0, 0, 1, 1], [], []>} : vector<16x64xbf16>, vector<64x32xbf16>, vector<16x32xf32> -> vector<16x32xf32>
    %c0_42 = arith.constant 0 : index
    %c0_43 = arith.constant 0 : index
    %154 = vector.load %arg12[%c0_42, %c0_43] : memref<2x32xf32, #tpu.memory_space<vmem>>, vector<1x32xf32>
    %155 = vector.broadcast %154 : vector<1x32xf32> to vector<16x32xf32>
    %156 = arith.addf %153, %155 : vector<16x32xf32>
    %157 = arith.addf %156, %105 : vector<16x32xf32>
    %c1 = arith.constant 1 : index
    %c0_44 = arith.constant 0 : index
    %158 = vector.load %arg7[%c1, %c0_44] : memref<2x32xf32, #tpu.memory_space<vmem>>, vector<1x32xf32>
    %c1_45 = arith.constant 1 : index
    %c0_46 = arith.constant 0 : index
    %159 = vector.load %arg8[%c1_45, %c0_46] : memref<2x32xf32, #tpu.memory_space<vmem>>, vector<1x32xf32>
    %cst_47 = arith.constant dense<0.000000e+00> : vector<16xf32>
    %160 = vector.multi_reduction <add>, %157, %cst_47 [1] : vector<16x32xf32> to vector<16xf32>
    %161 = vector.shape_cast %160 : vector<16xf32> to vector<16x1xf32>
    %cst_48 = arith.constant 3.200000e+01 : f32
    %162 = vector.broadcast %cst_48 : f32 to vector<16x1xf32>
    %163 = arith.divf %161, %162 : vector<16x1xf32>
    %164 = arith.mulf %157, %157 : vector<16x32xf32>
    %cst_49 = arith.constant dense<0.000000e+00> : vector<16xf32>
    %165 = vector.multi_reduction <add>, %164, %cst_49 [1] : vector<16x32xf32> to vector<16xf32>
    %166 = vector.shape_cast %165 : vector<16xf32> to vector<16x1xf32>
    %cst_50 = arith.constant 3.200000e+01 : f32
    %167 = vector.broadcast %cst_50 : f32 to vector<16x1xf32>
    %168 = arith.divf %166, %167 : vector<16x1xf32>
    %169 = arith.mulf %163, %163 : vector<16x1xf32>
    %170 = arith.subf %168, %169 : vector<16x1xf32>
    %171 = vector.broadcast %163 : vector<16x1xf32> to vector<16x32xf32>
    %172 = arith.subf %157, %171 : vector<16x32xf32>
    %cst_51 = arith.constant 9.99999997E-7 : f32
    %173 = vector.broadcast %cst_51 : f32 to vector<16x1xf32>
    %174 = arith.addf %170, %173 : vector<16x1xf32>
    %175 = math.rsqrt %174 : vector<16x1xf32>
    %176 = vector.broadcast %175 : vector<16x1xf32> to vector<16x32xf32>
    %177 = arith.mulf %172, %176 : vector<16x32xf32>
    %178 = vector.broadcast %158 : vector<1x32xf32> to vector<16x32xf32>
    %179 = arith.mulf %177, %178 : vector<16x32xf32>
    %180 = vector.broadcast %159 : vector<1x32xf32> to vector<16x32xf32>
    %181 = arith.addf %179, %180 : vector<16x32xf32>
    %182 = arith.truncf %181 : vector<16x32xf32> to vector<16x32xbf16>
    %c1_52 = arith.constant 1 : index
    %c0_53 = arith.constant 0 : index
    %c0_54 = arith.constant 0 : index
    %183 = vector.load %arg3[%c1_52, %c0_53, %c0_54] : memref<2x32x96xbf16, #tpu.memory_space<vmem>>, vector<1x32x96xbf16>
    %184 = vector.shape_cast %183 : vector<1x32x96xbf16> to vector<32x96xbf16>
    %cst_55 = arith.constant dense<0.000000e+00> : vector<16x96xf32>
    %185 = tpu.matmul %182, %184, %cst_55 {dimension_numbers = #tpu.dot_dimension_numbers<[1], [0], [0], [1], [0, 0, 1, 1], [], []>} : vector<16x32xbf16>, vector<32x96xbf16>, vector<16x96xf32> -> vector<16x96xf32>
    %c1_56 = arith.constant 1 : index
    %c0_57 = arith.constant 0 : index
    %186 = vector.load %arg4[%c1_56, %c0_57] : memref<2x96xf32, #tpu.memory_space<vmem>>, vector<1x96xf32>
    %187 = vector.broadcast %186 : vector<1x96xf32> to vector<16x96xf32>
    %188 = arith.addf %185, %187 : vector<16x96xf32>
    %189 = vector.extract_strided_slice %188 {offsets = [0, 0], sizes = [8, 96], strides = [1, 1]} : vector<16x96xf32> to vector<8x96xf32>
    %190 = vector.extract_strided_slice %189 {offsets = [0, 0], sizes = [8, 8], strides = [1, 1]} : vector<8x96xf32> to vector<8x8xf32>
    %191 = vector.extract_strided_slice %189 {offsets = [0, 32], sizes = [8, 8], strides = [1, 1]} : vector<8x96xf32> to vector<8x8xf32>
    %192 = vector.extract_strided_slice %189 {offsets = [0, 64], sizes = [8, 8], strides = [1, 1]} : vector<8x96xf32> to vector<8x8xf32>
    %193 = vector.extract_strided_slice %189 {offsets = [0, 8], sizes = [8, 8], strides = [1, 1]} : vector<8x96xf32> to vector<8x8xf32>
    %194 = vector.extract_strided_slice %189 {offsets = [0, 40], sizes = [8, 8], strides = [1, 1]} : vector<8x96xf32> to vector<8x8xf32>
    %195 = vector.extract_strided_slice %189 {offsets = [0, 72], sizes = [8, 8], strides = [1, 1]} : vector<8x96xf32> to vector<8x8xf32>
    %196 = vector.extract_strided_slice %189 {offsets = [0, 16], sizes = [8, 8], strides = [1, 1]} : vector<8x96xf32> to vector<8x8xf32>
    %197 = vector.extract_strided_slice %189 {offsets = [0, 48], sizes = [8, 8], strides = [1, 1]} : vector<8x96xf32> to vector<8x8xf32>
    %198 = vector.extract_strided_slice %189 {offsets = [0, 80], sizes = [8, 8], strides = [1, 1]} : vector<8x96xf32> to vector<8x8xf32>
    %199 = vector.extract_strided_slice %189 {offsets = [0, 24], sizes = [8, 8], strides = [1, 1]} : vector<8x96xf32> to vector<8x8xf32>
    %200 = vector.extract_strided_slice %189 {offsets = [0, 56], sizes = [8, 8], strides = [1, 1]} : vector<8x96xf32> to vector<8x8xf32>
    %201 = vector.extract_strided_slice %189 {offsets = [0, 88], sizes = [8, 8], strides = [1, 1]} : vector<8x96xf32> to vector<8x8xf32>
    %202 = vector.extract_strided_slice %188 {offsets = [8, 0], sizes = [8, 96], strides = [1, 1]} : vector<16x96xf32> to vector<8x96xf32>
    %203 = vector.extract_strided_slice %202 {offsets = [0, 0], sizes = [8, 8], strides = [1, 1]} : vector<8x96xf32> to vector<8x8xf32>
    %204 = vector.extract_strided_slice %202 {offsets = [0, 32], sizes = [8, 8], strides = [1, 1]} : vector<8x96xf32> to vector<8x8xf32>
    %205 = vector.extract_strided_slice %202 {offsets = [0, 64], sizes = [8, 8], strides = [1, 1]} : vector<8x96xf32> to vector<8x8xf32>
    %206 = vector.extract_strided_slice %202 {offsets = [0, 8], sizes = [8, 8], strides = [1, 1]} : vector<8x96xf32> to vector<8x8xf32>
    %207 = vector.extract_strided_slice %202 {offsets = [0, 40], sizes = [8, 8], strides = [1, 1]} : vector<8x96xf32> to vector<8x8xf32>
    %208 = vector.extract_strided_slice %202 {offsets = [0, 72], sizes = [8, 8], strides = [1, 1]} : vector<8x96xf32> to vector<8x8xf32>
    %209 = vector.extract_strided_slice %202 {offsets = [0, 16], sizes = [8, 8], strides = [1, 1]} : vector<8x96xf32> to vector<8x8xf32>
    %210 = vector.extract_strided_slice %202 {offsets = [0, 48], sizes = [8, 8], strides = [1, 1]} : vector<8x96xf32> to vector<8x8xf32>
    %211 = vector.extract_strided_slice %202 {offsets = [0, 80], sizes = [8, 8], strides = [1, 1]} : vector<8x96xf32> to vector<8x8xf32>
    %212 = vector.extract_strided_slice %202 {offsets = [0, 24], sizes = [8, 8], strides = [1, 1]} : vector<8x96xf32> to vector<8x8xf32>
    %213 = vector.extract_strided_slice %202 {offsets = [0, 56], sizes = [8, 8], strides = [1, 1]} : vector<8x96xf32> to vector<8x8xf32>
    %214 = vector.extract_strided_slice %202 {offsets = [0, 88], sizes = [8, 8], strides = [1, 1]} : vector<8x96xf32> to vector<8x8xf32>
    %215 = vector.shape_cast %190 : vector<8x8xf32> to vector<1x8x8xf32>
    %216 = vector.shape_cast %193 : vector<8x8xf32> to vector<1x8x8xf32>
    %217 = vector.shape_cast %196 : vector<8x8xf32> to vector<1x8x8xf32>
    %218 = vector.shape_cast %199 : vector<8x8xf32> to vector<1x8x8xf32>
    %219 = vector.shape_cast %203 : vector<8x8xf32> to vector<1x8x8xf32>
    %220 = vector.shape_cast %206 : vector<8x8xf32> to vector<1x8x8xf32>
    %221 = vector.shape_cast %209 : vector<8x8xf32> to vector<1x8x8xf32>
    %222 = vector.shape_cast %212 : vector<8x8xf32> to vector<1x8x8xf32>
    %223 = tpu.concatenate %215, %216, %217, %218, %219, %220, %221, %222 in 0 : vector<1x8x8xf32>, vector<1x8x8xf32>, vector<1x8x8xf32>, vector<1x8x8xf32>, vector<1x8x8xf32>, vector<1x8x8xf32>, vector<1x8x8xf32>, vector<1x8x8xf32> -> vector<8x8x8xf32>
    %224 = arith.truncf %223 : vector<8x8x8xf32> to vector<8x8x8xbf16>
    %225 = vector.shape_cast %191 : vector<8x8xf32> to vector<1x8x8xf32>
    %226 = vector.shape_cast %194 : vector<8x8xf32> to vector<1x8x8xf32>
    %227 = vector.shape_cast %197 : vector<8x8xf32> to vector<1x8x8xf32>
    %228 = vector.shape_cast %200 : vector<8x8xf32> to vector<1x8x8xf32>
    %229 = vector.shape_cast %204 : vector<8x8xf32> to vector<1x8x8xf32>
    %230 = vector.shape_cast %207 : vector<8x8xf32> to vector<1x8x8xf32>
    %231 = vector.shape_cast %210 : vector<8x8xf32> to vector<1x8x8xf32>
    %232 = vector.shape_cast %213 : vector<8x8xf32> to vector<1x8x8xf32>
    %233 = tpu.concatenate %225, %226, %227, %228, %229, %230, %231, %232 in 0 : vector<1x8x8xf32>, vector<1x8x8xf32>, vector<1x8x8xf32>, vector<1x8x8xf32>, vector<1x8x8xf32>, vector<1x8x8xf32>, vector<1x8x8xf32>, vector<1x8x8xf32> -> vector<8x8x8xf32>
    %234 = arith.truncf %233 : vector<8x8x8xf32> to vector<8x8x8xbf16>
    %235 = vector.shape_cast %192 : vector<8x8xf32> to vector<1x8x8xf32>
    %236 = vector.shape_cast %195 : vector<8x8xf32> to vector<1x8x8xf32>
    %237 = vector.shape_cast %198 : vector<8x8xf32> to vector<1x8x8xf32>
    %238 = vector.shape_cast %201 : vector<8x8xf32> to vector<1x8x8xf32>
    %239 = vector.shape_cast %205 : vector<8x8xf32> to vector<1x8x8xf32>
    %240 = vector.shape_cast %208 : vector<8x8xf32> to vector<1x8x8xf32>
    %241 = vector.shape_cast %211 : vector<8x8xf32> to vector<1x8x8xf32>
    %242 = vector.shape_cast %214 : vector<8x8xf32> to vector<1x8x8xf32>
    %243 = tpu.concatenate %235, %236, %237, %238, %239, %240, %241, %242 in 0 : vector<1x8x8xf32>, vector<1x8x8xf32>, vector<1x8x8xf32>, vector<1x8x8xf32>, vector<1x8x8xf32>, vector<1x8x8xf32>, vector<1x8x8xf32>, vector<1x8x8xf32> -> vector<8x8x8xf32>
    %244 = arith.truncf %243 : vector<8x8x8xf32> to vector<8x8x8xbf16>
    "tpu.trace_start"() <{level = 10 : i32, message = "hqd,hkd->hqk"}> : () -> ()
    %cst_58 = arith.constant dense<0.000000e+00> : vector<8x8x8xf32>
    %245 = tpu.matmul %224, %234, %cst_58 {dimension_numbers = #tpu.dot_dimension_numbers<[2], [2], [1], [1], [0, 0, 0, 1, 1, 1], [0], [0]>} : vector<8x8x8xbf16>, vector<8x8x8xbf16>, vector<8x8x8xf32> -> vector<8x8x8xf32>
    "tpu.trace_stop"() : () -> ()
    %246 = arith.addf %245, %1 : vector<8x8x8xf32>
    %cst_59 = arith.constant dense<0xFF800000> : vector<8x8xf32>
    %247 = vector.multi_reduction <maximumf>, %246, %cst_59 [2] : vector<8x8x8xf32> to vector<8x8xf32>
    %248 = vector.shape_cast %247 : vector<8x8xf32> to vector<8x8x1xf32>
    %249 = vector.broadcast %248 : vector<8x8x1xf32> to vector<8x8x8xf32>
    %250 = arith.subf %246, %249 : vector<8x8x8xf32>
    %251 = math.exp %250 : vector<8x8x8xf32>
    %cst_60 = arith.constant dense<0.000000e+00> : vector<8x8xf32>
    %252 = vector.multi_reduction <add>, %251, %cst_60 [2] : vector<8x8x8xf32> to vector<8x8xf32>
    %253 = vector.shape_cast %252 : vector<8x8xf32> to vector<8x8x1xf32>
    %254 = tpu.reciprocal %253 {approx = true} : vector<8x8x1xf32> -> vector<8x8x1xf32>
    %255 = vector.broadcast %254 : vector<8x8x1xf32> to vector<8x8x8xf32>
    %256 = arith.mulf %251, %255 : vector<8x8x8xf32>
    %257 = arith.truncf %256 : vector<8x8x8xf32> to vector<8x8x8xbf16>
    "tpu.trace_start"() <{level = 10 : i32, message = "hqk,hkd->hqd"}> : () -> ()
    %cst_61 = arith.constant dense<0.000000e+00> : vector<8x8x8xf32>
    %258 = tpu.matmul %257, %244, %cst_61 {dimension_numbers = #tpu.dot_dimension_numbers<[2], [1], [1], [2], [0, 0, 0, 1, 1, 2], [0], [0]>} : vector<8x8x8xbf16>, vector<8x8x8xbf16>, vector<8x8x8xf32> -> vector<8x8x8xf32>
    "tpu.trace_stop"() : () -> ()
    %259 = vector.extract_strided_slice %258 {offsets = [0, 0, 0], sizes = [1, 8, 8], strides = [1, 1, 1]} : vector<8x8x8xf32> to vector<1x8x8xf32>
    %260 = vector.shape_cast %259 : vector<1x8x8xf32> to vector<8x8xf32>
    %261 = vector.extract_strided_slice %258 {offsets = [1, 0, 0], sizes = [1, 8, 8], strides = [1, 1, 1]} : vector<8x8x8xf32> to vector<1x8x8xf32>
    %262 = vector.shape_cast %261 : vector<1x8x8xf32> to vector<8x8xf32>
    %263 = vector.extract_strided_slice %258 {offsets = [2, 0, 0], sizes = [1, 8, 8], strides = [1, 1, 1]} : vector<8x8x8xf32> to vector<1x8x8xf32>
    %264 = vector.shape_cast %263 : vector<1x8x8xf32> to vector<8x8xf32>
    %265 = vector.extract_strided_slice %258 {offsets = [3, 0, 0], sizes = [1, 8, 8], strides = [1, 1, 1]} : vector<8x8x8xf32> to vector<1x8x8xf32>
    %266 = vector.shape_cast %265 : vector<1x8x8xf32> to vector<8x8xf32>
    %267 = tpu.concatenate %260, %262, %264, %266 in 1 : vector<8x8xf32>, vector<8x8xf32>, vector<8x8xf32>, vector<8x8xf32> -> vector<8x32xf32>
    %268 = vector.extract_strided_slice %258 {offsets = [4, 0, 0], sizes = [1, 8, 8], strides = [1, 1, 1]} : vector<8x8x8xf32> to vector<1x8x8xf32>
    %269 = vector.shape_cast %268 : vector<1x8x8xf32> to vector<8x8xf32>
    %270 = vector.extract_strided_slice %258 {offsets = [5, 0, 0], sizes = [1, 8, 8], strides = [1, 1, 1]} : vector<8x8x8xf32> to vector<1x8x8xf32>
    %271 = vector.shape_cast %270 : vector<1x8x8xf32> to vector<8x8xf32>
    %272 = vector.extract_strided_slice %258 {offsets = [6, 0, 0], sizes = [1, 8, 8], strides = [1, 1, 1]} : vector<8x8x8xf32> to vector<1x8x8xf32>
    %273 = vector.shape_cast %272 : vector<1x8x8xf32> to vector<8x8xf32>
    %274 = vector.extract_strided_slice %258 {offsets = [7, 0, 0], sizes = [1, 8, 8], strides = [1, 1, 1]} : vector<8x8x8xf32> to vector<1x8x8xf32>
    %275 = vector.shape_cast %274 : vector<1x8x8xf32> to vector<8x8xf32>
    %276 = tpu.concatenate %269, %271, %273, %275 in 1 : vector<8x8xf32>, vector<8x8xf32>, vector<8x8xf32>, vector<8x8xf32> -> vector<8x32xf32>
    %277 = tpu.concatenate %267, %276 in 0 : vector<8x32xf32>, vector<8x32xf32> -> vector<16x32xf32>
    %278 = arith.truncf %277 : vector<16x32xf32> to vector<16x32xbf16>
    %c1_62 = arith.constant 1 : index
    %c0_63 = arith.constant 0 : index
    %c0_64 = arith.constant 0 : index
    %279 = vector.load %arg5[%c1_62, %c0_63, %c0_64] : memref<2x32x32xbf16, #tpu.memory_space<vmem>>, vector<1x32x32xbf16>
    %280 = vector.shape_cast %279 : vector<1x32x32xbf16> to vector<32x32xbf16>
    %cst_65 = arith.constant dense<0.000000e+00> : vector<16x32xf32>
    %281 = tpu.matmul %278, %280, %cst_65 {dimension_numbers = #tpu.dot_dimension_numbers<[1], [0], [0], [1], [0, 0, 1, 1], [], []>} : vector<16x32xbf16>, vector<32x32xbf16>, vector<16x32xf32> -> vector<16x32xf32>
    %c1_66 = arith.constant 1 : index
    %c0_67 = arith.constant 0 : index
    %282 = vector.load %arg6[%c1_66, %c0_67] : memref<2x32xf32, #tpu.memory_space<vmem>>, vector<1x32xf32>
    %283 = vector.broadcast %282 : vector<1x32xf32> to vector<16x32xf32>
    %284 = arith.addf %281, %283 : vector<16x32xf32>
    %285 = arith.addf %284, %157 : vector<16x32xf32>
    %c1_68 = arith.constant 1 : index
    %c0_69 = arith.constant 0 : index
    %286 = vector.load %arg13[%c1_68, %c0_69] : memref<2x32xf32, #tpu.memory_space<vmem>>, vector<1x32xf32>
    %c1_70 = arith.constant 1 : index
    %c0_71 = arith.constant 0 : index
    %287 = vector.load %arg14[%c1_70, %c0_71] : memref<2x32xf32, #tpu.memory_space<vmem>>, vector<1x32xf32>
    %cst_72 = arith.constant dense<0.000000e+00> : vector<16xf32>
    %288 = vector.multi_reduction <add>, %285, %cst_72 [1] : vector<16x32xf32> to vector<16xf32>
    %289 = vector.shape_cast %288 : vector<16xf32> to vector<16x1xf32>
    %cst_73 = arith.constant 3.200000e+01 : f32
    %290 = vector.broadcast %cst_73 : f32 to vector<16x1xf32>
    %291 = arith.divf %289, %290 : vector<16x1xf32>
    %292 = arith.mulf %285, %285 : vector<16x32xf32>
    %cst_74 = arith.constant dense<0.000000e+00> : vector<16xf32>
    %293 = vector.multi_reduction <add>, %292, %cst_74 [1] : vector<16x32xf32> to vector<16xf32>
    %294 = vector.shape_cast %293 : vector<16xf32> to vector<16x1xf32>
    %cst_75 = arith.constant 3.200000e+01 : f32
    %295 = vector.broadcast %cst_75 : f32 to vector<16x1xf32>
    %296 = arith.divf %294, %295 : vector<16x1xf32>
    %297 = arith.mulf %291, %291 : vector<16x1xf32>
    %298 = arith.subf %296, %297 : vector<16x1xf32>
    %299 = vector.broadcast %291 : vector<16x1xf32> to vector<16x32xf32>
    %300 = arith.subf %285, %299 : vector<16x32xf32>
    %cst_76 = arith.constant 9.99999997E-7 : f32
    %301 = vector.broadcast %cst_76 : f32 to vector<16x1xf32>
    %302 = arith.addf %298, %301 : vector<16x1xf32>
    %303 = math.rsqrt %302 : vector<16x1xf32>
    %304 = vector.broadcast %303 : vector<16x1xf32> to vector<16x32xf32>
    %305 = arith.mulf %300, %304 : vector<16x32xf32>
    %306 = vector.broadcast %286 : vector<1x32xf32> to vector<16x32xf32>
    %307 = arith.mulf %305, %306 : vector<16x32xf32>
    %308 = vector.broadcast %287 : vector<1x32xf32> to vector<16x32xf32>
    %309 = arith.addf %307, %308 : vector<16x32xf32>
    %310 = arith.truncf %309 : vector<16x32xf32> to vector<16x32xbf16>
    %c1_77 = arith.constant 1 : index
    %c0_78 = arith.constant 0 : index
    %c0_79 = arith.constant 0 : index
    %311 = vector.load %arg9[%c1_77, %c0_78, %c0_79] : memref<2x32x64xbf16, #tpu.memory_space<vmem>>, vector<1x32x64xbf16>
    %312 = vector.shape_cast %311 : vector<1x32x64xbf16> to vector<32x64xbf16>
    %cst_80 = arith.constant dense<0.000000e+00> : vector<16x64xf32>
    %313 = tpu.matmul %310, %312, %cst_80 {dimension_numbers = #tpu.dot_dimension_numbers<[1], [0], [0], [1], [0, 0, 1, 1], [], []>} : vector<16x32xbf16>, vector<32x64xbf16>, vector<16x64xf32> -> vector<16x64xf32>
    %c1_81 = arith.constant 1 : index
    %c0_82 = arith.constant 0 : index
    %314 = vector.load %arg10[%c1_81, %c0_82] : memref<2x64xf32, #tpu.memory_space<vmem>>, vector<1x64xf32>
    %315 = vector.broadcast %314 : vector<1x64xf32> to vector<16x64xf32>
    %316 = arith.addf %313, %315 : vector<16x64xf32>
    %cst_83 = arith.constant 5.000000e-01 : f32
    %317 = vector.broadcast %cst_83 : f32 to vector<16x64xf32>
    %318 = arith.mulf %317, %316 : vector<16x64xf32>
    %cst_84 = arith.constant 4.471500e-02 : f32
    %319 = vector.broadcast %cst_84 : f32 to vector<16x64xf32>
    %320 = arith.mulf %319, %316 : vector<16x64xf32>
    %321 = arith.mulf %320, %316 : vector<16x64xf32>
    %322 = arith.mulf %321, %316 : vector<16x64xf32>
    %323 = arith.addf %316, %322 : vector<16x64xf32>
    %cst_85 = arith.constant 0.797884583 : f32
    %324 = vector.broadcast %cst_85 : f32 to vector<16x64xf32>
    %325 = arith.mulf %324, %323 : vector<16x64xf32>
    %326 = math.tanh %325 : vector<16x64xf32>
    %cst_86 = arith.constant 1.000000e+00 : f32
    %327 = vector.broadcast %cst_86 : f32 to vector<16x64xf32>
    %328 = arith.addf %327, %326 : vector<16x64xf32>
    %329 = arith.mulf %318, %328 : vector<16x64xf32>
    %330 = arith.truncf %329 : vector<16x64xf32> to vector<16x64xbf16>
    %c1_87 = arith.constant 1 : index
    %c0_88 = arith.constant 0 : index
    %c0_89 = arith.constant 0 : index
    %331 = vector.load %arg11[%c1_87, %c0_88, %c0_89] : memref<2x64x32xbf16, #tpu.memory_space<vmem>>, vector<1x64x32xbf16>
    %332 = vector.shape_cast %331 : vector<1x64x32xbf16> to vector<64x32xbf16>
    %cst_90 = arith.constant dense<0.000000e+00> : vector<16x32xf32>
    %333 = tpu.matmul %330, %332, %cst_90 {dimension_numbers = #tpu.dot_dimension_numbers<[1], [0], [0], [1], [0, 0, 1, 1], [], []>} : vector<16x64xbf16>, vector<64x32xbf16>, vector<16x32xf32> -> vector<16x32xf32>
    %c1_91 = arith.constant 1 : index
    %c0_92 = arith.constant 0 : index
    %334 = vector.load %arg12[%c1_91, %c0_92] : memref<2x32xf32, #tpu.memory_space<vmem>>, vector<1x32xf32>
    %335 = vector.broadcast %334 : vector<1x32xf32> to vector<16x32xf32>
    %336 = arith.addf %333, %335 : vector<16x32xf32>
    %337 = arith.addf %336, %285 : vector<16x32xf32>
    %c0_93 = arith.constant 0 : index
    %c0_94 = arith.constant 0 : index
    %338 = vector.load %arg15[%c0_93, %c0_94] : memref<1x32xf32, #tpu.memory_space<vmem>>, vector<1x32xf32>
    %c0_95 = arith.constant 0 : index
    %c0_96 = arith.constant 0 : index
    %339 = vector.load %arg16[%c0_95, %c0_96] : memref<1x32xf32, #tpu.memory_space<vmem>>, vector<1x32xf32>
    %cst_97 = arith.constant dense<0.000000e+00> : vector<16xf32>
    %340 = vector.multi_reduction <add>, %337, %cst_97 [1] : vector<16x32xf32> to vector<16xf32>
    %341 = vector.shape_cast %340 : vector<16xf32> to vector<16x1xf32>
    %cst_98 = arith.constant 3.200000e+01 : f32
    %342 = vector.broadcast %cst_98 : f32 to vector<16x1xf32>
    %343 = arith.divf %341, %342 : vector<16x1xf32>
    %344 = arith.mulf %337, %337 : vector<16x32xf32>
    %cst_99 = arith.constant dense<0.000000e+00> : vector<16xf32>
    %345 = vector.multi_reduction <add>, %344, %cst_99 [1] : vector<16x32xf32> to vector<16xf32>
    %346 = vector.shape_cast %345 : vector<16xf32> to vector<16x1xf32>
    %cst_100 = arith.constant 3.200000e+01 : f32
    %347 = vector.broadcast %cst_100 : f32 to vector<16x1xf32>
    %348 = arith.divf %346, %347 : vector<16x1xf32>
    %349 = arith.mulf %343, %343 : vector<16x1xf32>
    %350 = arith.subf %348, %349 : vector<16x1xf32>
    %351 = vector.broadcast %343 : vector<16x1xf32> to vector<16x32xf32>
    %352 = arith.subf %337, %351 : vector<16x32xf32>
    %cst_101 = arith.constant 9.99999997E-7 : f32
    %353 = vector.broadcast %cst_101 : f32 to vector<16x1xf32>
    %354 = arith.addf %350, %353 : vector<16x1xf32>
    %355 = math.rsqrt %354 : vector<16x1xf32>
    %356 = vector.broadcast %355 : vector<16x1xf32> to vector<16x32xf32>
    %357 = arith.mulf %352, %356 : vector<16x32xf32>
    %358 = vector.broadcast %338 : vector<1x32xf32> to vector<16x32xf32>
    %359 = arith.mulf %357, %358 : vector<16x32xf32>
    %360 = vector.broadcast %339 : vector<1x32xf32> to vector<16x32xf32>
    %361 = arith.addf %359, %360 : vector<16x32xf32>
    %c0_102 = arith.constant 0 : index
    %c0_103 = arith.constant 0 : index
    %362 = vector.load %arg17[%c0_102, %c0_103] : memref<16x32xf32, #tpu.memory_space<vmem>>, vector<16x32xf32>
    tpu.vector_store %arg17[%c0_102, %c0_103], %361 {strides = array<i32>} : memref<16x32xf32, #tpu.memory_space<vmem>>, vector<16x32xf32>,
    return
  }
  func.func @transform_0(%arg0: i32) -> (i32, i32) {
    %c0_i32 = arith.constant 0 : i32
    %c0_i32_0 = arith.constant 0 : i32
    %c0_i32_1 = arith.constant 0 : i32
    return %c0_i32, %c0_i32_0 : i32, i32
  }
  func.func @transform_1(%arg0: i32) -> (i32, i32, i32) {
    %c0_i32 = arith.constant 0 : i32
    %c0_i32_0 = arith.constant 0 : i32
    %c0_i32_1 = arith.constant 0 : i32
    %c0_i32_2 = arith.constant 0 : i32
    return %c0_i32, %c0_i32_0, %c0_i32_1 : i32, i32, i32
  }
  func.func @transform_2(%arg0: i32) -> (i32, i32, i32) {
    %c0_i32 = arith.constant 0 : i32
    %c0_i32_0 = arith.constant 0 : i32
    %c0_i32_1 = arith.constant 0 : i32
    %c0_i32_2 = arith.constant 0 : i32
    return %c0_i32, %c0_i32_0, %c0_i32_1 : i32, i32, i32
  }
  func.func @transform_3(%arg0: i32) -> (i32, i32) {
    %c0_i32 = arith.constant 0 : i32
    %c0_i32_0 = arith.constant 0 : i32
    %c0_i32_1 = arith.constant 0 : i32
    return %c0_i32, %c0_i32_0 : i32, i32
  }
  func.func @transform_4(%arg0: i32) -> (i32, i32, i32) {
    %c0_i32 = arith.constant 0 : i32
    %c0_i32_0 = arith.constant 0 : i32
    %c0_i32_1 = arith.constant 0 : i32
    %c0_i32_2 = arith.constant 0 : i32
    return %c0_i32, %c0_i32_0, %c0_i32_1 : i32, i32, i32
  }
  func.func @transform_5(%arg0: i32) -> (i32, i32) {
    %c0_i32 = arith.constant 0 : i32
    %c0_i32_0 = arith.constant 0 : i32
    %c0_i32_1 = arith.constant 0 : i32
    return %c0_i32, %c0_i32_0 : i32, i32
  }
  func.func @transform_6(%arg0: i32) -> (i32, i32) {
    %c0_i32 = arith.constant 0 : i32
    %c0_i32_0 = arith.constant 0 : i32
    %c0_i32_1 = arith.constant 0 : i32
    return %c0_i32, %c0_i32_0 : i32, i32
  }
  func.func @transform_7(%arg0: i32) -> (i32, i32) {
    %c0_i32 = arith.constant 0 : i32
    %c0_i32_0 = arith.constant 0 : i32
    %c0_i32_1 = arith.constant 0 : i32
    return %c0_i32, %c0_i32_0 : i32, i32
  }
  func.func @transform_8(%arg0: i32) -> (i32, i32, i32) {
    %c0_i32 = arith.constant 0 : i32
    %c0_i32_0 = arith.constant 0 : i32
    %c0_i32_1 = arith.constant 0 : i32
    %c0_i32_2 = arith.constant 0 : i32
    return %c0_i32, %c0_i32_0, %c0_i32_1 : i32, i32, i32
  }
  func.func @transform_9(%arg0: i32) -> (i32, i32) {
    %c0_i32 = arith.constant 0 : i32
    %c0_i32_0 = arith.constant 0 : i32
    %c0_i32_1 = arith.constant 0 : i32
    return %c0_i32, %c0_i32_0 : i32, i32
  }
  func.func @transform_10(%arg0: i32) -> (i32, i32, i32) {
    %c0_i32 = arith.constant 0 : i32
    %c0_i32_0 = arith.constant 0 : i32
    %c0_i32_1 = arith.constant 0 : i32
    %c0_i32_2 = arith.constant 0 : i32
    return %c0_i32, %c0_i32_0, %c0_i32_1 : i32, i32, i32
  }
  func.func @transform_11(%arg0: i32) -> (i32, i32) {
    %c0_i32 = arith.constant 0 : i32
    %c0_i32_0 = arith.constant 0 : i32
    %c0_i32_1 = arith.constant 0 : i32
    return %c0_i32, %c0_i32_0 : i32, i32
  }
  func.func @transform_12(%arg0: i32) -> (i32, i32) {
    %c0_i32 = arith.constant 0 : i32
    %c0_i32_0 = arith.constant 0 : i32
    %c0_i32_1 = arith.constant 0 : i32
    return %c0_i32, %c0_i32_0 : i32, i32
  }
  func.func @transform_13(%arg0: i32) -> (i32, i32) {
    %c0_i32 = arith.constant 0 : i32
    %c0_i32_0 = arith.constant 0 : i32
    %c0_i32_1 = arith.constant 0 : i32
    return %c0_i32, %c0_i32_0 : i32, i32
  }
  func.func @transform_14(%arg0: i32) -> (i32, i32) {
    %c0_i32 = arith.constant 0 : i32
    %c0_i32_0 = arith.constant 0 : i32
    %c0_i32_1 = arith.constant 0 : i32
    return %c0_i32, %c0_i32_0 : i32, i32
  }
  func.func @transform_15(%arg0: i32) -> (i32, i32) {
    %c0_i32 = arith.constant 0 : i32
    %c0_i32_0 = arith.constant 0 : i32
    %c0_i32_1 = arith.constant 0 : i32
    return %c0_i32, %c0_i32_0 : i32, i32
  }
  func.func @transform_16(%arg0: i32) -> (i32, i32) {
    %c0_i32 = arith.constant 0 : i32
    %c0_i32_0 = arith.constant 0 : i32
    %c0_i32_1 = arith.constant 0 : i32
    return %c0_i32, %c0_i32_0 : i32, i32
  }
}

</mosaic_0001>

<llo_original>
// kernel: tpu_custom_call.1
$region0: #{tpu_custom_call.1}
  #allocation0 [shape = 'u32[]', space=smem, size = 0x4, offset = 0x4, fixed_abs, tag = 'smem constant byte address 0x4 - core index']
  #allocation1 [shape = 'u32[144,128]{1,0:T(1,128)}', space=vmem, size = 0x12000, scoped, tag = 'internal scratch']
  %s0 = inlined_call_operand.hbm [shape: f32[16,32], index: 0, kind: input, shape index: {}]
  %s1 = inlined_call_operand.vmem [shape: f32[8,8,8], index: 1, kind: input, shape index: {}]
  %s2 = inlined_call_operand.vmem [shape: bf16[2,32,96], index: 2, kind: input, shape index: {}]
  %s3 = inlined_call_operand.vmem [shape: f32[2,96], index: 3, kind: input, shape index: {}]
  %s4 = inlined_call_operand.hbm [shape: bf16[2,32,32], index: 4, kind: input, shape index: {}]
  %s5 = inlined_call_operand.vmem [shape: f32[2,32], index: 5, kind: input, shape index: {}]
  %s6 = inlined_call_operand.vmem [shape: f32[2,32], index: 6, kind: input, shape index: {}]
  %s7 = inlined_call_operand.vmem [shape: f32[2,32], index: 7, kind: input, shape index: {}]
  %s8 = inlined_call_operand.hbm [shape: bf16[2,32,64], index: 8, kind: input, shape index: {}]
  %s9 = inlined_call_operand.vmem [shape: f32[2,64], index: 9, kind: input, shape index: {}]
  %s10 = inlined_call_operand.vmem [shape: bf16[2,64,32], index: 10, kind: input, shape index: {}]
  %s11 = inlined_call_operand.vmem [shape: f32[2,32], index: 11, kind: input, shape index: {}]
  %s12 = inlined_call_operand.vmem [shape: f32[2,32], index: 12, kind: input, shape index: {}]
  %s13 = inlined_call_operand.vmem [shape: f32[2,32], index: 13, kind: input, shape index: {}]
  %s14 = inlined_call_operand.vmem [shape: f32[1,32], index: 14, kind: input, shape index: {}]
  %s15 = inlined_call_operand.vmem [shape: f32[1,32], index: 15, kind: input, shape index: {}]
  %s16 = inlined_call_operand.hbm [shape: f32[16,32], index: 16, kind: output, shape index: {}]
  %s17 = sld [smem:[#allocation0]]
  $region86: #{tpu_custom_call.1} parent=0
    _
  %s19 = ssub.s32 1, %s17
  %s20 = scalar_select 0, %s19, %s17
  $region1: #{tpu_custom_call.1} parent=0
    #allocation2 [shape = 'u8[8192]{0}', space=vmem, size = 0x2000, scoped, tag = 'input window, operand 0, single buffered']
    #allocation3 [shape = 's32[1]{0}', space=sflag, size = 0x4, scoped, tag = 'scoped memory for tpu_custom_call.1']
    #allocation4 [shape = 's32[1]{0}', space=sflag, size = 0x4, scoped, tag = 'scoped memory for tpu_custom_call.1']
    #allocation5 [shape = 'u8[16384]{0}', space=vmem, size = 0x4000, scoped, tag = 'input window, operand 4, single buffered']
    #allocation6 [shape = 's32[1]{0}', space=sflag, size = 0x4, scoped, tag = 'scoped memory for tpu_custom_call.1']
    #allocation7 [shape = 'u8[16384]{0}', space=vmem, size = 0x4000, scoped, tag = 'input window, operand 8, single buffered']
    #allocation8 [shape = 'u8[8192]{0}', space=vmem, size = 0x2000, scoped, tag = 'output window, operand 0, single buffered']
    %21 = vsyncpa [#allocation3], 0
    %22 = vsyncpa [#allocation6], 0
    %23 = vsyncpa [#allocation4], 0
    // Predicated region
    $region2: #{tpu_custom_call.1} parent=1 // pred_check
      _
    $region3: #{tpu_custom_call.1} parent=1 // pred_check_branch
      %25 = sbr.rel (0) target = $region5
    $region4: #{tpu_custom_call.1} parent=1 // pred_region
      %s27 = ssub.s32 256, 256
      %28 = vsyncadd [#allocation3], %s27
      %s29 = sshll.u32 [#allocation2], 4
      %s30 = int_to_ptr.vmem [resolvable:$true] %s29
      %35 = dma.hbm_to_vmem [thread:$0]  %s0, 256, %s30, [#allocation3], 128, 128, 8
    $region5: #{tpu_custom_call.1} parent=1 // pred_fallthru
      _
    // Predicated region
    $region6: #{tpu_custom_call.1} parent=1 // pred_check
      _
    $region7: #{tpu_custom_call.1} parent=1 // pred_check_branch
      %37 = sbr.rel (0) target = $region9
    $region8: #{tpu_custom_call.1} parent=1 // pred_region
      _
    $region9: #{tpu_custom_call.1} parent=1 // pred_fallthru
      _
    // Predicated region
    $region10: #{tpu_custom_call.1} parent=1 // pred_check
      _
    $region11: #{tpu_custom_call.1} parent=1 // pred_check_branch
      %39 = sbr.rel (0) target = $region13
    $region12: #{tpu_custom_call.1} parent=1 // pred_region
      _
    $region13: #{tpu_custom_call.1} parent=1 // pred_fallthru
      _
    // Predicated region
    $region14: #{tpu_custom_call.1} parent=1 // pred_check
      _
    $region15: #{tpu_custom_call.1} parent=1 // pred_check_branch
      %41 = sbr.rel (0) target = $region17
    $region16: #{tpu_custom_call.1} parent=1 // pred_region
      _
    $region17: #{tpu_custom_call.1} parent=1 // pred_fallthru
      _
    // Predicated region
    $region18: #{tpu_custom_call.1} parent=1 // pred_check
      _
    $region19: #{tpu_custom_call.1} parent=1 // pred_check_branch
      %43 = sbr.rel (0) target = $region21
    $region20: #{tpu_custom_call.1} parent=1 // pred_region
      %s45 = ssub.s32 512, 512
      %46 = vsyncadd [#allocation6], %s45
      %s47 = sshll.u32 [#allocation5], 4
      %s48 = int_to_ptr.vmem [resolvable:$true] %s47
      %53 = dma.hbm_to_vmem [thread:$0]  %s4, 512, %s48, [#allocation6], 64, 64, 4
    $region21: #{tpu_custom_call.1} parent=1 // pred_fallthru
      _
    // Predicated region
    $region22: #{tpu_custom_call.1} parent=1 // pred_check
      _
    $region23: #{tpu_custom_call.1} parent=1 // pred_check_branch
      %55 = sbr.rel (0) target = $region25
    $region24: #{tpu_custom_call.1} parent=1 // pred_region
      _
    $region25: #{tpu_custom_call.1} parent=1 // pred_fallthru
      _
    // Predicated region
    $region26: #{tpu_custom_call.1} parent=1 // pred_check
      _
    $region27: #{tpu_custom_call.1} parent=1 // pred_check_branch
      %57 = sbr.rel (0) target = $region29
    $region28: #{tpu_custom_call.1} parent=1 // pred_region
      _
    $region29: #{tpu_custom_call.1} parent=1 // pred_fallthru
      _
    // Predicated region
    $region30: #{tpu_custom_call.1} parent=1 // pred_check
      _
    $region31: #{tpu_custom_call.1} parent=1 // pred_check_branch
      %59 = sbr.rel (0) target = $region33
    $region32: #{tpu_custom_call.1} parent=1 // pred_region
      _
    $region33: #{tpu_custom_call.1} parent=1 // pred_fallthru
      _
    // Predicated region
    $region34: #{tpu_custom_call.1} parent=1 // pred_check
      _
    $region35: #{tpu_custom_call.1} parent=1 // pred_check_branch
      %61 = sbr.rel (0) target = $region37
    $region36: #{tpu_custom_call.1} parent=1 // pred_region
      %s63 = ssub.s32 512, 512
      %64 = vsyncadd [#allocation6], %s63
      %s65 = sshll.u32 [#allocation7], 4
      %s66 = int_to_ptr.vmem [resolvable:$true] %s65
      %71 = dma.hbm_to_vmem [thread:$0]  %s8, 512, %s66, [#allocation6], 64, 64, 4
    $region37: #{tpu_custom_call.1} parent=1 // pred_fallthru
      _
    // Predicated region
    $region38: #{tpu_custom_call.1} parent=1 // pred_check
      _
    $region39: #{tpu_custom_call.1} parent=1 // pred_check_branch
      %73 = sbr.rel (0) target = $region41
    $region40: #{tpu_custom_call.1} parent=1 // pred_region
      _
    $region41: #{tpu_custom_call.1} parent=1 // pred_fallthru
      _
    // Predicated region
    $region42: #{tpu_custom_call.1} parent=1 // pred_check
      _
    $region43: #{tpu_custom_call.1} parent=1 // pred_check_branch
      %75 = sbr.rel (0) target = $region45
    $region44: #{tpu_custom_call.1} parent=1 // pred_region
      _
    $region45: #{tpu_custom_call.1} parent=1 // pred_fallthru
      _
    // Predicated region
    $region46: #{tpu_custom_call.1} parent=1 // pred_check
      _
    $region47: #{tpu_custom_call.1} parent=1 // pred_check_branch
      %77 = sbr.rel (0) target = $region49
    $region48: #{tpu_custom_call.1} parent=1 // pred_region
      _
    $region49: #{tpu_custom_call.1} parent=1 // pred_fallthru
      _
    // Predicated region
    $region50: #{tpu_custom_call.1} parent=1 // pred_check
      _
    $region51: #{tpu_custom_call.1} parent=1 // pred_check_branch
      %79 = sbr.rel (0) target = $region53
    $region52: #{tpu_custom_call.1} parent=1 // pred_region
      _
    $region53: #{tpu_custom_call.1} parent=1 // pred_fallthru
      _
    // Predicated region
    $region54: #{tpu_custom_call.1} parent=1 // pred_check
      _
    $region55: #{tpu_custom_call.1} parent=1 // pred_check_branch
      %81 = sbr.rel (0) target = $region57
    $region56: #{tpu_custom_call.1} parent=1 // pred_region
      _
    $region57: #{tpu_custom_call.1} parent=1 // pred_fallthru
      _
    // Predicated region
    $region58: #{tpu_custom_call.1} parent=1 // pred_check
      _
    $region59: #{tpu_custom_call.1} parent=1 // pred_check_branch
      %83 = sbr.rel (0) target = $region61
    $region60: #{tpu_custom_call.1} parent=1 // pred_region
      _
    $region61: #{tpu_custom_call.1} parent=1 // pred_fallthru
      _
    // Predicated region
    $region62: #{tpu_custom_call.1} parent=1 // pred_check
      _
    $region63: #{tpu_custom_call.1} parent=1 // pred_check_branch
      %85 = sbr.rel (0) target = $region65
    $region64: #{tpu_custom_call.1} parent=1 // pred_region
      _
    $region65: #{tpu_custom_call.1} parent=1 // pred_fallthru
      _
    // Predicated region
    $region66: #{tpu_custom_call.1} parent=1 // pred_check
      _
    $region67: #{tpu_custom_call.1} parent=1 // pred_check_branch
      %87 = sbr.rel (0) target = $region69
    $region68: #{tpu_custom_call.1} parent=1 // pred_region
      %88 = dma.done [#allocation3], 256
    $region69: #{tpu_custom_call.1} parent=1 // pred_fallthru
      _
    // Predicated region
    $region70: #{tpu_custom_call.1} parent=1 // pred_check
      _
    $region71: #{tpu_custom_call.1} parent=1 // pred_check_branch
      %90 = sbr.rel (0) target = $region73
    $region72: #{tpu_custom_call.1} parent=1 // pred_region
      %91 = dma.done [#allocation6], 512
    $region73: #{tpu_custom_call.1} parent=1 // pred_fallthru
      _
    // Predicated region
    $region74: #{tpu_custom_call.1} parent=1 // pred_check
      _
    $region75: #{tpu_custom_call.1} parent=1 // pred_check_branch
      %93 = sbr.rel (0) target = $region77
    $region76: #{tpu_custom_call.1} parent=1 // pred_region
      %94 = dma.done [#allocation6], 512
    $region77: #{tpu_custom_call.1} parent=1 // pred_fallthru
      _
    %v96 = vld [vmem:[#allocation2] sm:$0xff]
    %v97 = vld [vmem:[#allocation2 + $0x8] sm:$0xff]
    %v98 = vld [vmem:[%s1] sm:$0xff]
    %v99 = vld [vmem:[%s1 + $0x8] sm:$0xff]
    %v100 = vld [vmem:[%s1 + $0x10] sm:$0xff]
    %v101 = vld [vmem:[%s1 + $0x18] sm:$0xff]
    %v102 = vld [vmem:[%s1 + $0x20] sm:$0xff]
    %v103 = vld [vmem:[%s1 + $0x28] sm:$0xff]
    %v104 = vld [vmem:[%s1 + $0x30] sm:$0xff]
    %v105 = vld [vmem:[%s1 + $0x38] sm:$0xff]
    %v106 = vpack.c.bf16 %v97, %v96
    %v107 = vld [vmem:[%s2] sm:$0xf]
    %v108 = vld [vmem:[%s2 + $0x4] sm:$0xf]
    %v109 = vld [vmem:[%s2 + $0x8] sm:$0xf]
    %v110 = vld [vmem:[%s2 + $0xc] sm:$0xf]
    %v111 = vld [vmem:[%s3] sm:$0x1]
    %v112 = vlaneseq
    %v113 = vshrl.u32 %v112, 7
    %v114 = vsub.s32 0, %v113
    %v115 = vrot.slane %v111, %v114
    %v120 = vunpack.c.l.b16 %v107
    %v121 = vunpack.c.l.b16 %v108
    %v122 = vunpack.c.l.b16 %v109
    %v123 = vunpack.c.l.b16 %v110
    %v124 = vpack.c.b16 %v121, %v120
    %v125 = vpack.c.b16 %v123, %v122
    %vm128 = vcmask 261120
    %v130 = vsel %vm128, %v106, 0
    %132 = vmatprep.subr.bf16.mxu0 0
    %133 = vmatpush1.bf16.msra.mxu0 0
    %134 = vmatprep.subr.bf16.mxu0 0
    %135 = vmatpush1.bf16.msra.mxu0 0
    %136 = vmatprep.subr.bf16.mxu0 0
    %137 = vmatpush1.bf16.msra.mxu0 0
    %138 = vmatprep.subr.bf16.mxu0 0
    %139 = vmatpush1.bf16.msra.mxu0 0
    %140 = vmatprep.subr.bf16.mxu0 0
    %141 = vmatpush1.bf16.msra.mxu0 0
    %142 = vmatprep.subr.bf16.mxu0 0
    %143 = vmatpush1.bf16.msra.mxu0 0
    %144 = vmatprep.subr.bf16.mxu0 0
    %145 = vmatpush1.bf16.msra.mxu0 %v125
    %146 = vmatprep.subr.bf16.mxu0 0
    %147 = vmatpush1.bf16.msra.mxu0 %v124
    %148 = vmatprep.subr.bf16.mxu0 0
    %149 = vmatpush2.bf16.msra.mxu0 0
    %150 = vmatprep.subr.bf16.mxu0 0
    %151 = vmatpush2.bf16.msra.mxu0 0
    %152 = vmatprep.subr.bf16.mxu0 0
    %153 = vmatpush2.bf16.msra.mxu0 0
    %154 = vmatprep.subr.bf16.mxu0 0
    %155 = vmatpush2.bf16.msra.mxu0 0
    %156 = vmatprep.subr.bf16.mxu0 0
    %157 = vmatpush2.bf16.msra.mxu0 0
    %158 = vmatprep.subr.bf16.mxu0 0
    %159 = vmatpush2.bf16.msra.mxu0 0
    %160 = vmatprep.subr.bf16.mxu0 0
    %161 = vmatpush2.bf16.msra.mxu0 0
    %162 = vmatprep.subr.bf16.mxu0 0
    %163 = vmatpush2.bf16.msra.mxu0 0
    %164 = vmatprep.mubr.bf16.mxu0 0
    %165 = vmatmul.mubr.bf16.gmra.mxu0 %v130
    %v166 = vpop.f32.mrf.mxu0
    %v167 = vadd.f32 %v115, %v166
    %v168 = vpop.f32.mrf.mxu0
    %v169 = vpop.f32.mrf.mxu0
    %v170 = vadd.f32 %v115, %v169
    %v171 = vpop.f32.mrf.mxu0
    %172 = vdwg.mxu0
    %174 = vrot.lane.b32.xlu0 %v167, 120
    %v175 = vpop.permute.xlu0 %174
    %177 = vrot.lane.b32.xlu0 %v167, 112
    %v178 = vpop.permute.xlu0 %177
    %180 = vrot.lane.b32.xlu0 %v167, 104
    %v181 = vpop.permute.xlu0 %180
    %184 = vrot.lane.b32.xlu0 %v170, 120
    %v185 = vpop.permute.xlu0 %184
    %187 = vrot.lane.b32.xlu0 %v170, 112
    %v188 = vpop.permute.xlu0 %187
    %190 = vrot.lane.b32.xlu0 %v170, 104
    %v191 = vpop.permute.xlu0 %190
    %v193 = vpack.c.bf16 %v167, %v167
    %v194 = vpack.c.bf16 %v175, %v175
    %v195 = vpack.c.bf16 %v178, %v178
    %v196 = vpack.c.bf16 %v181, %v181
    %v197 = vpack.c.bf16 %v170, %v170
    %v198 = vpack.c.bf16 %v185, %v185
    %v199 = vpack.c.bf16 %v188, %v188
    %v200 = vpack.c.bf16 %v191, %v191
    %202 = vrot.lane.b32.xlu0 %v193, 96
    %v203 = vpop.permute.xlu0 %202
    %vm204 = vcmask 64512
    %v206 = vsel %vm204, %v193, 0
    %v209 = vsel %vm204, %v203, 0
    %211 = vmatprep.subr.bf16.mxu0 0
    %212 = vmatpush1.bf16.xpose.msra.mxu0 0
    %213 = vmatprep.subr.bf16.mxu0 0
    %214 = vmatpush1.bf16.xpose.msra.mxu0 0
    %215 = vmatprep.subr.bf16.mxu0 0
    %216 = vmatpush1.bf16.xpose.msra.mxu0 0
    %217 = vmatprep.subr.bf16.mxu0 0
    %218 = vmatpush1.bf16.xpose.msra.mxu0 0
    %219 = vmatprep.subr.bf16.mxu0 0
    %220 = vmatpush1.bf16.xpose.msra.mxu0 0
    %221 = vmatprep.subr.bf16.mxu0 0
    %222 = vmatpush1.bf16.xpose.msra.mxu0 0
    %223 = vmatprep.subr.bf16.mxu0 0
    %224 = vmatpush1.bf16.xpose.msra.mxu0 0
    %225 = vmatprep.subr.bf16.mxu0 0
    %226 = vmatpush1.bf16.xpose.msra.mxu0 %v209
    %227 = vmatprep.subr.bf16.mxu0 0
    %228 = vmatpush2.bf16.xpose.msra.mxu0 0
    %229 = vmatprep.subr.bf16.mxu0 0
    %230 = vmatpush2.bf16.xpose.msra.mxu0 0
    %231 = vmatprep.subr.bf16.mxu0 0
    %232 = vmatpush2.bf16.xpose.msra.mxu0 0
    %233 = vmatprep.subr.bf16.mxu0 0
    %234 = vmatpush2.bf16.xpose.msra.mxu0 0
    %235 = vmatprep.subr.bf16.mxu0 0
    %236 = vmatpush2.bf16.xpose.msra.mxu0 0
    %237 = vmatprep.subr.bf16.mxu0 0
    %238 = vmatpush2.bf16.xpose.msra.mxu0 0
    %239 = vmatprep.subr.bf16.mxu0 0
    %240 = vmatpush2.bf16.xpose.msra.mxu0 0
    %241 = vmatprep.subr.bf16.mxu0 0
    %242 = vmatpush2.bf16.xpose.msra.mxu0 0
    %243 = vmatprep.mubr.bf16.mxu0 0
    %244 = vmatmul.mubr.bf16.gmra.mxu0 %v206
    %v245 = vpop.f32.mrf.mxu0
    %v246 = vadd.f32 %v98, %v245
    %v247 = vpop.f32.mrf.mxu0
    %v248 = vpop.f32.mrf.mxu0
    %v249 = vpop.f32.mrf.mxu0
    %250 = vdwg.mxu0
    %252 = vrot.lane.b32.xlu0 %v194, 96
    %v253 = vpop.permute.xlu0 %252
    %v255 = vsel %vm204, %v194, 0
    %v258 = vsel %vm204, %v253, 0
    %260 = vmatprep.subr.bf16.mxu0 0
    %261 = vmatpush1.bf16.xpose.msra.mxu0 0
    %262 = vmatprep.subr.bf16.mxu0 0
    %263 = vmatpush1.bf16.xpose.msra.mxu0 0
    %264 = vmatprep.subr.bf16.mxu0 0
    %265 = vmatpush1.bf16.xpose.msra.mxu0 0
    %266 = vmatprep.subr.bf16.mxu0 0
    %267 = vmatpush1.bf16.xpose.msra.mxu0 0
    %268 = vmatprep.subr.bf16.mxu0 0
    %269 = vmatpush1.bf16.xpose.msra.mxu0 0
    %270 = vmatprep.subr.bf16.mxu0 0
    %271 = vmatpush1.bf16.xpose.msra.mxu0 0
    %272 = vmatprep.subr.bf16.mxu0 0
    %273 = vmatpush1.bf16.xpose.msra.mxu0 0
    %274 = vmatprep.subr.bf16.mxu0 0
    %275 = vmatpush1.bf16.xpose.msra.mxu0 %v258
    %276 = vmatprep.subr.bf16.mxu0 0
    %277 = vmatpush2.bf16.xpose.msra.mxu0 0
    %278 = vmatprep.subr.bf16.mxu0 0
    %279 = vmatpush2.bf16.xpose.msra.mxu0 0
    %280 = vmatprep.subr.bf16.mxu0 0
    %281 = vmatpush2.bf16.xpose.msra.mxu0 0
    %282 = vmatprep.subr.bf16.mxu0 0
    %283 = vmatpush2.bf16.xpose.msra.mxu0 0
    %284 = vmatprep.subr.bf16.mxu0 0
    %285 = vmatpush2.bf16.xpose.msra.mxu0 0
    %286 = vmatprep.subr.bf16.mxu0 0
    %287 = vmatpush2.bf16.xpose.msra.mxu0 0
    %288 = vmatprep.subr.bf16.mxu0 0
    %289 = vmatpush2.bf16.xpose.msra.mxu0 0
    %290 = vmatprep.subr.bf16.mxu0 0
    %291 = vmatpush2.bf16.xpose.msra.mxu0 0
    %292 = vmatprep.mubr.bf16.mxu0 0
    %293 = vmatmul.mubr.bf16.gmra.mxu0 %v255
    %v294 = vpop.f32.mrf.mxu0
    %v295 = vadd.f32 %v99, %v294
    %v296 = vpop.f32.mrf.mxu0
    %v297 = vpop.f32.mrf.mxu0
    %v298 = vpop.f32.mrf.mxu0
    %299 = vdwg.mxu0
    %301 = vrot.lane.b32.xlu0 %v195, 96
    %v302 = vpop.permute.xlu0 %301
    %v304 = vsel %vm204, %v195, 0
    %v307 = vsel %vm204, %v302, 0
    %309 = vmatprep.subr.bf16.mxu0 0
    %310 = vmatpush1.bf16.xpose.msra.mxu0 0
    %311 = vmatprep.subr.bf16.mxu0 0
    %312 = vmatpush1.bf16.xpose.msra.mxu0 0
    %313 = vmatprep.subr.bf16.mxu0 0
    %314 = vmatpush1.bf16.xpose.msra.mxu0 0
    %315 = vmatprep.subr.bf16.mxu0 0
    %316 = vmatpush1.bf16.xpose.msra.mxu0 0
    %317 = vmatprep.subr.bf16.mxu0 0
    %318 = vmatpush1.bf16.xpose.msra.mxu0 0
    %319 = vmatprep.subr.bf16.mxu0 0
    %320 = vmatpush1.bf16.xpose.msra.mxu0 0
    %321 = vmatprep.subr.bf16.mxu0 0
    %322 = vmatpush1.bf16.xpose.msra.mxu0 0
    %323 = vmatprep.subr.bf16.mxu0 0
    %324 = vmatpush1.bf16.xpose.msra.mxu0 %v307
    %325 = vmatprep.subr.bf16.mxu0 0
    %326 = vmatpush2.bf16.xpose.msra.mxu0 0
    %327 = vmatprep.subr.bf16.mxu0 0
    %328 = vmatpush2.bf16.xpose.msra.mxu0 0
    %329 = vmatprep.subr.bf16.mxu0 0
    %330 = vmatpush2.bf16.xpose.msra.mxu0 0
    %331 = vmatprep.subr.bf16.mxu0 0
    %332 = vmatpush2.bf16.xpose.msra.mxu0 0
    %333 = vmatprep.subr.bf16.mxu0 0
    %334 = vmatpush2.bf16.xpose.msra.mxu0 0
    %335 = vmatprep.subr.bf16.mxu0 0
    %336 = vmatpush2.bf16.xpose.msra.mxu0 0
    %337 = vmatprep.subr.bf16.mxu0 0
    %338 = vmatpush2.bf16.xpose.msra.mxu0 0
    %339 = vmatprep.subr.bf16.mxu0 0
    %340 = vmatpush2.bf16.xpose.msra.mxu0 0
    %341 = vmatprep.mubr.bf16.mxu0 0
    %342 = vmatmul.mubr.bf16.gmra.mxu0 %v304
    %v343 = vpop.f32.mrf.mxu0
    %v344 = vadd.f32 %v100, %v343
    %v345 = vpop.f32.mrf.mxu0
    %v346 = vpop.f32.mrf.mxu0
    %v347 = vpop.f32.mrf.mxu0
    %348 = vdwg.mxu0
    %350 = vrot.lane.b32.xlu0 %v196, 96
    %v351 = vpop.permute.xlu0 %350
    %v353 = vsel %vm204, %v196, 0
    %v356 = vsel %vm204, %v351, 0
    %358 = vmatprep.subr.bf16.mxu0 0
    %359 = vmatpush1.bf16.xpose.msra.mxu0 0
    %360 = vmatprep.subr.bf16.mxu0 0
    %361 = vmatpush1.bf16.xpose.msra.mxu0 0
    %362 = vmatprep.subr.bf16.mxu0 0
    %363 = vmatpush1.bf16.xpose.msra.mxu0 0
    %364 = vmatprep.subr.bf16.mxu0 0
    %365 = vmatpush1.bf16.xpose.msra.mxu0 0
    %366 = vmatprep.subr.bf16.mxu0 0
    %367 = vmatpush1.bf16.xpose.msra.mxu0 0
    %368 = vmatprep.subr.bf16.mxu0 0
    %369 = vmatpush1.bf16.xpose.msra.mxu0 0
    %370 = vmatprep.subr.bf16.mxu0 0
    %371 = vmatpush1.bf16.xpose.msra.mxu0 0
    %372 = vmatprep.subr.bf16.mxu0 0
    %373 = vmatpush1.bf16.xpose.msra.mxu0 %v356
    %374 = vmatprep.subr.bf16.mxu0 0
    %375 = vmatpush2.bf16.xpose.msra.mxu0 0
    %376 = vmatprep.subr.bf16.mxu0 0
    %377 = vmatpush2.bf16.xpose.msra.mxu0 0
    %378 = vmatprep.subr.bf16.mxu0 0
    %379 = vmatpush2.bf16.xpose.msra.mxu0 0
    %380 = vmatprep.subr.bf16.mxu0 0
    %381 = vmatpush2.bf16.xpose.msra.mxu0 0
    %382 = vmatprep.subr.bf16.mxu0 0
    %383 = vmatpush2.bf16.xpose.msra.mxu0 0
    %384 = vmatprep.subr.bf16.mxu0 0
    %385 = vmatpush2.bf16.xpose.msra.mxu0 0
    %386 = vmatprep.subr.bf16.mxu0 0
    %387 = vmatpush2.bf16.xpose.msra.mxu0 0
    %388 = vmatprep.subr.bf16.mxu0 0
    %389 = vmatpush2.bf16.xpose.msra.mxu0 0
    %390 = vmatprep.mubr.bf16.mxu0 0
    %391 = vmatmul.mubr.bf16.gmra.mxu0 %v353
    %v392 = vpop.f32.mrf.mxu0
    %v393 = vadd.f32 %v101, %v392
    %v394 = vpop.f32.mrf.mxu0
    %v395 = vpop.f32.mrf.mxu0
    %v396 = vpop.f32.mrf.mxu0
    %397 = vdwg.mxu0
    %399 = vrot.lane.b32.xlu0 %v197, 96
    %v400 = vpop.permute.xlu0 %399
    %v402 = vsel %vm204, %v197, 0
    %v405 = vsel %vm204, %v400, 0
    %407 = vmatprep.subr.bf16.mxu0 0
    %408 = vmatpush1.bf16.xpose.msra.mxu0 0
    %409 = vmatprep.subr.bf16.mxu0 0
    %410 = vmatpush1.bf16.xpose.msra.mxu0 0
    %411 = vmatprep.subr.bf16.mxu0 0
    %412 = vmatpush1.bf16.xpose.msra.mxu0 0
    %413 = vmatprep.subr.bf16.mxu0 0
    %414 = vmatpush1.bf16.xpose.msra.mxu0 0
    %415 = vmatprep.subr.bf16.mxu0 0
    %416 = vmatpush1.bf16.xpose.msra.mxu0 0
    %417 = vmatprep.subr.bf16.mxu0 0
    %418 = vmatpush1.bf16.xpose.msra.mxu0 0
    %419 = vmatprep.subr.bf16.mxu0 0
    %420 = vmatpush1.bf16.xpose.msra.mxu0 0
    %421 = vmatprep.subr.bf16.mxu0 0
    %422 = vmatpush1.bf16.xpose.msra.mxu0 %v405
    %423 = vmatprep.subr.bf16.mxu0 0
    %424 = vmatpush2.bf16.xpose.msra.mxu0 0
    %425 = vmatprep.subr.bf16.mxu0 0
    %426 = vmatpush2.bf16.xpose.msra.mxu0 0
    %427 = vmatprep.subr.bf16.mxu0 0
    %428 = vmatpush2.bf16.xpose.msra.mxu0 0
    %429 = vmatprep.subr.bf16.mxu0 0
    %430 = vmatpush2.bf16.xpose.msra.mxu0 0
    %431 = vmatprep.subr.bf16.mxu0 0
    %432 = vmatpush2.bf16.xpose.msra.mxu0 0
    %433 = vmatprep.subr.bf16.mxu0 0
    %434 = vmatpush2.bf16.xpose.msra.mxu0 0
    %435 = vmatprep.subr.bf16.mxu0 0
    %436 = vmatpush2.bf16.xpose.msra.mxu0 0
    %437 = vmatprep.subr.bf16.mxu0 0
    %438 = vmatpush2.bf16.xpose.msra.mxu0 0
    %439 = vmatprep.mubr.bf16.mxu0 0
    %440 = vmatmul.mubr.bf16.gmra.mxu0 %v402
    %v441 = vpop.f32.mrf.mxu0
    %v442 = vadd.f32 %v102, %v441
    %v443 = vpop.f32.mrf.mxu0
    %v444 = vpop.f32.mrf.mxu0
    %v445 = vpop.f32.mrf.mxu0
    %446 = vdwg.mxu0
    %448 = vrot.lane.b32.xlu0 %v198, 96
    %v449 = vpop.permute.xlu0 %448
    %v451 = vsel %vm204, %v198, 0
    %v454 = vsel %vm204, %v449, 0
    %456 = vmatprep.subr.bf16.mxu0 0
    %457 = vmatpush1.bf16.xpose.msra.mxu0 0
    %458 = vmatprep.subr.bf16.mxu0 0
    %459 = vmatpush1.bf16.xpose.msra.mxu0 0
    %460 = vmatprep.subr.bf16.mxu0 0
    %461 = vmatpush1.bf16.xpose.msra.mxu0 0
    %462 = vmatprep.subr.bf16.mxu0 0
    %463 = vmatpush1.bf16.xpose.msra.mxu0 0
    %464 = vmatprep.subr.bf16.mxu0 0
    %465 = vmatpush1.bf16.xpose.msra.mxu0 0
    %466 = vmatprep.subr.bf16.mxu0 0
    %467 = vmatpush1.bf16.xpose.msra.mxu0 0
    %468 = vmatprep.subr.bf16.mxu0 0
    %469 = vmatpush1.bf16.xpose.msra.mxu0 0
    %470 = vmatprep.subr.bf16.mxu0 0
    %471 = vmatpush1.bf16.xpose.msra.mxu0 %v454
    %472 = vmatprep.subr.bf16.mxu0 0
    %473 = vmatpush2.bf16.xpose.msra.mxu0 0
    %474 = vmatprep.subr.bf16.mxu0 0
    %475 = vmatpush2.bf16.xpose.msra.mxu0 0
    %476 = vmatprep.subr.bf16.mxu0 0
    %477 = vmatpush2.bf16.xpose.msra.mxu0 0
    %478 = vmatprep.subr.bf16.mxu0 0
    %479 = vmatpush2.bf16.xpose.msra.mxu0 0
    %480 = vmatprep.subr.bf16.mxu0 0
    %481 = vmatpush2.bf16.xpose.msra.mxu0 0
    %482 = vmatprep.subr.bf16.mxu0 0
    %483 = vmatpush2.bf16.xpose.msra.mxu0 0
    %484 = vmatprep.subr.bf16.mxu0 0
    %485 = vmatpush2.bf16.xpose.msra.mxu0 0
    %486 = vmatprep.subr.bf16.mxu0 0
    %487 = vmatpush2.bf16.xpose.msra.mxu0 0
    %488 = vmatprep.mubr.bf16.mxu0 0
    %489 = vmatmul.mubr.bf16.gmra.mxu0 %v451
    %v490 = vpop.f32.mrf.mxu0
    %v491 = vadd.f32 %v103, %v490
    %v492 = vpop.f32.mrf.mxu0
    %v493 = vpop.f32.mrf.mxu0
    %v494 = vpop.f32.mrf.mxu0
    %495 = vdwg.mxu0
    %497 = vrot.lane.b32.xlu0 %v199, 96
    %v498 = vpop.permute.xlu0 %497
    %v500 = vsel %vm204, %v199, 0
    %v503 = vsel %vm204, %v498, 0
    %505 = vmatprep.subr.bf16.mxu0 0
    %506 = vmatpush1.bf16.xpose.msra.mxu0 0
    %507 = vmatprep.subr.bf16.mxu0 0
    %508 = vmatpush1.bf16.xpose.msra.mxu0 0
    %509 = vmatprep.subr.bf16.mxu0 0
    %510 = vmatpush1.bf16.xpose.msra.mxu0 0
    %511 = vmatprep.subr.bf16.mxu0 0
    %512 = vmatpush1.bf16.xpose.msra.mxu0 0
    %513 = vmatprep.subr.bf16.mxu0 0
    %514 = vmatpush1.bf16.xpose.msra.mxu0 0
    %515 = vmatprep.subr.bf16.mxu0 0
    %516 = vmatpush1.bf16.xpose.msra.mxu0 0
    %517 = vmatprep.subr.bf16.mxu0 0
    %518 = vmatpush1.bf16.xpose.msra.mxu0 0
    %519 = vmatprep.subr.bf16.mxu0 0
    %520 = vmatpush1.bf16.xpose.msra.mxu0 %v503
    %521 = vmatprep.subr.bf16.mxu0 0
    %522 = vmatpush2.bf16.xpose.msra.mxu0 0
    %523 = vmatprep.subr.bf16.mxu0 0
    %524 = vmatpush2.bf16.xpose.msra.mxu0 0
    %525 = vmatprep.subr.bf16.mxu0 0
    %526 = vmatpush2.bf16.xpose.msra.mxu0 0
    %527 = vmatprep.subr.bf16.mxu0 0
    %528 = vmatpush2.bf16.xpose.msra.mxu0 0
    %529 = vmatprep.subr.bf16.mxu0 0
    %530 = vmatpush2.bf16.xpose.msra.mxu0 0
    %531 = vmatprep.subr.bf16.mxu0 0
    %532 = vmatpush2.bf16.xpose.msra.mxu0 0
    %533 = vmatprep.subr.bf16.mxu0 0
    %534 = vmatpush2.bf16.xpose.msra.mxu0 0
    %535 = vmatprep.subr.bf16.mxu0 0
    %536 = vmatpush2.bf16.xpose.msra.mxu0 0
    %537 = vmatprep.mubr.bf16.mxu0 0
    %538 = vmatmul.mubr.bf16.gmra.mxu0 %v500
    %v539 = vpop.f32.mrf.mxu0
    %v540 = vadd.f32 %v104, %v539
    %v541 = vpop.f32.mrf.mxu0
    %v542 = vpop.f32.mrf.mxu0
    %v543 = vpop.f32.mrf.mxu0
    %544 = vdwg.mxu0
    %546 = vrot.lane.b32.xlu0 %v200, 96
    %v547 = vpop.permute.xlu0 %546
    %v549 = vsel %vm204, %v200, 0
    %v552 = vsel %vm204, %v547, 0
    %554 = vmatprep.subr.bf16.mxu0 0
    %555 = vmatpush1.bf16.xpose.msra.mxu0 0
    %556 = vmatprep.subr.bf16.mxu0 0
    %557 = vmatpush1.bf16.xpose.msra.mxu0 0
    %558 = vmatprep.subr.bf16.mxu0 0
    %559 = vmatpush1.bf16.xpose.msra.mxu0 0
    %560 = vmatprep.subr.bf16.mxu0 0
    %561 = vmatpush1.bf16.xpose.msra.mxu0 0
    %562 = vmatprep.subr.bf16.mxu0 0
    %563 = vmatpush1.bf16.xpose.msra.mxu0 0
    %564 = vmatprep.subr.bf16.mxu0 0
    %565 = vmatpush1.bf16.xpose.msra.mxu0 0
    %566 = vmatprep.subr.bf16.mxu0 0
    %567 = vmatpush1.bf16.xpose.msra.mxu0 0
    %568 = vmatprep.subr.bf16.mxu0 0
    %569 = vmatpush1.bf16.xpose.msra.mxu0 %v552
    %570 = vmatprep.subr.bf16.mxu0 0
    %571 = vmatpush2.bf16.xpose.msra.mxu0 0
    %572 = vmatprep.subr.bf16.mxu0 0
    %573 = vmatpush2.bf16.xpose.msra.mxu0 0
    %574 = vmatprep.subr.bf16.mxu0 0
    %575 = vmatpush2.bf16.xpose.msra.mxu0 0
    %576 = vmatprep.subr.bf16.mxu0 0
    %577 = vmatpush2.bf16.xpose.msra.mxu0 0
    %578 = vmatprep.subr.bf16.mxu0 0
    %579 = vmatpush2.bf16.xpose.msra.mxu0 0
    %580 = vmatprep.subr.bf16.mxu0 0
    %581 = vmatpush2.bf16.xpose.msra.mxu0 0
    %582 = vmatprep.subr.bf16.mxu0 0
    %583 = vmatpush2.bf16.xpose.msra.mxu0 0
    %584 = vmatprep.subr.bf16.mxu0 0
    %585 = vmatpush2.bf16.xpose.msra.mxu0 0
    %586 = vmatprep.mubr.bf16.mxu0 0
    %587 = vmatmul.mubr.bf16.gmra.mxu0 %v549
    %v588 = vpop.f32.mrf.mxu0
    %v589 = vadd.f32 %v105, %v588
    %v590 = vpop.f32.mrf.mxu0
    %v591 = vpop.f32.mrf.mxu0
    %v592 = vpop.f32.mrf.mxu0
    %593 = vdwg.mxu0
    %v594 = vsel %vm204, %v246, -inf
    %595 = vmax.xlane.f32.xlu0 %v594
    %v596 = vpop.xlane.xlu0 %595
    %v597 = vsel %vm204, %v295, -inf
    %598 = vmax.xlane.f32.xlu0 %v597
    %v599 = vpop.xlane.xlu0 %598
    %v600 = vsel %vm204, %v344, -inf
    %601 = vmax.xlane.f32.xlu0 %v600
    %v602 = vpop.xlane.xlu0 %601
    %v603 = vsel %vm204, %v393, -inf
    %604 = vmax.xlane.f32.xlu0 %v603
    %v605 = vpop.xlane.xlu0 %604
    %v606 = vsel %vm204, %v442, -inf
    %607 = vmax.xlane.f32.xlu0 %v606
    %v608 = vpop.xlane.xlu0 %607
    %v609 = vsel %vm204, %v491, -inf
    %610 = vmax.xlane.f32.xlu0 %v609
    %v611 = vpop.xlane.xlu0 %610
    %v612 = vsel %vm204, %v540, -inf
    %613 = vmax.xlane.f32.xlu0 %v612
    %v614 = vpop.xlane.xlu0 %613
    %v615 = vsel %vm204, %v589, -inf
    %616 = vmax.xlane.f32.xlu0 %v615
    %v617 = vpop.xlane.xlu0 %616
    %v618 = vsub.f32 %v246, %v596
    %v619 = vsub.f32 %v295, %v599
    %v620 = vsub.f32 %v344, %v602
    %v621 = vsub.f32 %v393, %v605
    %v622 = vsub.f32 %v442, %v608
    %v623 = vsub.f32 %v491, %v611
    %v624 = vsub.f32 %v540, %v614
    %v625 = vsub.f32 %v589, %v617
    %v626 = vmul.f32 %v618, 1.442695
    %v627 = vpow.pop %v626
    %v628 = vmul.f32 %v619, 1.442695
    %v629 = vpow.pop %v628
    %v630 = vmul.f32 %v620, 1.442695
    %v631 = vpow.pop %v630
    %v632 = vmul.f32 %v621, 1.442695
    %v633 = vpow.pop %v632
    %v634 = vmul.f32 %v622, 1.442695
    %v635 = vpow.pop %v634
    %v636 = vmul.f32 %v623, 1.442695
    %v637 = vpow.pop %v636
    %v638 = vmul.f32 %v624, 1.442695
    %v639 = vpow.pop %v638
    %v640 = vmul.f32 %v625, 1.442695
    %v641 = vpow.pop %v640
    %v642 = vsel %vm204, %v627, 0.0
    %643 = vadd.xlane.f32.xlu0 %v642
    %v644 = vpop.xlane.xlu0 %643
    %v645 = vsel %vm204, %v629, 0.0
    %646 = vadd.xlane.f32.xlu0 %v645
    %v647 = vpop.xlane.xlu0 %646
    %v648 = vsel %vm204, %v631, 0.0
    %649 = vadd.xlane.f32.xlu0 %v648
    %v650 = vpop.xlane.xlu0 %649
    %v651 = vsel %vm204, %v633, 0.0
    %652 = vadd.xlane.f32.xlu0 %v651
    %v653 = vpop.xlane.xlu0 %652
    %v654 = vsel %vm204, %v635, 0.0
    %655 = vadd.xlane.f32.xlu0 %v654
    %v656 = vpop.xlane.xlu0 %655
    %v657 = vsel %vm204, %v637, 0.0
    %658 = vadd.xlane.f32.xlu0 %v657
    %v659 = vpop.xlane.xlu0 %658
    %v660 = vsel %vm204, %v639, 0.0
    %661 = vadd.xlane.f32.xlu0 %v660
    %v662 = vpop.xlane.xlu0 %661
    %v663 = vsel %vm204, %v641, 0.0
    %664 = vadd.xlane.f32.xlu0 %v663
    %v665 = vpop.xlane.xlu0 %664
    %v666 = vrcp.pop %v644
    %v667 = vrcp.pop %v647
    %v668 = vrcp.pop %v650
    %v669 = vrcp.pop %v653
    %v670 = vrcp.pop %v656
    %v671 = vrcp.pop %v659
    %v672 = vrcp.pop %v662
    %v673 = vrcp.pop %v665
    %v674 = vmul.f32 %v627, %v666
    %v675 = vmul.f32 %v629, %v667
    %v676 = vmul.f32 %v631, %v668
    %v677 = vmul.f32 %v633, %v669
    %v678 = vmul.f32 %v635, %v670
    %v679 = vmul.f32 %v637, %v671
    %v680 = vmul.f32 %v639, %v672
    %v681 = vmul.f32 %v641, %v673
    %v682 = vpack.c.bf16 %v674, %v674
    %v683 = vpack.c.bf16 %v675, %v675
    %v684 = vpack.c.bf16 %v676, %v676
    %v685 = vpack.c.bf16 %v677, %v677
    %v686 = vpack.c.bf16 %v678, %v678
    %v687 = vpack.c.bf16 %v679, %v679
    %v688 = vpack.c.bf16 %v680, %v680
    %v689 = vpack.c.bf16 %v681, %v681
    %690 = vrot.lane.b32.xlu0 %v193, 64
    %v691 = vpop.permute.xlu0 %690
    %v693 = vsel %vm204, %v682, 0
    %vm695 = vcmask 1043456
    %v697 = vsel %vm695, %v691, 0
    %699 = vmatprep.subr.bf16.mxu0 0
    %700 = vmatpush1.bf16.msra.mxu0 0
    %701 = vmatprep.subr.bf16.mxu0 0
    %702 = vmatpush1.bf16.msra.mxu0 0
    %703 = vmatprep.subr.bf16.mxu0 0
    %704 = vmatpush1.bf16.msra.mxu0 0
    %705 = vmatprep.subr.bf16.mxu0 0
    %706 = vmatpush1.bf16.msra.mxu0 0
    %707 = vmatprep.subr.bf16.mxu0 0
    %708 = vmatpush1.bf16.msra.mxu0 0
    %709 = vmatprep.subr.bf16.mxu0 0
    %710 = vmatpush1.bf16.msra.mxu0 0
    %711 = vmatprep.subr.bf16.mxu0 0
    %712 = vmatpush1.bf16.msra.mxu0 0
    %713 = vmatprep.subr.bf16.mxu0 0
    %714 = vmatpush1.bf16.msra.mxu0 %v697
    %715 = vmatprep.subr.bf16.mxu0 0
    %716 = vmatpush2.bf16.msra.mxu0 0
    %717 = vmatprep.subr.bf16.mxu0 0
    %718 = vmatpush2.bf16.msra.mxu0 0
    %719 = vmatprep.subr.bf16.mxu0 0
    %720 = vmatpush2.bf16.msra.mxu0 0
    %721 = vmatprep.subr.bf16.mxu0 0
    %722 = vmatpush2.bf16.msra.mxu0 0
    %723 = vmatprep.subr.bf16.mxu0 0
    %724 = vmatpush2.bf16.msra.mxu0 0
    %725 = vmatprep.subr.bf16.mxu0 0
    %726 = vmatpush2.bf16.msra.mxu0 0
    %727 = vmatprep.subr.bf16.mxu0 0
    %728 = vmatpush2.bf16.msra.mxu0 0
    %729 = vmatprep.subr.bf16.mxu0 0
    %730 = vmatpush2.bf16.msra.mxu0 0
    %731 = vmatprep.mubr.bf16.mxu0 0
    %732 = vmatmul.mubr.bf16.gmra.mxu0 %v693
    %v733 = vpop.f32.mrf.mxu0
    %v734 = vadd.f32 0.0, %v733
    %v735 = vpop.f32.mrf.mxu0
    %v736 = vpop.f32.mrf.mxu0
    %v737 = vpop.f32.mrf.mxu0
    %738 = vdwg.mxu0
    %739 = vrot.lane.b32.xlu0 %v194, 64
    %v740 = vpop.permute.xlu0 %739
    %v742 = vsel %vm204, %v683, 0
    %v745 = vsel %vm695, %v740, 0
    %747 = vmatprep.subr.bf16.mxu0 0
    %748 = vmatpush1.bf16.msra.mxu0 0
    %749 = vmatprep.subr.bf16.mxu0 0
    %750 = vmatpush1.bf16.msra.mxu0 0
    %751 = vmatprep.subr.bf16.mxu0 0
    %752 = vmatpush1.bf16.msra.mxu0 0
    %753 = vmatprep.subr.bf16.mxu0 0
    %754 = vmatpush1.bf16.msra.mxu0 0
    %755 = vmatprep.subr.bf16.mxu0 0
    %756 = vmatpush1.bf16.msra.mxu0 0
    %757 = vmatprep.subr.bf16.mxu0 0
    %758 = vmatpush1.bf16.msra.mxu0 0
    %759 = vmatprep.subr.bf16.mxu0 0
    %760 = vmatpush1.bf16.msra.mxu0 0
    %761 = vmatprep.subr.bf16.mxu0 0
    %762 = vmatpush1.bf16.msra.mxu0 %v745
    %763 = vmatprep.subr.bf16.mxu0 0
    %764 = vmatpush2.bf16.msra.mxu0 0
    %765 = vmatprep.subr.bf16.mxu0 0
    %766 = vmatpush2.bf16.msra.mxu0 0
    %767 = vmatprep.subr.bf16.mxu0 0
    %768 = vmatpush2.bf16.msra.mxu0 0
    %769 = vmatprep.subr.bf16.mxu0 0
    %770 = vmatpush2.bf16.msra.mxu0 0
    %771 = vmatprep.subr.bf16.mxu0 0
    %772 = vmatpush2.bf16.msra.mxu0 0
    %773 = vmatprep.subr.bf16.mxu0 0
    %774 = vmatpush2.bf16.msra.mxu0 0
    %775 = vmatprep.subr.bf16.mxu0 0
    %776 = vmatpush2.bf16.msra.mxu0 0
    %777 = vmatprep.subr.bf16.mxu0 0
    %778 = vmatpush2.bf16.msra.mxu0 0
    %779 = vmatprep.mubr.bf16.mxu0 0
    %780 = vmatmul.mubr.bf16.gmra.mxu0 %v742
    %v781 = vpop.f32.mrf.mxu0
    %v782 = vadd.f32 0.0, %v781
    %v783 = vpop.f32.mrf.mxu0
    %v784 = vpop.f32.mrf.mxu0
    %v785 = vpop.f32.mrf.mxu0
    %786 = vdwg.mxu0
    %787 = vrot.lane.b32.xlu0 %v195, 64
    %v788 = vpop.permute.xlu0 %787
    %v790 = vsel %vm204, %v684, 0
    %v793 = vsel %vm695, %v788, 0
    %795 = vmatprep.subr.bf16.mxu0 0
    %796 = vmatpush1.bf16.msra.mxu0 0
    %797 = vmatprep.subr.bf16.mxu0 0
    %798 = vmatpush1.bf16.msra.mxu0 0
    %799 = vmatprep.subr.bf16.mxu0 0
    %800 = vmatpush1.bf16.msra.mxu0 0
    %801 = vmatprep.subr.bf16.mxu0 0
    %802 = vmatpush1.bf16.msra.mxu0 0
    %803 = vmatprep.subr.bf16.mxu0 0
    %804 = vmatpush1.bf16.msra.mxu0 0
    %805 = vmatprep.subr.bf16.mxu0 0
    %806 = vmatpush1.bf16.msra.mxu0 0
    %807 = vmatprep.subr.bf16.mxu0 0
    %808 = vmatpush1.bf16.msra.mxu0 0
    %809 = vmatprep.subr.bf16.mxu0 0
    %810 = vmatpush1.bf16.msra.mxu0 %v793
    %811 = vmatprep.subr.bf16.mxu0 0
    %812 = vmatpush2.bf16.msra.mxu0 0
    %813 = vmatprep.subr.bf16.mxu0 0
    %814 = vmatpush2.bf16.msra.mxu0 0
    %815 = vmatprep.subr.bf16.mxu0 0
    %816 = vmatpush2.bf16.msra.mxu0 0
    %817 = vmatprep.subr.bf16.mxu0 0
    %818 = vmatpush2.bf16.msra.mxu0 0
    %819 = vmatprep.subr.bf16.mxu0 0
    %820 = vmatpush2.bf16.msra.mxu0 0
    %821 = vmatprep.subr.bf16.mxu0 0
    %822 = vmatpush2.bf16.msra.mxu0 0
    %823 = vmatprep.subr.bf16.mxu0 0
    %824 = vmatpush2.bf16.msra.mxu0 0
    %825 = vmatprep.subr.bf16.mxu0 0
    %826 = vmatpush2.bf16.msra.mxu0 0
    %827 = vmatprep.mubr.bf16.mxu0 0
    %828 = vmatmul.mubr.bf16.gmra.mxu0 %v790
    %v829 = vpop.f32.mrf.mxu0
    %v830 = vadd.f32 0.0, %v829
    %v831 = vpop.f32.mrf.mxu0
    %v832 = vpop.f32.mrf.mxu0
    %v833 = vpop.f32.mrf.mxu0
    %834 = vdwg.mxu0
    %835 = vrot.lane.b32.xlu0 %v196, 64
    %v836 = vpop.permute.xlu0 %835
    %v838 = vsel %vm204, %v685, 0
    %v841 = vsel %vm695, %v836, 0
    %843 = vmatprep.subr.bf16.mxu0 0
    %844 = vmatpush1.bf16.msra.mxu0 0
    %845 = vmatprep.subr.bf16.mxu0 0
    %846 = vmatpush1.bf16.msra.mxu0 0
    %847 = vmatprep.subr.bf16.mxu0 0
    %848 = vmatpush1.bf16.msra.mxu0 0
    %849 = vmatprep.subr.bf16.mxu0 0
    %850 = vmatpush1.bf16.msra.mxu0 0
    %851 = vmatprep.subr.bf16.mxu0 0
    %852 = vmatpush1.bf16.msra.mxu0 0
    %853 = vmatprep.subr.bf16.mxu0 0
    %854 = vmatpush1.bf16.msra.mxu0 0
    %855 = vmatprep.subr.bf16.mxu0 0
    %856 = vmatpush1.bf16.msra.mxu0 0
    %857 = vmatprep.subr.bf16.mxu0 0
    %858 = vmatpush1.bf16.msra.mxu0 %v841
    %859 = vmatprep.subr.bf16.mxu0 0
    %860 = vmatpush2.bf16.msra.mxu0 0
    %861 = vmatprep.subr.bf16.mxu0 0
    %862 = vmatpush2.bf16.msra.mxu0 0
    %863 = vmatprep.subr.bf16.mxu0 0
    %864 = vmatpush2.bf16.msra.mxu0 0
    %865 = vmatprep.subr.bf16.mxu0 0
    %866 = vmatpush2.bf16.msra.mxu0 0
    %867 = vmatprep.subr.bf16.mxu0 0
    %868 = vmatpush2.bf16.msra.mxu0 0
    %869 = vmatprep.subr.bf16.mxu0 0
    %870 = vmatpush2.bf16.msra.mxu0 0
    %871 = vmatprep.subr.bf16.mxu0 0
    %872 = vmatpush2.bf16.msra.mxu0 0
    %873 = vmatprep.subr.bf16.mxu0 0
    %874 = vmatpush2.bf16.msra.mxu0 0
    %875 = vmatprep.mubr.bf16.mxu0 0
    %876 = vmatmul.mubr.bf16.gmra.mxu0 %v838
    %v877 = vpop.f32.mrf.mxu0
    %v878 = vadd.f32 0.0, %v877
    %v879 = vpop.f32.mrf.mxu0
    %v880 = vpop.f32.mrf.mxu0
    %v881 = vpop.f32.mrf.mxu0
    %882 = vdwg.mxu0
    %883 = vrot.lane.b32.xlu0 %v197, 64
    %v884 = vpop.permute.xlu0 %883
    %v886 = vsel %vm204, %v686, 0
    %v889 = vsel %vm695, %v884, 0
    %891 = vmatprep.subr.bf16.mxu0 0
    %892 = vmatpush1.bf16.msra.mxu0 0
    %893 = vmatprep.subr.bf16.mxu0 0
    %894 = vmatpush1.bf16.msra.mxu0 0
    %895 = vmatprep.subr.bf16.mxu0 0
    %896 = vmatpush1.bf16.msra.mxu0 0
    %897 = vmatprep.subr.bf16.mxu0 0
    %898 = vmatpush1.bf16.msra.mxu0 0
    %899 = vmatprep.subr.bf16.mxu0 0
    %900 = vmatpush1.bf16.msra.mxu0 0
    %901 = vmatprep.subr.bf16.mxu0 0
    %902 = vmatpush1.bf16.msra.mxu0 0
    %903 = vmatprep.subr.bf16.mxu0 0
    %904 = vmatpush1.bf16.msra.mxu0 0
    %905 = vmatprep.subr.bf16.mxu0 0
    %906 = vmatpush1.bf16.msra.mxu0 %v889
    %907 = vmatprep.subr.bf16.mxu0 0
    %908 = vmatpush2.bf16.msra.mxu0 0
    %909 = vmatprep.subr.bf16.mxu0 0
    %910 = vmatpush2.bf16.msra.mxu0 0
    %911 = vmatprep.subr.bf16.mxu0 0
    %912 = vmatpush2.bf16.msra.mxu0 0
    %913 = vmatprep.subr.bf16.mxu0 0
    %914 = vmatpush2.bf16.msra.mxu0 0
    %915 = vmatprep.subr.bf16.mxu0 0
    %916 = vmatpush2.bf16.msra.mxu0 0
    %917 = vmatprep.subr.bf16.mxu0 0
    %918 = vmatpush2.bf16.msra.mxu0 0
    %919 = vmatprep.subr.bf16.mxu0 0
    %920 = vmatpush2.bf16.msra.mxu0 0
    %921 = vmatprep.subr.bf16.mxu0 0
    %922 = vmatpush2.bf16.msra.mxu0 0
    %923 = vmatprep.mubr.bf16.mxu0 0
    %924 = vmatmul.mubr.bf16.gmra.mxu0 %v886
    %v925 = vpop.f32.mrf.mxu0
    %v926 = vadd.f32 0.0, %v925
    %v927 = vpop.f32.mrf.mxu0
    %v928 = vpop.f32.mrf.mxu0
    %v929 = vpop.f32.mrf.mxu0
    %930 = vdwg.mxu0
    %931 = vrot.lane.b32.xlu0 %v198, 64
    %v932 = vpop.permute.xlu0 %931
    %v934 = vsel %vm204, %v687, 0
    %v937 = vsel %vm695, %v932, 0
    %939 = vmatprep.subr.bf16.mxu0 0
    %940 = vmatpush1.bf16.msra.mxu0 0
    %941 = vmatprep.subr.bf16.mxu0 0
    %942 = vmatpush1.bf16.msra.mxu0 0
    %943 = vmatprep.subr.bf16.mxu0 0
    %944 = vmatpush1.bf16.msra.mxu0 0
    %945 = vmatprep.subr.bf16.mxu0 0
    %946 = vmatpush1.bf16.msra.mxu0 0
    %947 = vmatprep.subr.bf16.mxu0 0
    %948 = vmatpush1.bf16.msra.mxu0 0
    %949 = vmatprep.subr.bf16.mxu0 0
    %950 = vmatpush1.bf16.msra.mxu0 0
    %951 = vmatprep.subr.bf16.mxu0 0
    %952 = vmatpush1.bf16.msra.mxu0 0
    %953 = vmatprep.subr.bf16.mxu0 0
    %954 = vmatpush1.bf16.msra.mxu0 %v937
    %955 = vmatprep.subr.bf16.mxu0 0
    %956 = vmatpush2.bf16.msra.mxu0 0
    %957 = vmatprep.subr.bf16.mxu0 0
    %958 = vmatpush2.bf16.msra.mxu0 0
    %959 = vmatprep.subr.bf16.mxu0 0
    %960 = vmatpush2.bf16.msra.mxu0 0
    %961 = vmatprep.subr.bf16.mxu0 0
    %962 = vmatpush2.bf16.msra.mxu0 0
    %963 = vmatprep.subr.bf16.mxu0 0
    %964 = vmatpush2.bf16.msra.mxu0 0
    %965 = vmatprep.subr.bf16.mxu0 0
    %966 = vmatpush2.bf16.msra.mxu0 0
    %967 = vmatprep.subr.bf16.mxu0 0
    %968 = vmatpush2.bf16.msra.mxu0 0
    %969 = vmatprep.subr.bf16.mxu0 0
    %970 = vmatpush2.bf16.msra.mxu0 0
    %971 = vmatprep.mubr.bf16.mxu0 0
    %972 = vmatmul.mubr.bf16.gmra.mxu0 %v934
    %v973 = vpop.f32.mrf.mxu0
    %v974 = vadd.f32 0.0, %v973
    %v975 = vpop.f32.mrf.mxu0
    %v976 = vpop.f32.mrf.mxu0
    %v977 = vpop.f32.mrf.mxu0
    %978 = vdwg.mxu0
    %979 = vrot.lane.b32.xlu0 %v199, 64
    %v980 = vpop.permute.xlu0 %979
    %v982 = vsel %vm204, %v688, 0
    %v985 = vsel %vm695, %v980, 0
    %987 = vmatprep.subr.bf16.mxu0 0
    %988 = vmatpush1.bf16.msra.mxu0 0
    %989 = vmatprep.subr.bf16.mxu0 0
    %990 = vmatpush1.bf16.msra.mxu0 0
    %991 = vmatprep.subr.bf16.mxu0 0
    %992 = vmatpush1.bf16.msra.mxu0 0
    %993 = vmatprep.subr.bf16.mxu0 0
    %994 = vmatpush1.bf16.msra.mxu0 0
    %995 = vmatprep.subr.bf16.mxu0 0
    %996 = vmatpush1.bf16.msra.mxu0 0
    %997 = vmatprep.subr.bf16.mxu0 0
    %998 = vmatpush1.bf16.msra.mxu0 0
    %999 = vmatprep.subr.bf16.mxu0 0
    %1000 = vmatpush1.bf16.msra.mxu0 0
    %1001 = vmatprep.subr.bf16.mxu0 0
    %1002 = vmatpush1.bf16.msra.mxu0 %v985
    %1003 = vmatprep.subr.bf16.mxu0 0
    %1004 = vmatpush2.bf16.msra.mxu0 0
    %1005 = vmatprep.subr.bf16.mxu0 0
    %1006 = vmatpush2.bf16.msra.mxu0 0
    %1007 = vmatprep.subr.bf16.mxu0 0
    %1008 = vmatpush2.bf16.msra.mxu0 0
    %1009 = vmatprep.subr.bf16.mxu0 0
    %1010 = vmatpush2.bf16.msra.mxu0 0
    %1011 = vmatprep.subr.bf16.mxu0 0
    %1012 = vmatpush2.bf16.msra.mxu0 0
    %1013 = vmatprep.subr.bf16.mxu0 0
    %1014 = vmatpush2.bf16.msra.mxu0 0
    %1015 = vmatprep.subr.bf16.mxu0 0
    %1016 = vmatpush2.bf16.msra.mxu0 0
    %1017 = vmatprep.subr.bf16.mxu0 0
    %1018 = vmatpush2.bf16.msra.mxu0 0
    %1019 = vmatprep.mubr.bf16.mxu0 0
    %1020 = vmatmul.mubr.bf16.gmra.mxu0 %v982
    %v1021 = vpop.f32.mrf.mxu0
    %v1022 = vadd.f32 0.0, %v1021
    %v1023 = vpop.f32.mrf.mxu0
    %v1024 = vpop.f32.mrf.mxu0
    %v1025 = vpop.f32.mrf.mxu0
    %1026 = vdwg.mxu0
    %1027 = vrot.lane.b32.xlu0 %v200, 64
    %v1028 = vpop.permute.xlu0 %1027
    %v1030 = vsel %vm204, %v689, 0
    %v1033 = vsel %vm695, %v1028, 0
    %1035 = vmatprep.subr.bf16.mxu0 0
    %1036 = vmatpush1.bf16.msra.mxu0 0
    %1037 = vmatprep.subr.bf16.mxu0 0
    %1038 = vmatpush1.bf16.msra.mxu0 0
    %1039 = vmatprep.subr.bf16.mxu0 0
    %1040 = vmatpush1.bf16.msra.mxu0 0
    %1041 = vmatprep.subr.bf16.mxu0 0
    %1042 = vmatpush1.bf16.msra.mxu0 0
    %1043 = vmatprep.subr.bf16.mxu0 0
    %1044 = vmatpush1.bf16.msra.mxu0 0
    %1045 = vmatprep.subr.bf16.mxu0 0
    %1046 = vmatpush1.bf16.msra.mxu0 0
    %1047 = vmatprep.subr.bf16.mxu0 0
    %1048 = vmatpush1.bf16.msra.mxu0 0
    %1049 = vmatprep.subr.bf16.mxu0 0
    %1050 = vmatpush1.bf16.msra.mxu0 %v1033
    %1051 = vmatprep.subr.bf16.mxu0 0
    %1052 = vmatpush2.bf16.msra.mxu0 0
    %1053 = vmatprep.subr.bf16.mxu0 0
    %1054 = vmatpush2.bf16.msra.mxu0 0
    %1055 = vmatprep.subr.bf16.mxu0 0
    %1056 = vmatpush2.bf16.msra.mxu0 0
    %1057 = vmatprep.subr.bf16.mxu0 0
    %1058 = vmatpush2.bf16.msra.mxu0 0
    %1059 = vmatprep.subr.bf16.mxu0 0
    %1060 = vmatpush2.bf16.msra.mxu0 0
    %1061 = vmatprep.subr.bf16.mxu0 0
    %1062 = vmatpush2.bf16.msra.mxu0 0
    %1063 = vmatprep.subr.bf16.mxu0 0
    %1064 = vmatpush2.bf16.msra.mxu0 0
    %1065 = vmatprep.subr.bf16.mxu0 0
    %1066 = vmatpush2.bf16.msra.mxu0 0
    %1067 = vmatprep.mubr.bf16.mxu0 0
    %1068 = vmatmul.mubr.bf16.gmra.mxu0 %v1030
    %v1069 = vpop.f32.mrf.mxu0
    %v1070 = vadd.f32 0.0, %v1069
    %v1071 = vpop.f32.mrf.mxu0
    %v1072 = vpop.f32.mrf.mxu0
    %v1073 = vpop.f32.mrf.mxu0
    %1074 = vdwg.mxu0
    %1076 = vrot.lane.b32.xlu0 %v782, 8
    %v1077 = vpop.permute.xlu0 %1076
    %1080 = vrot.lane.b32.xlu0 %v830, 16
    %v1081 = vpop.permute.xlu0 %1080
    %1084 = vrot.lane.b32.xlu0 %v878, 24
    %v1085 = vpop.permute.xlu0 %1084
    %v1087 = vsel %vm204, %v734, %v1077
    %vm1088 = vcmask 130048
    %v1089 = vsel %vm1088, %v1087, %v1081
    %vm1090 = vcmask 195584
    %v1091 = vsel %vm1090, %v1089, %v1085
    %1093 = vrot.lane.b32.xlu0 %v974, 8
    %v1094 = vpop.permute.xlu0 %1093
    %1097 = vrot.lane.b32.xlu0 %v1022, 16
    %v1098 = vpop.permute.xlu0 %1097
    %1101 = vrot.lane.b32.xlu0 %v1070, 24
    %v1102 = vpop.permute.xlu0 %1101
    %v1104 = vsel %vm204, %v926, %v1094
    %v1105 = vsel %vm1088, %v1104, %v1098
    %v1106 = vsel %vm1090, %v1105, %v1102
    %v1107 = vpack.c.bf16 %v1106, %v1091
    %v1108 = vld [vmem:[#allocation5] sm:$0xf]
    %v1109 = vld [vmem:[#allocation5 + $0x4] sm:$0xf]
    %v1110 = vld [vmem:[#allocation5 + $0x8] sm:$0xf]
    %v1111 = vld [vmem:[#allocation5 + $0xc] sm:$0xf]
    %v1112 = vld [vmem:[%s5] sm:$0x1]
    %v1113 = vlaneseq
    %v1114 = vshrl.u32 %v1113, 7
    %v1115 = vsub.s32 0, %v1114
    %v1116 = vrot.slane %v1112, %v1115
    %v1121 = vunpack.c.l.b16 %v1108
    %v1122 = vunpack.c.l.b16 %v1109
    %v1123 = vunpack.c.l.b16 %v1110
    %v1124 = vunpack.c.l.b16 %v1111
    %v1125 = vpack.c.b16 %v1122, %v1121
    %v1126 = vpack.c.b16 %v1124, %v1123
    %v1130 = vsel %vm128, %v1107, 0
    %1132 = vmatprep.subr.bf16.mxu0 0
    %1133 = vmatpush1.bf16.msra.mxu0 0
    %1134 = vmatprep.subr.bf16.mxu0 0
    %1135 = vmatpush1.bf16.msra.mxu0 0
    %1136 = vmatprep.subr.bf16.mxu0 0
    %1137 = vmatpush1.bf16.msra.mxu0 0
    %1138 = vmatprep.subr.bf16.mxu0 0
    %1139 = vmatpush1.bf16.msra.mxu0 0
    %1140 = vmatprep.subr.bf16.mxu0 0
    %1141 = vmatpush1.bf16.msra.mxu0 0
    %1142 = vmatprep.subr.bf16.mxu0 0
    %1143 = vmatpush1.bf16.msra.mxu0 0
    %1144 = vmatprep.subr.bf16.mxu0 0
    %1145 = vmatpush1.bf16.msra.mxu0 %v1126
    %1146 = vmatprep.subr.bf16.mxu0 0
    %1147 = vmatpush1.bf16.msra.mxu0 %v1125
    %1148 = vmatprep.subr.bf16.mxu0 0
    %1149 = vmatpush2.bf16.msra.mxu0 0
    %1150 = vmatprep.subr.bf16.mxu0 0
    %1151 = vmatpush2.bf16.msra.mxu0 0
    %1152 = vmatprep.subr.bf16.mxu0 0
    %1153 = vmatpush2.bf16.msra.mxu0 0
    %1154 = vmatprep.subr.bf16.mxu0 0
    %1155 = vmatpush2.bf16.msra.mxu0 0
    %1156 = vmatprep.subr.bf16.mxu0 0
    %1157 = vmatpush2.bf16.msra.mxu0 0
    %1158 = vmatprep.subr.bf16.mxu0 0
    %1159 = vmatpush2.bf16.msra.mxu0 0
    %1160 = vmatprep.subr.bf16.mxu0 0
    %1161 = vmatpush2.bf16.msra.mxu0 0
    %1162 = vmatprep.subr.bf16.mxu0 0
    %1163 = vmatpush2.bf16.msra.mxu0 0
    %1164 = vmatprep.mubr.bf16.mxu0 0
    %1165 = vmatmul.mubr.bf16.gmra.mxu0 %v1130
    %v1166 = vpop.f32.mrf.mxu0
    %v1167 = vadd.f32 %v1116, %v1166
    %v1168 = vpop.f32.mrf.mxu0
    %v1169 = vpop.f32.mrf.mxu0
    %v1170 = vadd.f32 %v1116, %v1169
    %v1171 = vpop.f32.mrf.mxu0
    %1172 = vdwg.mxu0
    %v1173 = vadd.f32 %v1167, %v96
    %v1174 = vadd.f32 %v1170, %v97
    %v1175 = vld [vmem:[%s12] sm:$0x1]
    %v1176 = vld [vmem:[%s13] sm:$0x1]
    %v1177 = vsel %vm128, %v1173, 0.0
    %1178 = vadd.xlane.f32.xlu0 %v1177
    %v1179 = vpop.xlane.xlu0 %1178
    %v1180 = vsel %vm128, %v1174, 0.0
    %1181 = vadd.xlane.f32.xlu0 %v1180
    %v1182 = vpop.xlane.xlu0 %1181
    %v1183 = vrcp.pop 32.0
    %v1184 = vmul.f32 %v1179, %v1183
    %v1185 = vmul.f32 %v1182, %v1183
    %v1186 = vmul.f32 %v1173, %v1173
    %v1187 = vmul.f32 %v1174, %v1174
    %v1188 = vsel %vm128, %v1186, 0.0
    %1189 = vadd.xlane.f32.xlu0 %v1188
    %v1190 = vpop.xlane.xlu0 %1189
    %v1191 = vsel %vm128, %v1187, 0.0
    %1192 = vadd.xlane.f32.xlu0 %v1191
    %v1193 = vpop.xlane.xlu0 %1192
    %v1194 = vmul.f32 %v1190, %v1183
    %v1195 = vmul.f32 %v1193, %v1183
    %v1196 = vmul.f32 %v1184, %v1184
    %v1197 = vmul.f32 %v1185, %v1185
    %v1198 = vsub.f32 %v1194, %v1196
    %v1199 = vsub.f32 %v1195, %v1197
    %v1200 = vsub.f32 %v1173, %v1184
    %v1201 = vsub.f32 %v1174, %v1185
    %v1202 = vadd.f32 %v1198, 1e-06
    %v1203 = vadd.f32 %v1199, 1e-06
    %v1204 = vrsqrt.pop %v1202
    %v1205 = vrsqrt.pop %v1203
    %v1206 = vmul.f32 %v1200, %v1204
    %v1207 = vmul.f32 %v1201, %v1205
    %v1208 = vlaneseq
    %v1209 = vshrl.u32 %v1208, 7
    %v1210 = vsub.s32 0, %v1209
    %v1211 = vrot.slane %v1175, %v1210
    %v1212 = vmul.f32 %v1206, %v1211
    %v1213 = vmul.f32 %v1207, %v1211
    %v1214 = vlaneseq
    %v1215 = vshrl.u32 %v1214, 7
    %v1216 = vsub.s32 0, %v1215
    %v1217 = vrot.slane %v1176, %v1216
    %v1218 = vadd.f32 %v1212, %v1217
    %v1219 = vadd.f32 %v1213, %v1217
    %v1220 = vpack.c.bf16 %v1219, %v1218
    %v1221 = vld [vmem:[#allocation7] sm:$0xf]
    %v1222 = vld [vmem:[#allocation7 + $0x4] sm:$0xf]
    %v1223 = vld [vmem:[#allocation7 + $0x8] sm:$0xf]
    %v1224 = vld [vmem:[#allocation7 + $0xc] sm:$0xf]
    %v1225 = vld [vmem:[%s9] sm:$0x1]
    %v1226 = vlaneseq
    %v1227 = vshrl.u32 %v1226, 7
    %v1228 = vsub.s32 0, %v1227
    %v1229 = vrot.slane %v1225, %v1228
    %v1234 = vunpack.c.l.b16 %v1221
    %v1235 = vunpack.c.l.b16 %v1222
    %v1236 = vunpack.c.l.b16 %v1223
    %v1237 = vunpack.c.l.b16 %v1224
    %v1238 = vpack.c.b16 %v1235, %v1234
    %v1239 = vpack.c.b16 %v1237, %v1236
    %v1243 = vsel %vm128, %v1220, 0
    %1245 = vmatprep.subr.bf16.mxu0 0
    %1246 = vmatpush1.bf16.msra.mxu0 0
    %1247 = vmatprep.subr.bf16.mxu0 0
    %1248 = vmatpush1.bf16.msra.mxu0 0
    %1249 = vmatprep.subr.bf16.mxu0 0
    %1250 = vmatpush1.bf16.msra.mxu0 0
    %1251 = vmatprep.subr.bf16.mxu0 0
    %1252 = vmatpush1.bf16.msra.mxu0 0
    %1253 = vmatprep.subr.bf16.mxu0 0
    %1254 = vmatpush1.bf16.msra.mxu0 0
    %1255 = vmatprep.subr.bf16.mxu0 0
    %1256 = vmatpush1.bf16.msra.mxu0 0
    %1257 = vmatprep.subr.bf16.mxu0 0
    %1258 = vmatpush1.bf16.msra.mxu0 %v1239
    %1259 = vmatprep.subr.bf16.mxu0 0
    %1260 = vmatpush1.bf16.msra.mxu0 %v1238
    %1261 = vmatprep.subr.bf16.mxu0 0
    %1262 = vmatpush2.bf16.msra.mxu0 0
    %1263 = vmatprep.subr.bf16.mxu0 0
    %1264 = vmatpush2.bf16.msra.mxu0 0
    %1265 = vmatprep.subr.bf16.mxu0 0
    %1266 = vmatpush2.bf16.msra.mxu0 0
    %1267 = vmatprep.subr.bf16.mxu0 0
    %1268 = vmatpush2.bf16.msra.mxu0 0
    %1269 = vmatprep.subr.bf16.mxu0 0
    %1270 = vmatpush2.bf16.msra.mxu0 0
    %1271 = vmatprep.subr.bf16.mxu0 0
    %1272 = vmatpush2.bf16.msra.mxu0 0
    %1273 = vmatprep.subr.bf16.mxu0 0
    %1274 = vmatpush2.bf16.msra.mxu0 0
    %1275 = vmatprep.subr.bf16.mxu0 0
    %1276 = vmatpush2.bf16.msra.mxu0 0
    %1277 = vmatprep.mubr.bf16.mxu0 0
    %1278 = vmatmul.mubr.bf16.gmra.mxu0 %v1243
    %v1279 = vpop.f32.mrf.mxu0
    %v1280 = vadd.f32 %v1229, %v1279
    %v1281 = vpop.f32.mrf.mxu0
    %v1282 = vpop.f32.mrf.mxu0
    %v1283 = vadd.f32 %v1229, %v1282
    %v1284 = vpop.f32.mrf.mxu0
    %1285 = vdwg.mxu0
    %v1286 = vmul.f32 %v1280, 0.5
    %v1287 = vmul.f32 %v1283, 0.5
    %v1288 = vmul.f32 %v1280, 0.044715
    %v1289 = vmul.f32 %v1283, 0.044715
    %v1290 = vmul.f32 %v1288, %v1280
    %v1291 = vmul.f32 %v1289, %v1283
    %v1292 = vmul.f32 %v1290, %v1280
    %v1293 = vmul.f32 %v1291, %v1283
    %v1294 = vadd.f32 %v1280, %v1292
    %v1295 = vadd.f32 %v1283, %v1293
    %v1296 = vmul.f32 %v1294, 0.7978846
    %v1297 = vmul.f32 %v1295, 0.7978846
    %v1298 = vtanh.pop %v1296
    %v1299 = vtanh.pop %v1297
    %v1300 = vadd.f32 %v1298, 1.0
    %v1301 = vadd.f32 %v1299, 1.0
    %v1302 = vmul.f32 %v1286, %v1300
    %v1303 = vmul.f32 %v1287, %v1301
    %v1304 = vpack.c.bf16 %v1303, %v1302
    %v1305 = vld [vmem:[%s10] sm:$0xf]
    %v1306 = vld [vmem:[%s10 + $0x4] sm:$0xf]
    %v1307 = vld [vmem:[%s10 + $0x8] sm:$0xf]
    %v1308 = vld [vmem:[%s10 + $0xc] sm:$0xf]
    %v1309 = vld [vmem:[%s10 + $0x10] sm:$0xf]
    %v1310 = vld [vmem:[%s10 + $0x14] sm:$0xf]
    %v1311 = vld [vmem:[%s10 + $0x18] sm:$0xf]
    %v1312 = vld [vmem:[%s10 + $0x1c] sm:$0xf]
    %v1313 = vld [vmem:[%s11] sm:$0x1]
    %v1314 = vlaneseq
    %v1315 = vshrl.u32 %v1314, 7
    %v1316 = vsub.s32 0, %v1315
    %v1317 = vrot.slane %v1313, %v1316
    %v1326 = vunpack.c.l.b16 %v1305
    %v1327 = vunpack.c.l.b16 %v1306
    %v1328 = vunpack.c.l.b16 %v1307
    %v1329 = vunpack.c.l.b16 %v1308
    %v1330 = vunpack.c.l.b16 %v1309
    %v1331 = vunpack.c.l.b16 %v1310
    %v1332 = vunpack.c.l.b16 %v1311
    %v1333 = vunpack.c.l.b16 %v1312
    %v1334 = vpack.c.b16 %v1327, %v1326
    %v1335 = vpack.c.b16 %v1329, %v1328
    %v1336 = vpack.c.b16 %v1331, %v1330
    %v1337 = vpack.c.b16 %v1333, %v1332
    %vm1342 = vcmask 523264
    %v1344 = vsel %vm1342, %v1304, 0
    %1346 = vmatprep.subr.bf16.mxu0 0
    %1347 = vmatpush1.bf16.msra.mxu0 0
    %1348 = vmatprep.subr.bf16.mxu0 0
    %1349 = vmatpush1.bf16.msra.mxu0 0
    %1350 = vmatprep.subr.bf16.mxu0 0
    %1351 = vmatpush1.bf16.msra.mxu0 0
    %1352 = vmatprep.subr.bf16.mxu0 0
    %1353 = vmatpush1.bf16.msra.mxu0 0
    %1354 = vmatprep.subr.bf16.mxu0 0
    %1355 = vmatpush1.bf16.msra.mxu0 %v1337
    %1356 = vmatprep.subr.bf16.mxu0 0
    %1357 = vmatpush1.bf16.msra.mxu0 %v1336
    %1358 = vmatprep.subr.bf16.mxu0 0
    %1359 = vmatpush1.bf16.msra.mxu0 %v1335
    %1360 = vmatprep.subr.bf16.mxu0 0
    %1361 = vmatpush1.bf16.msra.mxu0 %v1334
    %1362 = vmatprep.subr.bf16.mxu0 0
    %1363 = vmatpush2.bf16.msra.mxu0 0
    %1364 = vmatprep.subr.bf16.mxu0 0
    %1365 = vmatpush2.bf16.msra.mxu0 0
    %1366 = vmatprep.subr.bf16.mxu0 0
    %1367 = vmatpush2.bf16.msra.mxu0 0
    %1368 = vmatprep.subr.bf16.mxu0 0
    %1369 = vmatpush2.bf16.msra.mxu0 0
    %1370 = vmatprep.subr.bf16.mxu0 0
    %1371 = vmatpush2.bf16.msra.mxu0 0
    %1372 = vmatprep.subr.bf16.mxu0 0
    %1373 = vmatpush2.bf16.msra.mxu0 0
    %1374 = vmatprep.subr.bf16.mxu0 0
    %1375 = vmatpush2.bf16.msra.mxu0 0
    %1376 = vmatprep.subr.bf16.mxu0 0
    %1377 = vmatpush2.bf16.msra.mxu0 0
    %1378 = vmatprep.mubr.bf16.mxu0 0
    %1379 = vmatmul.mubr.bf16.gmra.mxu0 %v1344
    %v1380 = vpop.f32.mrf.mxu0
    %v1381 = vadd.f32 %v1317, %v1380
    %v1382 = vpop.f32.mrf.mxu0
    %v1383 = vpop.f32.mrf.mxu0
    %v1384 = vadd.f32 %v1317, %v1383
    %v1385 = vpop.f32.mrf.mxu0
    %1386 = vdwg.mxu0
    %v1387 = vadd.f32 %v1381, %v1173
    %v1388 = vadd.f32 %v1384, %v1174
    %v1389 = vld [vmem:[%s6 + $0x1] sm:$0x1]
    %v1390 = vld [vmem:[%s7 + $0x1] sm:$0x1]
    %v1391 = vsel %vm128, %v1387, 0.0
    %1392 = vadd.xlane.f32.xlu0 %v1391
    %v1393 = vpop.xlane.xlu0 %1392
    %v1394 = vsel %vm128, %v1388, 0.0
    %1395 = vadd.xlane.f32.xlu0 %v1394
    %v1396 = vpop.xlane.xlu0 %1395
    %v1397 = vmul.f32 %v1393, %v1183
    %v1398 = vmul.f32 %v1396, %v1183
    %v1399 = vmul.f32 %v1387, %v1387
    %v1400 = vmul.f32 %v1388, %v1388
    %v1401 = vsel %vm128, %v1399, 0.0
    %1402 = vadd.xlane.f32.xlu0 %v1401
    %v1403 = vpop.xlane.xlu0 %1402
    %v1404 = vsel %vm128, %v1400, 0.0
    %1405 = vadd.xlane.f32.xlu0 %v1404
    %v1406 = vpop.xlane.xlu0 %1405
    %v1407 = vmul.f32 %v1403, %v1183
    %v1408 = vmul.f32 %v1406, %v1183
    %v1409 = vmul.f32 %v1397, %v1397
    %v1410 = vmul.f32 %v1398, %v1398
    %v1411 = vsub.f32 %v1407, %v1409
    %v1412 = vsub.f32 %v1408, %v1410
    %v1413 = vsub.f32 %v1387, %v1397
    %v1414 = vsub.f32 %v1388, %v1398
    %v1415 = vadd.f32 %v1411, 1e-06
    %v1416 = vadd.f32 %v1412, 1e-06
    %v1417 = vrsqrt.pop %v1415
    %v1418 = vrsqrt.pop %v1416
    %v1419 = vmul.f32 %v1413, %v1417
    %v1420 = vmul.f32 %v1414, %v1418
    %v1421 = vlaneseq
    %v1422 = vshrl.u32 %v1421, 7
    %v1423 = vsub.s32 0, %v1422
    %v1424 = vrot.slane %v1389, %v1423
    %v1425 = vmul.f32 %v1419, %v1424
    %v1426 = vmul.f32 %v1420, %v1424
    %v1427 = vlaneseq
    %v1428 = vshrl.u32 %v1427, 7
    %v1429 = vsub.s32 0, %v1428
    %v1430 = vrot.slane %v1390, %v1429
    %v1431 = vadd.f32 %v1425, %v1430
    %v1432 = vadd.f32 %v1426, %v1430
    %v1433 = vpack.c.bf16 %v1432, %v1431
    %s1434 = scalar_lea.vmem %s2, 16
    %v1435 = vld [vmem:[%s1434] sm:$0xf]
    %v1436 = vld [vmem:[%s1434 + $0x4] sm:$0xf]
    %v1437 = vld [vmem:[%s1434 + $0x8] sm:$0xf]
    %v1438 = vld [vmem:[%s1434 + $0xc] sm:$0xf]
    %v1439 = vld [vmem:[%s3 + $0x1] sm:$0x1]
    %v1440 = vlaneseq
    %v1441 = vshrl.u32 %v1440, 7
    %v1442 = vsub.s32 0, %v1441
    %v1443 = vrot.slane %v1439, %v1442
    %v1448 = vunpack.c.l.b16 %v1435
    %v1449 = vunpack.c.l.b16 %v1436
    %v1450 = vunpack.c.l.b16 %v1437
    %v1451 = vunpack.c.l.b16 %v1438
    %v1452 = vpack.c.b16 %v1449, %v1448
    %v1453 = vpack.c.b16 %v1451, %v1450
    %v1457 = vsel %vm128, %v1433, 0
    %1459 = vmatprep.subr.bf16.mxu0 0
    %1460 = vmatpush1.bf16.msra.mxu0 0
    %1461 = vmatprep.subr.bf16.mxu0 0
    %1462 = vmatpush1.bf16.msra.mxu0 0
    %1463 = vmatprep.subr.bf16.mxu0 0
    %1464 = vmatpush1.bf16.msra.mxu0 0
    %1465 = vmatprep.subr.bf16.mxu0 0
    %1466 = vmatpush1.bf16.msra.mxu0 0
    %1467 = vmatprep.subr.bf16.mxu0 0
    %1468 = vmatpush1.bf16.msra.mxu0 0
    %1469 = vmatprep.subr.bf16.mxu0 0
    %1470 = vmatpush1.bf16.msra.mxu0 0
    %1471 = vmatprep.subr.bf16.mxu0 0
    %1472 = vmatpush1.bf16.msra.mxu0 %v1453
    %1473 = vmatprep.subr.bf16.mxu0 0
    %1474 = vmatpush1.bf16.msra.mxu0 %v1452
    %1475 = vmatprep.subr.bf16.mxu0 0
    %1476 = vmatpush2.bf16.msra.mxu0 0
    %1477 = vmatprep.subr.bf16.mxu0 0
    %1478 = vmatpush2.bf16.msra.mxu0 0
    %1479 = vmatprep.subr.bf16.mxu0 0
    %1480 = vmatpush2.bf16.msra.mxu0 0
    %1481 = vmatprep.subr.bf16.mxu0 0
    %1482 = vmatpush2.bf16.msra.mxu0 0
    %1483 = vmatprep.subr.bf16.mxu0 0
    %1484 = vmatpush2.bf16.msra.mxu0 0
    %1485 = vmatprep.subr.bf16.mxu0 0
    %1486 = vmatpush2.bf16.msra.mxu0 0
    %1487 = vmatprep.subr.bf16.mxu0 0
    %1488 = vmatpush2.bf16.msra.mxu0 0
    %1489 = vmatprep.subr.bf16.mxu0 0
    %1490 = vmatpush2.bf16.msra.mxu0 0
    %1491 = vmatprep.mubr.bf16.mxu0 0
    %1492 = vmatmul.mubr.bf16.gmra.mxu0 %v1457
    %v1493 = vpop.f32.mrf.mxu0
    %v1494 = vadd.f32 %v1443, %v1493
    %v1495 = vpop.f32.mrf.mxu0
    %v1496 = vpop.f32.mrf.mxu0
    %v1497 = vadd.f32 %v1443, %v1496
    %v1498 = vpop.f32.mrf.mxu0
    %1499 = vdwg.mxu0
    %1501 = vrot.lane.b32.xlu0 %v1494, 120
    %v1502 = vpop.permute.xlu0 %1501
    %1504 = vrot.lane.b32.xlu0 %v1494, 112
    %v1505 = vpop.permute.xlu0 %1504
    %1507 = vrot.lane.b32.xlu0 %v1494, 104
    %v1508 = vpop.permute.xlu0 %1507
    %1511 = vrot.lane.b32.xlu0 %v1497, 120
    %v1512 = vpop.permute.xlu0 %1511
    %1514 = vrot.lane.b32.xlu0 %v1497, 112
    %v1515 = vpop.permute.xlu0 %1514
    %1517 = vrot.lane.b32.xlu0 %v1497, 104
    %v1518 = vpop.permute.xlu0 %1517
    %v1520 = vpack.c.bf16 %v1494, %v1494
    %v1521 = vpack.c.bf16 %v1502, %v1502
    %v1522 = vpack.c.bf16 %v1505, %v1505
    %v1523 = vpack.c.bf16 %v1508, %v1508
    %v1524 = vpack.c.bf16 %v1497, %v1497
    %v1525 = vpack.c.bf16 %v1512, %v1512
    %v1526 = vpack.c.bf16 %v1515, %v1515
    %v1527 = vpack.c.bf16 %v1518, %v1518
    %1529 = vrot.lane.b32.xlu0 %v1520, 96
    %v1530 = vpop.permute.xlu0 %1529
    %v1532 = vsel %vm204, %v1520, 0
    %v1535 = vsel %vm204, %v1530, 0
    %1537 = vmatprep.subr.bf16.mxu0 0
    %1538 = vmatpush1.bf16.xpose.msra.mxu0 0
    %1539 = vmatprep.subr.bf16.mxu0 0
    %1540 = vmatpush1.bf16.xpose.msra.mxu0 0
    %1541 = vmatprep.subr.bf16.mxu0 0
    %1542 = vmatpush1.bf16.xpose.msra.mxu0 0
    %1543 = vmatprep.subr.bf16.mxu0 0
    %1544 = vmatpush1.bf16.xpose.msra.mxu0 0
    %1545 = vmatprep.subr.bf16.mxu0 0
    %1546 = vmatpush1.bf16.xpose.msra.mxu0 0
    %1547 = vmatprep.subr.bf16.mxu0 0
    %1548 = vmatpush1.bf16.xpose.msra.mxu0 0
    %1549 = vmatprep.subr.bf16.mxu0 0
    %1550 = vmatpush1.bf16.xpose.msra.mxu0 0
    %1551 = vmatprep.subr.bf16.mxu0 0
    %1552 = vmatpush1.bf16.xpose.msra.mxu0 %v1535
    %1553 = vmatprep.subr.bf16.mxu0 0
    %1554 = vmatpush2.bf16.xpose.msra.mxu0 0
    %1555 = vmatprep.subr.bf16.mxu0 0
    %1556 = vmatpush2.bf16.xpose.msra.mxu0 0
    %1557 = vmatprep.subr.bf16.mxu0 0
    %1558 = vmatpush2.bf16.xpose.msra.mxu0 0
    %1559 = vmatprep.subr.bf16.mxu0 0
    %1560 = vmatpush2.bf16.xpose.msra.mxu0 0
    %1561 = vmatprep.subr.bf16.mxu0 0
    %1562 = vmatpush2.bf16.xpose.msra.mxu0 0
    %1563 = vmatprep.subr.bf16.mxu0 0
    %1564 = vmatpush2.bf16.xpose.msra.mxu0 0
    %1565 = vmatprep.subr.bf16.mxu0 0
    %1566 = vmatpush2.bf16.xpose.msra.mxu0 0
    %1567 = vmatprep.subr.bf16.mxu0 0
    %1568 = vmatpush2.bf16.xpose.msra.mxu0 0
    %1569 = vmatprep.mubr.bf16.mxu0 0
    %1570 = vmatmul.mubr.bf16.gmra.mxu0 %v1532
    %v1571 = vpop.f32.mrf.mxu0
    %v1572 = vadd.f32 %v98, %v1571
    %v1573 = vpop.f32.mrf.mxu0
    %v1574 = vpop.f32.mrf.mxu0
    %v1575 = vpop.f32.mrf.mxu0
    %1576 = vdwg.mxu0
    %1578 = vrot.lane.b32.xlu0 %v1521, 96
    %v1579 = vpop.permute.xlu0 %1578
    %v1581 = vsel %vm204, %v1521, 0
    %v1584 = vsel %vm204, %v1579, 0
    %1586 = vmatprep.subr.bf16.mxu0 0
    %1587 = vmatpush1.bf16.xpose.msra.mxu0 0
    %1588 = vmatprep.subr.bf16.mxu0 0
    %1589 = vmatpush1.bf16.xpose.msra.mxu0 0
    %1590 = vmatprep.subr.bf16.mxu0 0
    %1591 = vmatpush1.bf16.xpose.msra.mxu0 0
    %1592 = vmatprep.subr.bf16.mxu0 0
    %1593 = vmatpush1.bf16.xpose.msra.mxu0 0
    %1594 = vmatprep.subr.bf16.mxu0 0
    %1595 = vmatpush1.bf16.xpose.msra.mxu0 0
    %1596 = vmatprep.subr.bf16.mxu0 0
    %1597 = vmatpush1.bf16.xpose.msra.mxu0 0
    %1598 = vmatprep.subr.bf16.mxu0 0
    %1599 = vmatpush1.bf16.xpose.msra.mxu0 0
    %1600 = vmatprep.subr.bf16.mxu0 0
    %1601 = vmatpush1.bf16.xpose.msra.mxu0 %v1584
    %1602 = vmatprep.subr.bf16.mxu0 0
    %1603 = vmatpush2.bf16.xpose.msra.mxu0 0
    %1604 = vmatprep.subr.bf16.mxu0 0
    %1605 = vmatpush2.bf16.xpose.msra.mxu0 0
    %1606 = vmatprep.subr.bf16.mxu0 0
    %1607 = vmatpush2.bf16.xpose.msra.mxu0 0
    %1608 = vmatprep.subr.bf16.mxu0 0
    %1609 = vmatpush2.bf16.xpose.msra.mxu0 0
    %1610 = vmatprep.subr.bf16.mxu0 0
    %1611 = vmatpush2.bf16.xpose.msra.mxu0 0
    %1612 = vmatprep.subr.bf16.mxu0 0
    %1613 = vmatpush2.bf16.xpose.msra.mxu0 0
    %1614 = vmatprep.subr.bf16.mxu0 0
    %1615 = vmatpush2.bf16.xpose.msra.mxu0 0
    %1616 = vmatprep.subr.bf16.mxu0 0
    %1617 = vmatpush2.bf16.xpose.msra.mxu0 0
    %1618 = vmatprep.mubr.bf16.mxu0 0
    %1619 = vmatmul.mubr.bf16.gmra.mxu0 %v1581
    %v1620 = vpop.f32.mrf.mxu0
    %v1621 = vadd.f32 %v99, %v1620
    %v1622 = vpop.f32.mrf.mxu0
    %v1623 = vpop.f32.mrf.mxu0
    %v1624 = vpop.f32.mrf.mxu0
    %1625 = vdwg.mxu0
    %1627 = vrot.lane.b32.xlu0 %v1522, 96
    %v1628 = vpop.permute.xlu0 %1627
    %v1630 = vsel %vm204, %v1522, 0
    %v1633 = vsel %vm204, %v1628, 0
    %1635 = vmatprep.subr.bf16.mxu0 0
    %1636 = vmatpush1.bf16.xpose.msra.mxu0 0
    %1637 = vmatprep.subr.bf16.mxu0 0
    %1638 = vmatpush1.bf16.xpose.msra.mxu0 0
    %1639 = vmatprep.subr.bf16.mxu0 0
    %1640 = vmatpush1.bf16.xpose.msra.mxu0 0
    %1641 = vmatprep.subr.bf16.mxu0 0
    %1642 = vmatpush1.bf16.xpose.msra.mxu0 0
    %1643 = vmatprep.subr.bf16.mxu0 0
    %1644 = vmatpush1.bf16.xpose.msra.mxu0 0
    %1645 = vmatprep.subr.bf16.mxu0 0
    %1646 = vmatpush1.bf16.xpose.msra.mxu0 0
    %1647 = vmatprep.subr.bf16.mxu0 0
    %1648 = vmatpush1.bf16.xpose.msra.mxu0 0
    %1649 = vmatprep.subr.bf16.mxu0 0
    %1650 = vmatpush1.bf16.xpose.msra.mxu0 %v1633
    %1651 = vmatprep.subr.bf16.mxu0 0
    %1652 = vmatpush2.bf16.xpose.msra.mxu0 0
    %1653 = vmatprep.subr.bf16.mxu0 0
    %1654 = vmatpush2.bf16.xpose.msra.mxu0 0
    %1655 = vmatprep.subr.bf16.mxu0 0
    %1656 = vmatpush2.bf16.xpose.msra.mxu0 0
    %1657 = vmatprep.subr.bf16.mxu0 0
    %1658 = vmatpush2.bf16.xpose.msra.mxu0 0
    %1659 = vmatprep.subr.bf16.mxu0 0
    %1660 = vmatpush2.bf16.xpose.msra.mxu0 0
    %1661 = vmatprep.subr.bf16.mxu0 0
    %1662 = vmatpush2.bf16.xpose.msra.mxu0 0
    %1663 = vmatprep.subr.bf16.mxu0 0
    %1664 = vmatpush2.bf16.xpose.msra.mxu0 0
    %1665 = vmatprep.subr.bf16.mxu0 0
    %1666 = vmatpush2.bf16.xpose.msra.mxu0 0
    %1667 = vmatprep.mubr.bf16.mxu0 0
    %1668 = vmatmul.mubr.bf16.gmra.mxu0 %v1630
    %v1669 = vpop.f32.mrf.mxu0
    %v1670 = vadd.f32 %v100, %v1669
    %v1671 = vpop.f32.mrf.mxu0
    %v1672 = vpop.f32.mrf.mxu0
    %v1673 = vpop.f32.mrf.mxu0
    %1674 = vdwg.mxu0
    %1676 = vrot.lane.b32.xlu0 %v1523, 96
    %v1677 = vpop.permute.xlu0 %1676
    %v1679 = vsel %vm204, %v1523, 0
    %v1682 = vsel %vm204, %v1677, 0
    %1684 = vmatprep.subr.bf16.mxu0 0
    %1685 = vmatpush1.bf16.xpose.msra.mxu0 0
    %1686 = vmatprep.subr.bf16.mxu0 0
    %1687 = vmatpush1.bf16.xpose.msra.mxu0 0
    %1688 = vmatprep.subr.bf16.mxu0 0
    %1689 = vmatpush1.bf16.xpose.msra.mxu0 0
    %1690 = vmatprep.subr.bf16.mxu0 0
    %1691 = vmatpush1.bf16.xpose.msra.mxu0 0
    %1692 = vmatprep.subr.bf16.mxu0 0
    %1693 = vmatpush1.bf16.xpose.msra.mxu0 0
    %1694 = vmatprep.subr.bf16.mxu0 0
    %1695 = vmatpush1.bf16.xpose.msra.mxu0 0
    %1696 = vmatprep.subr.bf16.mxu0 0
    %1697 = vmatpush1.bf16.xpose.msra.mxu0 0
    %1698 = vmatprep.subr.bf16.mxu0 0
    %1699 = vmatpush1.bf16.xpose.msra.mxu0 %v1682
    %1700 = vmatprep.subr.bf16.mxu0 0
    %1701 = vmatpush2.bf16.xpose.msra.mxu0 0
    %1702 = vmatprep.subr.bf16.mxu0 0
    %1703 = vmatpush2.bf16.xpose.msra.mxu0 0
    %1704 = vmatprep.subr.bf16.mxu0 0
    %1705 = vmatpush2.bf16.xpose.msra.mxu0 0
    %1706 = vmatprep.subr.bf16.mxu0 0
    %1707 = vmatpush2.bf16.xpose.msra.mxu0 0
    %1708 = vmatprep.subr.bf16.mxu0 0
    %1709 = vmatpush2.bf16.xpose.msra.mxu0 0
    %1710 = vmatprep.subr.bf16.mxu0 0
    %1711 = vmatpush2.bf16.xpose.msra.mxu0 0
    %1712 = vmatprep.subr.bf16.mxu0 0
    %1713 = vmatpush2.bf16.xpose.msra.mxu0 0
    %1714 = vmatprep.subr.bf16.mxu0 0
    %1715 = vmatpush2.bf16.xpose.msra.mxu0 0
    %1716 = vmatprep.mubr.bf16.mxu0 0
    %1717 = vmatmul.mubr.bf16.gmra.mxu0 %v1679
    %v1718 = vpop.f32.mrf.mxu0
    %v1719 = vadd.f32 %v101, %v1718
    %v1720 = vpop.f32.mrf.mxu0
    %v1721 = vpop.f32.mrf.mxu0
    %v1722 = vpop.f32.mrf.mxu0
    %1723 = vdwg.mxu0
    %1725 = vrot.lane.b32.xlu0 %v1524, 96
    %v1726 = vpop.permute.xlu0 %1725
    %v1728 = vsel %vm204, %v1524, 0
    %v1731 = vsel %vm204, %v1726, 0
    %1733 = vmatprep.subr.bf16.mxu0 0
    %1734 = vmatpush1.bf16.xpose.msra.mxu0 0
    %1735 = vmatprep.subr.bf16.mxu0 0
    %1736 = vmatpush1.bf16.xpose.msra.mxu0 0
    %1737 = vmatprep.subr.bf16.mxu0 0
    %1738 = vmatpush1.bf16.xpose.msra.mxu0 0
    %1739 = vmatprep.subr.bf16.mxu0 0
    %1740 = vmatpush1.bf16.xpose.msra.mxu0 0
    %1741 = vmatprep.subr.bf16.mxu0 0
    %1742 = vmatpush1.bf16.xpose.msra.mxu0 0
    %1743 = vmatprep.subr.bf16.mxu0 0
    %1744 = vmatpush1.bf16.xpose.msra.mxu0 0
    %1745 = vmatprep.subr.bf16.mxu0 0
    %1746 = vmatpush1.bf16.xpose.msra.mxu0 0
    %1747 = vmatprep.subr.bf16.mxu0 0
    %1748 = vmatpush1.bf16.xpose.msra.mxu0 %v1731
    %1749 = vmatprep.subr.bf16.mxu0 0
    %1750 = vmatpush2.bf16.xpose.msra.mxu0 0
    %1751 = vmatprep.subr.bf16.mxu0 0
    %1752 = vmatpush2.bf16.xpose.msra.mxu0 0
    %1753 = vmatprep.subr.bf16.mxu0 0
    %1754 = vmatpush2.bf16.xpose.msra.mxu0 0
    %1755 = vmatprep.subr.bf16.mxu0 0
    %1756 = vmatpush2.bf16.xpose.msra.mxu0 0
    %1757 = vmatprep.subr.bf16.mxu0 0
    %1758 = vmatpush2.bf16.xpose.msra.mxu0 0
    %1759 = vmatprep.subr.bf16.mxu0 0
    %1760 = vmatpush2.bf16.xpose.msra.mxu0 0
    %1761 = vmatprep.subr.bf16.mxu0 0
    %1762 = vmatpush2.bf16.xpose.msra.mxu0 0
    %1763 = vmatprep.subr.bf16.mxu0 0
    %1764 = vmatpush2.bf16.xpose.msra.mxu0 0
    %1765 = vmatprep.mubr.bf16.mxu0 0
    %1766 = vmatmul.mubr.bf16.gmra.mxu0 %v1728
    %v1767 = vpop.f32.mrf.mxu0
    %v1768 = vadd.f32 %v102, %v1767
    %v1769 = vpop.f32.mrf.mxu0
    %v1770 = vpop.f32.mrf.mxu0
    %v1771 = vpop.f32.mrf.mxu0
    %1772 = vdwg.mxu0
    %1774 = vrot.lane.b32.xlu0 %v1525, 96
    %v1775 = vpop.permute.xlu0 %1774
    %v1777 = vsel %vm204, %v1525, 0
    %v1780 = vsel %vm204, %v1775, 0
    %1782 = vmatprep.subr.bf16.mxu0 0
    %1783 = vmatpush1.bf16.xpose.msra.mxu0 0
    %1784 = vmatprep.subr.bf16.mxu0 0
    %1785 = vmatpush1.bf16.xpose.msra.mxu0 0
    %1786 = vmatprep.subr.bf16.mxu0 0
    %1787 = vmatpush1.bf16.xpose.msra.mxu0 0
    %1788 = vmatprep.subr.bf16.mxu0 0
    %1789 = vmatpush1.bf16.xpose.msra.mxu0 0
    %1790 = vmatprep.subr.bf16.mxu0 0
    %1791 = vmatpush1.bf16.xpose.msra.mxu0 0
    %1792 = vmatprep.subr.bf16.mxu0 0
    %1793 = vmatpush1.bf16.xpose.msra.mxu0 0
    %1794 = vmatprep.subr.bf16.mxu0 0
    %1795 = vmatpush1.bf16.xpose.msra.mxu0 0
    %1796 = vmatprep.subr.bf16.mxu0 0
    %1797 = vmatpush1.bf16.xpose.msra.mxu0 %v1780
    %1798 = vmatprep.subr.bf16.mxu0 0
    %1799 = vmatpush2.bf16.xpose.msra.mxu0 0
    %1800 = vmatprep.subr.bf16.mxu0 0
    %1801 = vmatpush2.bf16.xpose.msra.mxu0 0
    %1802 = vmatprep.subr.bf16.mxu0 0
    %1803 = vmatpush2.bf16.xpose.msra.mxu0 0
    %1804 = vmatprep.subr.bf16.mxu0 0
    %1805 = vmatpush2.bf16.xpose.msra.mxu0 0
    %1806 = vmatprep.subr.bf16.mxu0 0
    %1807 = vmatpush2.bf16.xpose.msra.mxu0 0
    %1808 = vmatprep.subr.bf16.mxu0 0
    %1809 = vmatpush2.bf16.xpose.msra.mxu0 0
    %1810 = vmatprep.subr.bf16.mxu0 0
    %1811 = vmatpush2.bf16.xpose.msra.mxu0 0
    %1812 = vmatprep.subr.bf16.mxu0 0
    %1813 = vmatpush2.bf16.xpose.msra.mxu0 0
    %1814 = vmatprep.mubr.bf16.mxu0 0
    %1815 = vmatmul.mubr.bf16.gmra.mxu0 %v1777
    %v1816 = vpop.f32.mrf.mxu0
    %v1817 = vadd.f32 %v103, %v1816
    %v1818 = vpop.f32.mrf.mxu0
    %v1819 = vpop.f32.mrf.mxu0
    %v1820 = vpop.f32.mrf.mxu0
    %1821 = vdwg.mxu0
    %1823 = vrot.lane.b32.xlu0 %v1526, 96
    %v1824 = vpop.permute.xlu0 %1823
    %v1826 = vsel %vm204, %v1526, 0
    %v1829 = vsel %vm204, %v1824, 0
    %1831 = vmatprep.subr.bf16.mxu0 0
    %1832 = vmatpush1.bf16.xpose.msra.mxu0 0
    %1833 = vmatprep.subr.bf16.mxu0 0
    %1834 = vmatpush1.bf16.xpose.msra.mxu0 0
    %1835 = vmatprep.subr.bf16.mxu0 0
    %1836 = vmatpush1.bf16.xpose.msra.mxu0 0
    %1837 = vmatprep.subr.bf16.mxu0 0
    %1838 = vmatpush1.bf16.xpose.msra.mxu0 0
    %1839 = vmatprep.subr.bf16.mxu0 0
    %1840 = vmatpush1.bf16.xpose.msra.mxu0 0
    %1841 = vmatprep.subr.bf16.mxu0 0
    %1842 = vmatpush1.bf16.xpose.msra.mxu0 0
    %1843 = vmatprep.subr.bf16.mxu0 0
    %1844 = vmatpush1.bf16.xpose.msra.mxu0 0
    %1845 = vmatprep.subr.bf16.mxu0 0
    %1846 = vmatpush1.bf16.xpose.msra.mxu0 %v1829
    %1847 = vmatprep.subr.bf16.mxu0 0
    %1848 = vmatpush2.bf16.xpose.msra.mxu0 0
    %1849 = vmatprep.subr.bf16.mxu0 0
    %1850 = vmatpush2.bf16.xpose.msra.mxu0 0
    %1851 = vmatprep.subr.bf16.mxu0 0
    %1852 = vmatpush2.bf16.xpose.msra.mxu0 0
    %1853 = vmatprep.subr.bf16.mxu0 0
    %1854 = vmatpush2.bf16.xpose.msra.mxu0 0
    %1855 = vmatprep.subr.bf16.mxu0 0
    %1856 = vmatpush2.bf16.xpose.msra.mxu0 0
    %1857 = vmatprep.subr.bf16.mxu0 0
    %1858 = vmatpush2.bf16.xpose.msra.mxu0 0
    %1859 = vmatprep.subr.bf16.mxu0 0
    %1860 = vmatpush2.bf16.xpose.msra.mxu0 0
    %1861 = vmatprep.subr.bf16.mxu0 0
    %1862 = vmatpush2.bf16.xpose.msra.mxu0 0
    %1863 = vmatprep.mubr.bf16.mxu0 0
    %1864 = vmatmul.mubr.bf16.gmra.mxu0 %v1826
    %v1865 = vpop.f32.mrf.mxu0
    %v1866 = vadd.f32 %v104, %v1865
    %v1867 = vpop.f32.mrf.mxu0
    %v1868 = vpop.f32.mrf.mxu0
    %v1869 = vpop.f32.mrf.mxu0
    %1870 = vdwg.mxu0
    %1872 = vrot.lane.b32.xlu0 %v1527, 96
    %v1873 = vpop.permute.xlu0 %1872
    %v1875 = vsel %vm204, %v1527, 0
    %v1878 = vsel %vm204, %v1873, 0
    %1880 = vmatprep.subr.bf16.mxu0 0
    %1881 = vmatpush1.bf16.xpose.msra.mxu0 0
    %1882 = vmatprep.subr.bf16.mxu0 0
    %1883 = vmatpush1.bf16.xpose.msra.mxu0 0
    %1884 = vmatprep.subr.bf16.mxu0 0
    %1885 = vmatpush1.bf16.xpose.msra.mxu0 0
    %1886 = vmatprep.subr.bf16.mxu0 0
    %1887 = vmatpush1.bf16.xpose.msra.mxu0 0
    %1888 = vmatprep.subr.bf16.mxu0 0
    %1889 = vmatpush1.bf16.xpose.msra.mxu0 0
    %1890 = vmatprep.subr.bf16.mxu0 0
    %1891 = vmatpush1.bf16.xpose.msra.mxu0 0
    %1892 = vmatprep.subr.bf16.mxu0 0
    %1893 = vmatpush1.bf16.xpose.msra.mxu0 0
    %1894 = vmatprep.subr.bf16.mxu0 0
    %1895 = vmatpush1.bf16.xpose.msra.mxu0 %v1878
    %1896 = vmatprep.subr.bf16.mxu0 0
    %1897 = vmatpush2.bf16.xpose.msra.mxu0 0
    %1898 = vmatprep.subr.bf16.mxu0 0
    %1899 = vmatpush2.bf16.xpose.msra.mxu0 0
    %1900 = vmatprep.subr.bf16.mxu0 0
    %1901 = vmatpush2.bf16.xpose.msra.mxu0 0
    %1902 = vmatprep.subr.bf16.mxu0 0
    %1903 = vmatpush2.bf16.xpose.msra.mxu0 0
    %1904 = vmatprep.subr.bf16.mxu0 0
    %1905 = vmatpush2.bf16.xpose.msra.mxu0 0
    %1906 = vmatprep.subr.bf16.mxu0 0
    %1907 = vmatpush2.bf16.xpose.msra.mxu0 0
    %1908 = vmatprep.subr.bf16.mxu0 0
    %1909 = vmatpush2.bf16.xpose.msra.mxu0 0
    %1910 = vmatprep.subr.bf16.mxu0 0
    %1911 = vmatpush2.bf16.xpose.msra.mxu0 0
    %1912 = vmatprep.mubr.bf16.mxu0 0
    %1913 = vmatmul.mubr.bf16.gmra.mxu0 %v1875
    %v1914 = vpop.f32.mrf.mxu0
    %v1915 = vadd.f32 %v105, %v1914
    %v1916 = vpop.f32.mrf.mxu0
    %v1917 = vpop.f32.mrf.mxu0
    %v1918 = vpop.f32.mrf.mxu0
    %1919 = vdwg.mxu0
    %v1920 = vsel %vm204, %v1572, -inf
    %1921 = vmax.xlane.f32.xlu0 %v1920
    %v1922 = vpop.xlane.xlu0 %1921
    %v1923 = vsel %vm204, %v1621, -inf
    %1924 = vmax.xlane.f32.xlu0 %v1923
    %v1925 = vpop.xlane.xlu0 %1924
    %v1926 = vsel %vm204, %v1670, -inf
    %1927 = vmax.xlane.f32.xlu0 %v1926
    %v1928 = vpop.xlane.xlu0 %1927
    %v1929 = vsel %vm204, %v1719, -inf
    %1930 = vmax.xlane.f32.xlu0 %v1929
    %v1931 = vpop.xlane.xlu0 %1930
    %v1932 = vsel %vm204, %v1768, -inf
    %1933 = vmax.xlane.f32.xlu0 %v1932
    %v1934 = vpop.xlane.xlu0 %1933
    %v1935 = vsel %vm204, %v1817, -inf
    %1936 = vmax.xlane.f32.xlu0 %v1935
    %v1937 = vpop.xlane.xlu0 %1936
    %v1938 = vsel %vm204, %v1866, -inf
    %1939 = vmax.xlane.f32.xlu0 %v1938
    %v1940 = vpop.xlane.xlu0 %1939
    %v1941 = vsel %vm204, %v1915, -inf
    %1942 = vmax.xlane.f32.xlu0 %v1941
    %v1943 = vpop.xlane.xlu0 %1942
    %v1944 = vsub.f32 %v1572, %v1922
    %v1945 = vsub.f32 %v1621, %v1925
    %v1946 = vsub.f32 %v1670, %v1928
    %v1947 = vsub.f32 %v1719, %v1931
    %v1948 = vsub.f32 %v1768, %v1934
    %v1949 = vsub.f32 %v1817, %v1937
    %v1950 = vsub.f32 %v1866, %v1940
    %v1951 = vsub.f32 %v1915, %v1943
    %v1952 = vmul.f32 %v1944, 1.442695
    %v1953 = vpow.pop %v1952
    %v1954 = vmul.f32 %v1945, 1.442695
    %v1955 = vpow.pop %v1954
    %v1956 = vmul.f32 %v1946, 1.442695
    %v1957 = vpow.pop %v1956
    %v1958 = vmul.f32 %v1947, 1.442695
    %v1959 = vpow.pop %v1958
    %v1960 = vmul.f32 %v1948, 1.442695
    %v1961 = vpow.pop %v1960
    %v1962 = vmul.f32 %v1949, 1.442695
    %v1963 = vpow.pop %v1962
    %v1964 = vmul.f32 %v1950, 1.442695
    %v1965 = vpow.pop %v1964
    %v1966 = vmul.f32 %v1951, 1.442695
    %v1967 = vpow.pop %v1966
    %v1968 = vsel %vm204, %v1953, 0.0
    %1969 = vadd.xlane.f32.xlu0 %v1968
    %v1970 = vpop.xlane.xlu0 %1969
    %v1971 = vsel %vm204, %v1955, 0.0
    %1972 = vadd.xlane.f32.xlu0 %v1971
    %v1973 = vpop.xlane.xlu0 %1972
    %v1974 = vsel %vm204, %v1957, 0.0
    %1975 = vadd.xlane.f32.xlu0 %v1974
    %v1976 = vpop.xlane.xlu0 %1975
    %v1977 = vsel %vm204, %v1959, 0.0
    %1978 = vadd.xlane.f32.xlu0 %v1977
    %v1979 = vpop.xlane.xlu0 %1978
    %v1980 = vsel %vm204, %v1961, 0.0
    %1981 = vadd.xlane.f32.xlu0 %v1980
    %v1982 = vpop.xlane.xlu0 %1981
    %v1983 = vsel %vm204, %v1963, 0.0
    %1984 = vadd.xlane.f32.xlu0 %v1983
    %v1985 = vpop.xlane.xlu0 %1984
    %v1986 = vsel %vm204, %v1965, 0.0
    %1987 = vadd.xlane.f32.xlu0 %v1986
    %v1988 = vpop.xlane.xlu0 %1987
    %v1989 = vsel %vm204, %v1967, 0.0
    %1990 = vadd.xlane.f32.xlu0 %v1989
    %v1991 = vpop.xlane.xlu0 %1990
    %v1992 = vrcp.pop %v1970
    %v1993 = vrcp.pop %v1973
    %v1994 = vrcp.pop %v1976
    %v1995 = vrcp.pop %v1979
    %v1996 = vrcp.pop %v1982
    %v1997 = vrcp.pop %v1985
    %v1998 = vrcp.pop %v1988
    %v1999 = vrcp.pop %v1991
    %v2000 = vmul.f32 %v1953, %v1992
    %v2001 = vmul.f32 %v1955, %v1993
    %v2002 = vmul.f32 %v1957, %v1994
    %v2003 = vmul.f32 %v1959, %v1995
    %v2004 = vmul.f32 %v1961, %v1996
    %v2005 = vmul.f32 %v1963, %v1997
    %v2006 = vmul.f32 %v1965, %v1998
    %v2007 = vmul.f32 %v1967, %v1999
    %v2008 = vpack.c.bf16 %v2000, %v2000
    %v2009 = vpack.c.bf16 %v2001, %v2001
    %v2010 = vpack.c.bf16 %v2002, %v2002
    %v2011 = vpack.c.bf16 %v2003, %v2003
    %v2012 = vpack.c.bf16 %v2004, %v2004
    %v2013 = vpack.c.bf16 %v2005, %v2005
    %v2014 = vpack.c.bf16 %v2006, %v2006
    %v2015 = vpack.c.bf16 %v2007, %v2007
    %2016 = vrot.lane.b32.xlu0 %v1520, 64
    %v2017 = vpop.permute.xlu0 %2016
    %v2019 = vsel %vm204, %v2008, 0
    %v2022 = vsel %vm695, %v2017, 0
    %2024 = vmatprep.subr.bf16.mxu0 0
    %2025 = vmatpush1.bf16.msra.mxu0 0
    %2026 = vmatprep.subr.bf16.mxu0 0
    %2027 = vmatpush1.bf16.msra.mxu0 0
    %2028 = vmatprep.subr.bf16.mxu0 0
    %2029 = vmatpush1.bf16.msra.mxu0 0
    %2030 = vmatprep.subr.bf16.mxu0 0
    %2031 = vmatpush1.bf16.msra.mxu0 0
    %2032 = vmatprep.subr.bf16.mxu0 0
    %2033 = vmatpush1.bf16.msra.mxu0 0
    %2034 = vmatprep.subr.bf16.mxu0 0
    %2035 = vmatpush1.bf16.msra.mxu0 0
    %2036 = vmatprep.subr.bf16.mxu0 0
    %2037 = vmatpush1.bf16.msra.mxu0 0
    %2038 = vmatprep.subr.bf16.mxu0 0
    %2039 = vmatpush1.bf16.msra.mxu0 %v2022
    %2040 = vmatprep.subr.bf16.mxu0 0
    %2041 = vmatpush2.bf16.msra.mxu0 0
    %2042 = vmatprep.subr.bf16.mxu0 0
    %2043 = vmatpush2.bf16.msra.mxu0 0
    %2044 = vmatprep.subr.bf16.mxu0 0
    %2045 = vmatpush2.bf16.msra.mxu0 0
    %2046 = vmatprep.subr.bf16.mxu0 0
    %2047 = vmatpush2.bf16.msra.mxu0 0
    %2048 = vmatprep.subr.bf16.mxu0 0
    %2049 = vmatpush2.bf16.msra.mxu0 0
    %2050 = vmatprep.subr.bf16.mxu0 0
    %2051 = vmatpush2.bf16.msra.mxu0 0
    %2052 = vmatprep.subr.bf16.mxu0 0
    %2053 = vmatpush2.bf16.msra.mxu0 0
    %2054 = vmatprep.subr.bf16.mxu0 0
    %2055 = vmatpush2.bf16.msra.mxu0 0
    %2056 = vmatprep.mubr.bf16.mxu0 0
    %2057 = vmatmul.mubr.bf16.gmra.mxu0 %v2019
    %v2058 = vpop.f32.mrf.mxu0
    %v2059 = vadd.f32 0.0, %v2058
    %v2060 = vpop.f32.mrf.mxu0
    %v2061 = vpop.f32.mrf.mxu0
    %v2062 = vpop.f32.mrf.mxu0
    %2063 = vdwg.mxu0
    %2064 = vrot.lane.b32.xlu0 %v1521, 64
    %v2065 = vpop.permute.xlu0 %2064
    %v2067 = vsel %vm204, %v2009, 0
    %v2070 = vsel %vm695, %v2065, 0
    %2072 = vmatprep.subr.bf16.mxu0 0
    %2073 = vmatpush1.bf16.msra.mxu0 0
    %2074 = vmatprep.subr.bf16.mxu0 0
    %2075 = vmatpush1.bf16.msra.mxu0 0
    %2076 = vmatprep.subr.bf16.mxu0 0
    %2077 = vmatpush1.bf16.msra.mxu0 0
    %2078 = vmatprep.subr.bf16.mxu0 0
    %2079 = vmatpush1.bf16.msra.mxu0 0
    %2080 = vmatprep.subr.bf16.mxu0 0
    %2081 = vmatpush1.bf16.msra.mxu0 0
    %2082 = vmatprep.subr.bf16.mxu0 0
    %2083 = vmatpush1.bf16.msra.mxu0 0
    %2084 = vmatprep.subr.bf16.mxu0 0
    %2085 = vmatpush1.bf16.msra.mxu0 0
    %2086 = vmatprep.subr.bf16.mxu0 0
    %2087 = vmatpush1.bf16.msra.mxu0 %v2070
    %2088 = vmatprep.subr.bf16.mxu0 0
    %2089 = vmatpush2.bf16.msra.mxu0 0
    %2090 = vmatprep.subr.bf16.mxu0 0
    %2091 = vmatpush2.bf16.msra.mxu0 0
    %2092 = vmatprep.subr.bf16.mxu0 0
    %2093 = vmatpush2.bf16.msra.mxu0 0
    %2094 = vmatprep.subr.bf16.mxu0 0
    %2095 = vmatpush2.bf16.msra.mxu0 0
    %2096 = vmatprep.subr.bf16.mxu0 0
    %2097 = vmatpush2.bf16.msra.mxu0 0
    %2098 = vmatprep.subr.bf16.mxu0 0
    %2099 = vmatpush2.bf16.msra.mxu0 0
    %2100 = vmatprep.subr.bf16.mxu0 0
    %2101 = vmatpush2.bf16.msra.mxu0 0
    %2102 = vmatprep.subr.bf16.mxu0 0
    %2103 = vmatpush2.bf16.msra.mxu0 0
    %2104 = vmatprep.mubr.bf16.mxu0 0
    %2105 = vmatmul.mubr.bf16.gmra.mxu0 %v2067
    %v2106 = vpop.f32.mrf.mxu0
    %v2107 = vadd.f32 0.0, %v2106
    %v2108 = vpop.f32.mrf.mxu0
    %v2109 = vpop.f32.mrf.mxu0
    %v2110 = vpop.f32.mrf.mxu0
    %2111 = vdwg.mxu0
    %2112 = vrot.lane.b32.xlu0 %v1522, 64
    %v2113 = vpop.permute.xlu0 %2112
    %v2115 = vsel %vm204, %v2010, 0
    %v2118 = vsel %vm695, %v2113, 0
    %2120 = vmatprep.subr.bf16.mxu0 0
    %2121 = vmatpush1.bf16.msra.mxu0 0
    %2122 = vmatprep.subr.bf16.mxu0 0
    %2123 = vmatpush1.bf16.msra.mxu0 0
    %2124 = vmatprep.subr.bf16.mxu0 0
    %2125 = vmatpush1.bf16.msra.mxu0 0
    %2126 = vmatprep.subr.bf16.mxu0 0
    %2127 = vmatpush1.bf16.msra.mxu0 0
    %2128 = vmatprep.subr.bf16.mxu0 0
    %2129 = vmatpush1.bf16.msra.mxu0 0
    %2130 = vmatprep.subr.bf16.mxu0 0
    %2131 = vmatpush1.bf16.msra.mxu0 0
    %2132 = vmatprep.subr.bf16.mxu0 0
    %2133 = vmatpush1.bf16.msra.mxu0 0
    %2134 = vmatprep.subr.bf16.mxu0 0
    %2135 = vmatpush1.bf16.msra.mxu0 %v2118
    %2136 = vmatprep.subr.bf16.mxu0 0
    %2137 = vmatpush2.bf16.msra.mxu0 0
    %2138 = vmatprep.subr.bf16.mxu0 0
    %2139 = vmatpush2.bf16.msra.mxu0 0
    %2140 = vmatprep.subr.bf16.mxu0 0
    %2141 = vmatpush2.bf16.msra.mxu0 0
    %2142 = vmatprep.subr.bf16.mxu0 0
    %2143 = vmatpush2.bf16.msra.mxu0 0
    %2144 = vmatprep.subr.bf16.mxu0 0
    %2145 = vmatpush2.bf16.msra.mxu0 0
    %2146 = vmatprep.subr.bf16.mxu0 0
    %2147 = vmatpush2.bf16.msra.mxu0 0
    %2148 = vmatprep.subr.bf16.mxu0 0
    %2149 = vmatpush2.bf16.msra.mxu0 0
    %2150 = vmatprep.subr.bf16.mxu0 0
    %2151 = vmatpush2.bf16.msra.mxu0 0
    %2152 = vmatprep.mubr.bf16.mxu0 0
    %2153 = vmatmul.mubr.bf16.gmra.mxu0 %v2115
    %v2154 = vpop.f32.mrf.mxu0
    %v2155 = vadd.f32 0.0, %v2154
    %v2156 = vpop.f32.mrf.mxu0
    %v2157 = vpop.f32.mrf.mxu0
    %v2158 = vpop.f32.mrf.mxu0
    %2159 = vdwg.mxu0
    %2160 = vrot.lane.b32.xlu0 %v1523, 64
    %v2161 = vpop.permute.xlu0 %2160
    %v2163 = vsel %vm204, %v2011, 0
    %v2166 = vsel %vm695, %v2161, 0
    %2168 = vmatprep.subr.bf16.mxu0 0
    %2169 = vmatpush1.bf16.msra.mxu0 0
    %2170 = vmatprep.subr.bf16.mxu0 0
    %2171 = vmatpush1.bf16.msra.mxu0 0
    %2172 = vmatprep.subr.bf16.mxu0 0
    %2173 = vmatpush1.bf16.msra.mxu0 0
    %2174 = vmatprep.subr.bf16.mxu0 0
    %2175 = vmatpush1.bf16.msra.mxu0 0
    %2176 = vmatprep.subr.bf16.mxu0 0
    %2177 = vmatpush1.bf16.msra.mxu0 0
    %2178 = vmatprep.subr.bf16.mxu0 0
    %2179 = vmatpush1.bf16.msra.mxu0 0
    %2180 = vmatprep.subr.bf16.mxu0 0
    %2181 = vmatpush1.bf16.msra.mxu0 0
    %2182 = vmatprep.subr.bf16.mxu0 0
    %2183 = vmatpush1.bf16.msra.mxu0 %v2166
    %2184 = vmatprep.subr.bf16.mxu0 0
    %2185 = vmatpush2.bf16.msra.mxu0 0
    %2186 = vmatprep.subr.bf16.mxu0 0
    %2187 = vmatpush2.bf16.msra.mxu0 0
    %2188 = vmatprep.subr.bf16.mxu0 0
    %2189 = vmatpush2.bf16.msra.mxu0 0
    %2190 = vmatprep.subr.bf16.mxu0 0
    %2191 = vmatpush2.bf16.msra.mxu0 0
    %2192 = vmatprep.subr.bf16.mxu0 0
    %2193 = vmatpush2.bf16.msra.mxu0 0
    %2194 = vmatprep.subr.bf16.mxu0 0
    %2195 = vmatpush2.bf16.msra.mxu0 0
    %2196 = vmatprep.subr.bf16.mxu0 0
    %2197 = vmatpush2.bf16.msra.mxu0 0
    %2198 = vmatprep.subr.bf16.mxu0 0
    %2199 = vmatpush2.bf16.msra.mxu0 0
    %2200 = vmatprep.mubr.bf16.mxu0 0
    %2201 = vmatmul.mubr.bf16.gmra.mxu0 %v2163
    %v2202 = vpop.f32.mrf.mxu0
    %v2203 = vadd.f32 0.0, %v2202
    %v2204 = vpop.f32.mrf.mxu0
    %v2205 = vpop.f32.mrf.mxu0
    %v2206 = vpop.f32.mrf.mxu0
    %2207 = vdwg.mxu0
    %2208 = vrot.lane.b32.xlu0 %v1524, 64
    %v2209 = vpop.permute.xlu0 %2208
    %v2211 = vsel %vm204, %v2012, 0
    %v2214 = vsel %vm695, %v2209, 0
    %2216 = vmatprep.subr.bf16.mxu0 0
    %2217 = vmatpush1.bf16.msra.mxu0 0
    %2218 = vmatprep.subr.bf16.mxu0 0
    %2219 = vmatpush1.bf16.msra.mxu0 0
    %2220 = vmatprep.subr.bf16.mxu0 0
    %2221 = vmatpush1.bf16.msra.mxu0 0
    %2222 = vmatprep.subr.bf16.mxu0 0
    %2223 = vmatpush1.bf16.msra.mxu0 0
    %2224 = vmatprep.subr.bf16.mxu0 0
    %2225 = vmatpush1.bf16.msra.mxu0 0
    %2226 = vmatprep.subr.bf16.mxu0 0
    %2227 = vmatpush1.bf16.msra.mxu0 0
    %2228 = vmatprep.subr.bf16.mxu0 0
    %2229 = vmatpush1.bf16.msra.mxu0 0
    %2230 = vmatprep.subr.bf16.mxu0 0
    %2231 = vmatpush1.bf16.msra.mxu0 %v2214
    %2232 = vmatprep.subr.bf16.mxu0 0
    %2233 = vmatpush2.bf16.msra.mxu0 0
    %2234 = vmatprep.subr.bf16.mxu0 0
    %2235 = vmatpush2.bf16.msra.mxu0 0
    %2236 = vmatprep.subr.bf16.mxu0 0
    %2237 = vmatpush2.bf16.msra.mxu0 0
    %2238 = vmatprep.subr.bf16.mxu0 0
    %2239 = vmatpush2.bf16.msra.mxu0 0
    %2240 = vmatprep.subr.bf16.mxu0 0
    %2241 = vmatpush2.bf16.msra.mxu0 0
    %2242 = vmatprep.subr.bf16.mxu0 0
    %2243 = vmatpush2.bf16.msra.mxu0 0
    %2244 = vmatprep.subr.bf16.mxu0 0
    %2245 = vmatpush2.bf16.msra.mxu0 0
    %2246 = vmatprep.subr.bf16.mxu0 0
    %2247 = vmatpush2.bf16.msra.mxu0 0
    %2248 = vmatprep.mubr.bf16.mxu0 0
    %2249 = vmatmul.mubr.bf16.gmra.mxu0 %v2211
    %v2250 = vpop.f32.mrf.mxu0
    %v2251 = vadd.f32 0.0, %v2250
    %v2252 = vpop.f32.mrf.mxu0
    %v2253 = vpop.f32.mrf.mxu0
    %v2254 = vpop.f32.mrf.mxu0
    %2255 = vdwg.mxu0
    %2256 = vrot.lane.b32.xlu0 %v1525, 64
    %v2257 = vpop.permute.xlu0 %2256
    %v2259 = vsel %vm204, %v2013, 0
    %v2262 = vsel %vm695, %v2257, 0
    %2264 = vmatprep.subr.bf16.mxu0 0
    %2265 = vmatpush1.bf16.msra.mxu0 0
    %2266 = vmatprep.subr.bf16.mxu0 0
    %2267 = vmatpush1.bf16.msra.mxu0 0
    %2268 = vmatprep.subr.bf16.mxu0 0
    %2269 = vmatpush1.bf16.msra.mxu0 0
    %2270 = vmatprep.subr.bf16.mxu0 0
    %2271 = vmatpush1.bf16.msra.mxu0 0
    %2272 = vmatprep.subr.bf16.mxu0 0
    %2273 = vmatpush1.bf16.msra.mxu0 0
    %2274 = vmatprep.subr.bf16.mxu0 0
    %2275 = vmatpush1.bf16.msra.mxu0 0
    %2276 = vmatprep.subr.bf16.mxu0 0
    %2277 = vmatpush1.bf16.msra.mxu0 0
    %2278 = vmatprep.subr.bf16.mxu0 0
    %2279 = vmatpush1.bf16.msra.mxu0 %v2262
    %2280 = vmatprep.subr.bf16.mxu0 0
    %2281 = vmatpush2.bf16.msra.mxu0 0
    %2282 = vmatprep.subr.bf16.mxu0 0
    %2283 = vmatpush2.bf16.msra.mxu0 0
    %2284 = vmatprep.subr.bf16.mxu0 0
    %2285 = vmatpush2.bf16.msra.mxu0 0
    %2286 = vmatprep.subr.bf16.mxu0 0
    %2287 = vmatpush2.bf16.msra.mxu0 0
    %2288 = vmatprep.subr.bf16.mxu0 0
    %2289 = vmatpush2.bf16.msra.mxu0 0
    %2290 = vmatprep.subr.bf16.mxu0 0
    %2291 = vmatpush2.bf16.msra.mxu0 0
    %2292 = vmatprep.subr.bf16.mxu0 0
    %2293 = vmatpush2.bf16.msra.mxu0 0
    %2294 = vmatprep.subr.bf16.mxu0 0
    %2295 = vmatpush2.bf16.msra.mxu0 0
    %2296 = vmatprep.mubr.bf16.mxu0 0
    %2297 = vmatmul.mubr.bf16.gmra.mxu0 %v2259
    %v2298 = vpop.f32.mrf.mxu0
    %v2299 = vadd.f32 0.0, %v2298
    %v2300 = vpop.f32.mrf.mxu0
    %v2301 = vpop.f32.mrf.mxu0
    %v2302 = vpop.f32.mrf.mxu0
    %2303 = vdwg.mxu0
    %2304 = vrot.lane.b32.xlu0 %v1526, 64
    %v2305 = vpop.permute.xlu0 %2304
    %v2307 = vsel %vm204, %v2014, 0
    %v2310 = vsel %vm695, %v2305, 0
    %2312 = vmatprep.subr.bf16.mxu0 0
    %2313 = vmatpush1.bf16.msra.mxu0 0
    %2314 = vmatprep.subr.bf16.mxu0 0
    %2315 = vmatpush1.bf16.msra.mxu0 0
    %2316 = vmatprep.subr.bf16.mxu0 0
    %2317 = vmatpush1.bf16.msra.mxu0 0
    %2318 = vmatprep.subr.bf16.mxu0 0
    %2319 = vmatpush1.bf16.msra.mxu0 0
    %2320 = vmatprep.subr.bf16.mxu0 0
    %2321 = vmatpush1.bf16.msra.mxu0 0
    %2322 = vmatprep.subr.bf16.mxu0 0
    %2323 = vmatpush1.bf16.msra.mxu0 0
    %2324 = vmatprep.subr.bf16.mxu0 0
    %2325 = vmatpush1.bf16.msra.mxu0 0
    %2326 = vmatprep.subr.bf16.mxu0 0
    %2327 = vmatpush1.bf16.msra.mxu0 %v2310
    %2328 = vmatprep.subr.bf16.mxu0 0
    %2329 = vmatpush2.bf16.msra.mxu0 0
    %2330 = vmatprep.subr.bf16.mxu0 0
    %2331 = vmatpush2.bf16.msra.mxu0 0
    %2332 = vmatprep.subr.bf16.mxu0 0
    %2333 = vmatpush2.bf16.msra.mxu0 0
    %2334 = vmatprep.subr.bf16.mxu0 0
    %2335 = vmatpush2.bf16.msra.mxu0 0
    %2336 = vmatprep.subr.bf16.mxu0 0
    %2337 = vmatpush2.bf16.msra.mxu0 0
    %2338 = vmatprep.subr.bf16.mxu0 0
    %2339 = vmatpush2.bf16.msra.mxu0 0
    %2340 = vmatprep.subr.bf16.mxu0 0
    %2341 = vmatpush2.bf16.msra.mxu0 0
    %2342 = vmatprep.subr.bf16.mxu0 0
    %2343 = vmatpush2.bf16.msra.mxu0 0
    %2344 = vmatprep.mubr.bf16.mxu0 0
    %2345 = vmatmul.mubr.bf16.gmra.mxu0 %v2307
    %v2346 = vpop.f32.mrf.mxu0
    %v2347 = vadd.f32 0.0, %v2346
    %v2348 = vpop.f32.mrf.mxu0
    %v2349 = vpop.f32.mrf.mxu0
    %v2350 = vpop.f32.mrf.mxu0
    %2351 = vdwg.mxu0
    %2352 = vrot.lane.b32.xlu0 %v1527, 64
    %v2353 = vpop.permute.xlu0 %2352
    %v2355 = vsel %vm204, %v2015, 0
    %v2358 = vsel %vm695, %v2353, 0
    %2360 = vmatprep.subr.bf16.mxu0 0
    %2361 = vmatpush1.bf16.msra.mxu0 0
    %2362 = vmatprep.subr.bf16.mxu0 0
    %2363 = vmatpush1.bf16.msra.mxu0 0
    %2364 = vmatprep.subr.bf16.mxu0 0
    %2365 = vmatpush1.bf16.msra.mxu0 0
    %2366 = vmatprep.subr.bf16.mxu0 0
    %2367 = vmatpush1.bf16.msra.mxu0 0
    %2368 = vmatprep.subr.bf16.mxu0 0
    %2369 = vmatpush1.bf16.msra.mxu0 0
    %2370 = vmatprep.subr.bf16.mxu0 0
    %2371 = vmatpush1.bf16.msra.mxu0 0
    %2372 = vmatprep.subr.bf16.mxu0 0
    %2373 = vmatpush1.bf16.msra.mxu0 0
    %2374 = vmatprep.subr.bf16.mxu0 0
    %2375 = vmatpush1.bf16.msra.mxu0 %v2358
    %2376 = vmatprep.subr.bf16.mxu0 0
    %2377 = vmatpush2.bf16.msra.mxu0 0
    %2378 = vmatprep.subr.bf16.mxu0 0
    %2379 = vmatpush2.bf16.msra.mxu0 0
    %2380 = vmatprep.subr.bf16.mxu0 0
    %2381 = vmatpush2.bf16.msra.mxu0 0
    %2382 = vmatprep.subr.bf16.mxu0 0
    %2383 = vmatpush2.bf16.msra.mxu0 0
    %2384 = vmatprep.subr.bf16.mxu0 0
    %2385 = vmatpush2.bf16.msra.mxu0 0
    %2386 = vmatprep.subr.bf16.mxu0 0
    %2387 = vmatpush2.bf16.msra.mxu0 0
    %2388 = vmatprep.subr.bf16.mxu0 0
    %2389 = vmatpush2.bf16.msra.mxu0 0
    %2390 = vmatprep.subr.bf16.mxu0 0
    %2391 = vmatpush2.bf16.msra.mxu0 0
    %2392 = vmatprep.mubr.bf16.mxu0 0
    %2393 = vmatmul.mubr.bf16.gmra.mxu0 %v2355
    %v2394 = vpop.f32.mrf.mxu0
    %v2395 = vadd.f32 0.0, %v2394
    %v2396 = vpop.f32.mrf.mxu0
    %v2397 = vpop.f32.mrf.mxu0
    %v2398 = vpop.f32.mrf.mxu0
    %2399 = vdwg.mxu0
    %2401 = vrot.lane.b32.xlu0 %v2107, 8
    %v2402 = vpop.permute.xlu0 %2401
    %2405 = vrot.lane.b32.xlu0 %v2155, 16
    %v2406 = vpop.permute.xlu0 %2405
    %2409 = vrot.lane.b32.xlu0 %v2203, 24
    %v2410 = vpop.permute.xlu0 %2409
    %v2412 = vsel %vm204, %v2059, %v2402
    %v2413 = vsel %vm1088, %v2412, %v2406
    %v2414 = vsel %vm1090, %v2413, %v2410
    %2416 = vrot.lane.b32.xlu0 %v2299, 8
    %v2417 = vpop.permute.xlu0 %2416
    %2420 = vrot.lane.b32.xlu0 %v2347, 16
    %v2421 = vpop.permute.xlu0 %2420
    %2424 = vrot.lane.b32.xlu0 %v2395, 24
    %v2425 = vpop.permute.xlu0 %2424
    %v2427 = vsel %vm204, %v2251, %v2417
    %v2428 = vsel %vm1088, %v2427, %v2421
    %v2429 = vsel %vm1090, %v2428, %v2425
    %v2430 = vpack.c.bf16 %v2429, %v2414
    %s2431 = scalar_lea.vmem [#allocation5], 16
    %v2432 = vld [vmem:[%s2431] sm:$0xf]
    %v2433 = vld [vmem:[%s2431 + $0x4] sm:$0xf]
    %v2434 = vld [vmem:[%s2431 + $0x8] sm:$0xf]
    %v2435 = vld [vmem:[%s2431 + $0xc] sm:$0xf]
    %v2436 = vld [vmem:[%s5 + $0x1] sm:$0x1]
    %v2437 = vlaneseq
    %v2438 = vshrl.u32 %v2437, 7
    %v2439 = vsub.s32 0, %v2438
    %v2440 = vrot.slane %v2436, %v2439
    %v2445 = vunpack.c.l.b16 %v2432
    %v2446 = vunpack.c.l.b16 %v2433
    %v2447 = vunpack.c.l.b16 %v2434
    %v2448 = vunpack.c.l.b16 %v2435
    %v2449 = vpack.c.b16 %v2446, %v2445
    %v2450 = vpack.c.b16 %v2448, %v2447
    %v2454 = vsel %vm128, %v2430, 0
    %2456 = vmatprep.subr.bf16.mxu0 0
    %2457 = vmatpush1.bf16.msra.mxu0 0
    %2458 = vmatprep.subr.bf16.mxu0 0
    %2459 = vmatpush1.bf16.msra.mxu0 0
    %2460 = vmatprep.subr.bf16.mxu0 0
    %2461 = vmatpush1.bf16.msra.mxu0 0
    %2462 = vmatprep.subr.bf16.mxu0 0
    %2463 = vmatpush1.bf16.msra.mxu0 0
    %2464 = vmatprep.subr.bf16.mxu0 0
    %2465 = vmatpush1.bf16.msra.mxu0 0
    %2466 = vmatprep.subr.bf16.mxu0 0
    %2467 = vmatpush1.bf16.msra.mxu0 0
    %2468 = vmatprep.subr.bf16.mxu0 0
    %2469 = vmatpush1.bf16.msra.mxu0 %v2450
    %2470 = vmatprep.subr.bf16.mxu0 0
    %2471 = vmatpush1.bf16.msra.mxu0 %v2449
    %2472 = vmatprep.subr.bf16.mxu0 0
    %2473 = vmatpush2.bf16.msra.mxu0 0
    %2474 = vmatprep.subr.bf16.mxu0 0
    %2475 = vmatpush2.bf16.msra.mxu0 0
    %2476 = vmatprep.subr.bf16.mxu0 0
    %2477 = vmatpush2.bf16.msra.mxu0 0
    %2478 = vmatprep.subr.bf16.mxu0 0
    %2479 = vmatpush2.bf16.msra.mxu0 0
    %2480 = vmatprep.subr.bf16.mxu0 0
    %2481 = vmatpush2.bf16.msra.mxu0 0
    %2482 = vmatprep.subr.bf16.mxu0 0
    %2483 = vmatpush2.bf16.msra.mxu0 0
    %2484 = vmatprep.subr.bf16.mxu0 0
    %2485 = vmatpush2.bf16.msra.mxu0 0
    %2486 = vmatprep.subr.bf16.mxu0 0
    %2487 = vmatpush2.bf16.msra.mxu0 0
    %2488 = vmatprep.mubr.bf16.mxu0 0
    %2489 = vmatmul.mubr.bf16.gmra.mxu0 %v2454
    %v2490 = vpop.f32.mrf.mxu0
    %v2491 = vadd.f32 %v2440, %v2490
    %v2492 = vpop.f32.mrf.mxu0
    %v2493 = vpop.f32.mrf.mxu0
    %v2494 = vadd.f32 %v2440, %v2493
    %v2495 = vpop.f32.mrf.mxu0
    %2496 = vdwg.mxu0
    %v2497 = vadd.f32 %v2491, %v1387
    %v2498 = vadd.f32 %v2494, %v1388
    %v2499 = vld [vmem:[%s12 + $0x1] sm:$0x1]
    %v2500 = vld [vmem:[%s13 + $0x1] sm:$0x1]
    %v2501 = vsel %vm128, %v2497, 0.0
    %2502 = vadd.xlane.f32.xlu0 %v2501
    %v2503 = vpop.xlane.xlu0 %2502
    %v2504 = vsel %vm128, %v2498, 0.0
    %2505 = vadd.xlane.f32.xlu0 %v2504
    %v2506 = vpop.xlane.xlu0 %2505
    %v2507 = vmul.f32 %v2503, %v1183
    %v2508 = vmul.f32 %v2506, %v1183
    %v2509 = vmul.f32 %v2497, %v2497
    %v2510 = vmul.f32 %v2498, %v2498
    %v2511 = vsel %vm128, %v2509, 0.0
    %2512 = vadd.xlane.f32.xlu0 %v2511
    %v2513 = vpop.xlane.xlu0 %2512
    %v2514 = vsel %vm128, %v2510, 0.0
    %2515 = vadd.xlane.f32.xlu0 %v2514
    %v2516 = vpop.xlane.xlu0 %2515
    %v2517 = vmul.f32 %v2513, %v1183
    %v2518 = vmul.f32 %v2516, %v1183
    %v2519 = vmul.f32 %v2507, %v2507
    %v2520 = vmul.f32 %v2508, %v2508
    %v2521 = vsub.f32 %v2517, %v2519
    %v2522 = vsub.f32 %v2518, %v2520
    %v2523 = vsub.f32 %v2497, %v2507
    %v2524 = vsub.f32 %v2498, %v2508
    %v2525 = vadd.f32 %v2521, 1e-06
    %v2526 = vadd.f32 %v2522, 1e-06
    %v2527 = vrsqrt.pop %v2525
    %v2528 = vrsqrt.pop %v2526
    %v2529 = vmul.f32 %v2523, %v2527
    %v2530 = vmul.f32 %v2524, %v2528
    %v2531 = vlaneseq
    %v2532 = vshrl.u32 %v2531, 7
    %v2533 = vsub.s32 0, %v2532
    %v2534 = vrot.slane %v2499, %v2533
    %v2535 = vmul.f32 %v2529, %v2534
    %v2536 = vmul.f32 %v2530, %v2534
    %v2537 = vlaneseq
    %v2538 = vshrl.u32 %v2537, 7
    %v2539 = vsub.s32 0, %v2538
    %v2540 = vrot.slane %v2500, %v2539
    %v2541 = vadd.f32 %v2535, %v2540
    %v2542 = vadd.f32 %v2536, %v2540
    %v2543 = vpack.c.bf16 %v2542, %v2541
    %s2544 = scalar_lea.vmem [#allocation7], 16
    %v2545 = vld [vmem:[%s2544] sm:$0xf]
    %v2546 = vld [vmem:[%s2544 + $0x4] sm:$0xf]
    %v2547 = vld [vmem:[%s2544 + $0x8] sm:$0xf]
    %v2548 = vld [vmem:[%s2544 + $0xc] sm:$0xf]
    %v2549 = vld [vmem:[%s9 + $0x1] sm:$0x1]
    %v2550 = vlaneseq
    %v2551 = vshrl.u32 %v2550, 7
    %v2552 = vsub.s32 0, %v2551
    %v2553 = vrot.slane %v2549, %v2552
    %v2558 = vunpack.c.l.b16 %v2545
    %v2559 = vunpack.c.l.b16 %v2546
    %v2560 = vunpack.c.l.b16 %v2547
    %v2561 = vunpack.c.l.b16 %v2548
    %v2562 = vpack.c.b16 %v2559, %v2558
    %v2563 = vpack.c.b16 %v2561, %v2560
    %v2567 = vsel %vm128, %v2543, 0
    %2569 = vmatprep.subr.bf16.mxu0 0
    %2570 = vmatpush1.bf16.msra.mxu0 0
    %2571 = vmatprep.subr.bf16.mxu0 0
    %2572 = vmatpush1.bf16.msra.mxu0 0
    %2573 = vmatprep.subr.bf16.mxu0 0
    %2574 = vmatpush1.bf16.msra.mxu0 0
    %2575 = vmatprep.subr.bf16.mxu0 0
    %2576 = vmatpush1.bf16.msra.mxu0 0
    %2577 = vmatprep.subr.bf16.mxu0 0
    %2578 = vmatpush1.bf16.msra.mxu0 0
    %2579 = vmatprep.subr.bf16.mxu0 0
    %2580 = vmatpush1.bf16.msra.mxu0 0
    %2581 = vmatprep.subr.bf16.mxu0 0
    %2582 = vmatpush1.bf16.msra.mxu0 %v2563
    %2583 = vmatprep.subr.bf16.mxu0 0
    %2584 = vmatpush1.bf16.msra.mxu0 %v2562
    %2585 = vmatprep.subr.bf16.mxu0 0
    %2586 = vmatpush2.bf16.msra.mxu0 0
    %2587 = vmatprep.subr.bf16.mxu0 0
    %2588 = vmatpush2.bf16.msra.mxu0 0
    %2589 = vmatprep.subr.bf16.mxu0 0
    %2590 = vmatpush2.bf16.msra.mxu0 0
    %2591 = vmatprep.subr.bf16.mxu0 0
    %2592 = vmatpush2.bf16.msra.mxu0 0
    %2593 = vmatprep.subr.bf16.mxu0 0
    %2594 = vmatpush2.bf16.msra.mxu0 0
    %2595 = vmatprep.subr.bf16.mxu0 0
    %2596 = vmatpush2.bf16.msra.mxu0 0
    %2597 = vmatprep.subr.bf16.mxu0 0
    %2598 = vmatpush2.bf16.msra.mxu0 0
    %2599 = vmatprep.subr.bf16.mxu0 0
    %2600 = vmatpush2.bf16.msra.mxu0 0
    %2601 = vmatprep.mubr.bf16.mxu0 0
    %2602 = vmatmul.mubr.bf16.gmra.mxu0 %v2567
    %v2603 = vpop.f32.mrf.mxu0
    %v2604 = vadd.f32 %v2553, %v2603
    %v2605 = vpop.f32.mrf.mxu0
    %v2606 = vpop.f32.mrf.mxu0
    %v2607 = vadd.f32 %v2553, %v2606
    %v2608 = vpop.f32.mrf.mxu0
    %2609 = vdwg.mxu0
    %v2610 = vmul.f32 %v2604, 0.5
    %v2611 = vmul.f32 %v2607, 0.5
    %v2612 = vmul.f32 %v2604, 0.044715
    %v2613 = vmul.f32 %v2607, 0.044715
    %v2614 = vmul.f32 %v2612, %v2604
    %v2615 = vmul.f32 %v2613, %v2607
    %v2616 = vmul.f32 %v2614, %v2604
    %v2617 = vmul.f32 %v2615, %v2607
    %v2618 = vadd.f32 %v2604, %v2616
    %v2619 = vadd.f32 %v2607, %v2617
    %v2620 = vmul.f32 %v2618, 0.7978846
    %v2621 = vmul.f32 %v2619, 0.7978846
    %v2622 = vtanh.pop %v2620
    %v2623 = vtanh.pop %v2621
    %v2624 = vadd.f32 %v2622, 1.0
    %v2625 = vadd.f32 %v2623, 1.0
    %v2626 = vmul.f32 %v2610, %v2624
    %v2627 = vmul.f32 %v2611, %v2625
    %v2628 = vpack.c.bf16 %v2627, %v2626
    %s2629 = scalar_lea.vmem %s10, 32
    %v2630 = vld [vmem:[%s2629] sm:$0xf]
    %v2631 = vld [vmem:[%s2629 + $0x4] sm:$0xf]
    %v2632 = vld [vmem:[%s2629 + $0x8] sm:$0xf]
    %v2633 = vld [vmem:[%s2629 + $0xc] sm:$0xf]
    %v2634 = vld [vmem:[%s2629 + $0x10] sm:$0xf]
    %v2635 = vld [vmem:[%s2629 + $0x14] sm:$0xf]
    %v2636 = vld [vmem:[%s2629 + $0x18] sm:$0xf]
    %v2637 = vld [vmem:[%s2629 + $0x1c] sm:$0xf]
    %v2638 = vld [vmem:[%s11 + $0x1] sm:$0x1]
    %v2639 = vlaneseq
    %v2640 = vshrl.u32 %v2639, 7
    %v2641 = vsub.s32 0, %v2640
    %v2642 = vrot.slane %v2638, %v2641
    %v2651 = vunpack.c.l.b16 %v2630
    %v2652 = vunpack.c.l.b16 %v2631
    %v2653 = vunpack.c.l.b16 %v2632
    %v2654 = vunpack.c.l.b16 %v2633
    %v2655 = vunpack.c.l.b16 %v2634
    %v2656 = vunpack.c.l.b16 %v2635
    %v2657 = vunpack.c.l.b16 %v2636
    %v2658 = vunpack.c.l.b16 %v2637
    %v2659 = vpack.c.b16 %v2652, %v2651
    %v2660 = vpack.c.b16 %v2654, %v2653
    %v2661 = vpack.c.b16 %v2656, %v2655
    %v2662 = vpack.c.b16 %v2658, %v2657
    %v2668 = vsel %vm1342, %v2628, 0
    %2670 = vmatprep.subr.bf16.mxu0 0
    %2671 = vmatpush1.bf16.msra.mxu0 0
    %2672 = vmatprep.subr.bf16.mxu0 0
    %2673 = vmatpush1.bf16.msra.mxu0 0
    %2674 = vmatprep.subr.bf16.mxu0 0
    %2675 = vmatpush1.bf16.msra.mxu0 0
    %2676 = vmatprep.subr.bf16.mxu0 0
    %2677 = vmatpush1.bf16.msra.mxu0 0
    %2678 = vmatprep.subr.bf16.mxu0 0
    %2679 = vmatpush1.bf16.msra.mxu0 %v2662
    %2680 = vmatprep.subr.bf16.mxu0 0
    %2681 = vmatpush1.bf16.msra.mxu0 %v2661
    %2682 = vmatprep.subr.bf16.mxu0 0
    %2683 = vmatpush1.bf16.msra.mxu0 %v2660
    %2684 = vmatprep.subr.bf16.mxu0 0
    %2685 = vmatpush1.bf16.msra.mxu0 %v2659
    %2686 = vmatprep.subr.bf16.mxu0 0
    %2687 = vmatpush2.bf16.msra.mxu0 0
    %2688 = vmatprep.subr.bf16.mxu0 0
    %2689 = vmatpush2.bf16.msra.mxu0 0
    %2690 = vmatprep.subr.bf16.mxu0 0
    %2691 = vmatpush2.bf16.msra.mxu0 0
    %2692 = vmatprep.subr.bf16.mxu0 0
    %2693 = vmatpush2.bf16.msra.mxu0 0
    %2694 = vmatprep.subr.bf16.mxu0 0
    %2695 = vmatpush2.bf16.msra.mxu0 0
    %2696 = vmatprep.subr.bf16.mxu0 0
    %2697 = vmatpush2.bf16.msra.mxu0 0
    %2698 = vmatprep.subr.bf16.mxu0 0
    %2699 = vmatpush2.bf16.msra.mxu0 0
    %2700 = vmatprep.subr.bf16.mxu0 0
    %2701 = vmatpush2.bf16.msra.mxu0 0
    %2702 = vmatprep.mubr.bf16.mxu0 0
    %2703 = vmatmul.mubr.bf16.gmra.mxu0 %v2668
    %v2704 = vpop.f32.mrf.mxu0
    %v2705 = vadd.f32 %v2642, %v2704
    %v2706 = vpop.f32.mrf.mxu0
    %v2707 = vpop.f32.mrf.mxu0
    %v2708 = vadd.f32 %v2642, %v2707
    %v2709 = vpop.f32.mrf.mxu0
    %2710 = vdwg.mxu0
    %v2711 = vadd.f32 %v2705, %v2497
    %v2712 = vadd.f32 %v2708, %v2498
    %v2713 = vld [vmem:[%s14] sm:$0x1]
    %v2714 = vld [vmem:[%s15] sm:$0x1]
    %v2715 = vsel %vm128, %v2711, 0.0
    %2716 = vadd.xlane.f32.xlu0 %v2715
    %v2717 = vpop.xlane.xlu0 %2716
    %v2718 = vsel %vm128, %v2712, 0.0
    %2719 = vadd.xlane.f32.xlu0 %v2718
    %v2720 = vpop.xlane.xlu0 %2719
    %v2721 = vmul.f32 %v2717, %v1183
    %v2722 = vmul.f32 %v2720, %v1183
    %v2723 = vmul.f32 %v2711, %v2711
    %v2724 = vmul.f32 %v2712, %v2712
    %v2725 = vsel %vm128, %v2723, 0.0
    %2726 = vadd.xlane.f32.xlu0 %v2725
    %v2727 = vpop.xlane.xlu0 %2726
    %v2728 = vsel %vm128, %v2724, 0.0
    %2729 = vadd.xlane.f32.xlu0 %v2728
    %v2730 = vpop.xlane.xlu0 %2729
    %v2731 = vmul.f32 %v2727, %v1183
    %v2732 = vmul.f32 %v2730, %v1183
    %v2733 = vmul.f32 %v2721, %v2721
    %v2734 = vmul.f32 %v2722, %v2722
    %v2735 = vsub.f32 %v2731, %v2733
    %v2736 = vsub.f32 %v2732, %v2734
    %v2737 = vsub.f32 %v2711, %v2721
    %v2738 = vsub.f32 %v2712, %v2722
    %v2739 = vadd.f32 %v2735, 1e-06
    %v2740 = vadd.f32 %v2736, 1e-06
    %v2741 = vrsqrt.pop %v2739
    %v2742 = vrsqrt.pop %v2740
    %v2743 = vmul.f32 %v2737, %v2741
    %v2744 = vmul.f32 %v2738, %v2742
    %v2746 = vlaneseq
    %v2747 = vshrl.u32 %v2746, 7
    %v2748 = vsub.s32 0, %v2747
    %v2749 = vrot.slane %v2713, %v2748
    %v2751 = vmul.f32 %v2743, %v2749
    %v2752 = vmul.f32 %v2744, %v2749
    %v2754 = vlaneseq
    %v2755 = vshrl.u32 %v2754, 7
    %v2756 = vsub.s32 0, %v2755
    %v2757 = vrot.slane %v2714, %v2756
    %v2759 = vadd.f32 %v2751, %v2757
    %v2760 = vadd.f32 %v2752, %v2757
    %2761 = vst.msk [vmem:[#allocation8] sm:$0xff] %vm128, %v2759
    %2762 = vst.msk [vmem:[#allocation8 + $0x8] sm:$0xff] %vm128, %v2760
    // Predicated region
    $region78: #{tpu_custom_call.1} parent=1 // pred_check
      _
    $region79: #{tpu_custom_call.1} parent=1 // pred_check_branch
      %2764 = sbr.rel (0) target = $region81
    $region80: #{tpu_custom_call.1} parent=1 // pred_region
      %s2766 = ssub.s32 256, 256
      %2767 = vsyncadd [#allocation4], %s2766
      %s2768 = sshll.u32 [#allocation8], 4
      %s2769 = int_to_ptr.vmem [resolvable:$true] %s2768
      %2774 = dma.vmem_to_hbm [thread:$0]  %s2769, 256, %s16, [#allocation4], 128, 128, 8
    $region81: #{tpu_custom_call.1} parent=1 // pred_fallthru
      _
    // Predicated region
    $region82: #{tpu_custom_call.1} parent=1 // pred_check
      _
    $region83: #{tpu_custom_call.1} parent=1 // pred_check_branch
      %2776 = sbr.rel (0) target = $region85
    $region84: #{tpu_custom_call.1} parent=1 // pred_region
      %2777 = dma.done [#allocation4], 256
    $region85: #{tpu_custom_call.1} parent=1 // pred_fallthru
      _
    %2778 = vsyncpa [#allocation3], 1
    %2779 = vsyncpa [#allocation6], 1
    %2780 = vsyncpa [#allocation4], 1

</llo_original>
